<compile_context>
chip_gen: v5e
topology: v5e:2x2
jax: 0.10.0
libtpu: 0.0.40
codegen_flags: <defaults>
</compile_context>

<pallas_src>
import functools

import numpy as np
import jax
import jax.numpy as jnp
from jax import lax
from jax.experimental import pallas as pl
from jax.experimental.pallas import tpu as pltpu

BN_EPS = 1e-5


# --------------------------------------------------------------------------- #
# Kernel
# --------------------------------------------------------------------------- #
def _enhanced_block_kernel(x_ref, masks_ref, w3_ref, cp_ref, fc1w_ref,
                           fc2w_ref, w7k_ref, poolm_ref, seg_ref, out_ref,
                           *, n_batch, height, width, pad):
    f32 = jnp.float32
    cout, p = out_ref.shape                 # (Cout, N*H*W)
    hw = height * width
    hidden = fc1w_ref.shape[0]

    x_pad = x_ref[...]                      # (Cin, P + 2*pad) f32, lane-padded
    masks = masks_ref[...]                  # (23, P) f32 {0,1}: 9 conv taps, 7 dw, 7 dh

    # ---- Conv2d(Cin, Cout, 3, stride=1, padding=1): in-kernel im2col as 9 shifted
    #      lane-slices (border-masked), each a bf16 MXU matmul accumulating in f32.
    conv = jnp.zeros((cout, p), f32)
    t = 0
    for kh in range(3):
        for kw in range(3):
            s = (kh - 1) * width + (kw - 1)
            xm = (x_pad[:, pad + s:pad + s + p] * masks[t:t + 1, :]
                  ).astype(jnp.bfloat16)                              # (Cin, P)
            conv = conv + jnp.dot(w3_ref[t], xm, preferred_element_type=f32)
            t += 1
    conv = conv + cp_ref[:, 0:1]                                      # conv bias

    # ---- BatchNorm2d (training-mode batch stats, biased variance), two-pass
    #      centered variance for numerical robustness.
    inv_p = 1.0 / p
    mean = jnp.sum(conv, axis=1, keepdims=True) * inv_p               # (Cout, 1)
    cen = conv - mean
    var = jnp.sum(cen * cen, axis=1, keepdims=True) * inv_p
    bn = cen * (cp_ref[:, 1:2] * lax.rsqrt(var + BN_EPS)) + cp_ref[:, 2:3]

    # ---- Mish: x*tanh(softplus(x)) == x*u/(u+2), u = e^2+2e, e = exp(min(x,20))
    #      (1 exp + 1 approx reciprocal on the EUP; clamp matches PyTorch softplus).
    e = jnp.exp(jnp.minimum(bn, 20.0))
    u = e * (e + 2.0)
    y = bn * (u * pl.reciprocal(u + 2.0, approx=True))                # (Cout, P) f32

    # ---- CBAM channel attention: per-batch avg pool via one MXU matmul against a
    #      block-constant (P, N) 1/hw matrix; per-batch max via lane-aligned slices
    #      (hw is a multiple of 128 here; correct, just slower otherwise).
    pool_avg = jnp.dot(y, poolm_ref[...], preferred_element_type=f32)     # (Cout, N)
    pool_max = jnp.concatenate(
        [jnp.max(y[:, n * hw:(n + 1) * hw], axis=1, keepdims=True)
         for n in range(n_batch)], axis=1)                                # (Cout, N)
    pool = jnp.concatenate([pool_avg, pool_max], axis=1)                  # (Cout, 2N)
    h1 = jnp.maximum(
        jnp.dot(fc1w_ref[...], pool, preferred_element_type=f32)
        + cp_ref[0:hidden, 4:5], 0.0)                                     # (hid, 2N)
    z = jnp.dot(fc2w_ref[...], h1, preferred_element_type=f32) + cp_ref[:, 3:4]
    zsum = z[:, :n_batch] + z[:, n_batch:]
    gate = pl.reciprocal(1.0 + jnp.exp(-zsum), approx=True)               # (Cout, N)
    # Broadcast gate back to (Cout, P) with a (N, P) block-indicator matmul (MXU)
    # instead of per-batch slice+concat copies.
    xg = y * jnp.dot(gate, seg_ref[...], preferred_element_type=f32)      # (Cout, P)

    # ---- CBAM spatial attention: factorized 7x7 conv (pad=3) over [mean_c, max_c].
    #      Stage 1: 7 w-shifts (masked) -> (14, P) stack; Stage 2: 7 h-shifts
    #      contracted with the (7, 14) weight, masked on the output h coordinate.
    mean_c = jnp.sum(xg, axis=0, keepdims=True) * (1.0 / cout)            # (1, P)
    max_c = jnp.max(xg, axis=0, keepdims=True)                            # (1, P)
    planes = jnp.concatenate([mean_c, max_c], axis=0)                     # (2, P)
    zp2 = jnp.zeros((2, pad), f32)
    planes_pad = jnp.concatenate([zp2, planes, zp2], axis=1)              # (2, P+2p)

    cols = [planes_pad[:, pad + (j - 3):pad + (j - 3) + p] * masks[9 + j:10 + j, :]
            for j in range(7)]
    s14 = jnp.concatenate(cols, axis=0)                                   # (14, P)
    zp14 = jnp.zeros((14, pad), f32)
    s14_pad = jnp.concatenate([zp14, s14, zp14], axis=1)                  # (14, P+2p)

    w7k = w7k_ref[...]                                                    # (7, 14)
    sp = jnp.zeros((1, p), f32)
    for j in range(7):
        o = pad + (j - 3) * width
        contrib = jnp.dot(w7k[j:j + 1, :], s14_pad[:, o:o + p],
                          preferred_element_type=f32)                     # (1, P)
        sp = sp + contrib * masks[16 + j:17 + j, :]
    sp = sp + cp_ref[0:1, 5:6]                                            # conv bias b7
    spat = pl.reciprocal(1.0 + jnp.exp(-sp), approx=True)                 # (1, P)

    # ---- Single unmasked lane-dense store (last dim = N*H*W).
    out_ref[...] = xg * spat


# --------------------------------------------------------------------------- #
# Host-side helpers
# --------------------------------------------------------------------------- #
def _build_masks(n_batch, h, w):
    """(23, P) {0,1} masks: rows 0..8 = 3x3 conv taps (kh-major), rows 9..15 =
    7x7 w-offsets dw=-3..3, rows 16..22 = h-offsets dh=-3..3 (all per output pixel)."""
    p = n_batch * h * w
    idx = np.arange(p)
    hh = (idx // w) % h
    ww = idx % w
    rows = []
    for kh in range(3):
        for kw in range(3):
            dh, dw = kh - 1, kw - 1
            rows.append((hh + dh >= 0) & (hh + dh < h) & (ww + dw >= 0) & (ww + dw < w))
    for dw in range(-3, 4):
        rows.append((ww + dw >= 0) & (ww + dw < w))
    for dh in range(-3, 4):
        rows.append((hh + dh >= 0) & (hh + dh < h))
    return jnp.asarray(np.stack(rows).astype(np.float32))


def enhanced_block(x_nchw, params):
    n, cin, h, w = x_nchw.shape
    cout = params["w3"].shape[-1]
    hidden = params["fc1w"].shape[0]
    hw = h * w
    p = n * hw
    pad = ((3 * w + 63) // 64) * 64          # >= largest in-kernel shift (3*W)

    # Activations as (Cin, N*H*W): channels on sublanes, pixels lane-dense.
    # TODO(synk): at realistic sizes stream this in bf16 to halve HBM bytes.
    x = jnp.transpose(x_nchw.astype(jnp.float32), (1, 0, 2, 3)).reshape(cin, p)
    x_pad = jnp.pad(x, ((0, 0), (pad, pad)))

    masks = _build_masks(n, h, w)                                         # (23, P)
    # 3x3 conv weight as 9 (Cout, Cin) taps, bf16 for the MXU.
    w3 = jnp.transpose(params["w3"], (0, 1, 3, 2)).reshape(9, cout, cin)
    w3 = w3.astype(jnp.bfloat16)
    # 7x7 spatial weight factorized as (dh, 2*dw + channel)  -- only 392 bytes.
    w7k = jnp.transpose(params["w7"], (1, 2, 0)).reshape(7, 14).astype(jnp.float32)

    # Consolidated per-channel params: [b3, gamma, beta, fc2b, fc1b(pad), b7(pad)].
    fc1b_col = jnp.zeros((cout, 1), jnp.float32).at[:hidden].set(params["fc1b"])
    b7_col = jnp.zeros((cout, 1), jnp.float32).at[0, 0].set(params["b7"][0])
    cparams = jnp.concatenate([params["b3"], params["gamma"], params["beta"],
                               params["fc2b"], fc1b_col, b7_col], axis=1)

    seg_np = (np.arange(p)[None, :] // hw == np.arange(n)[:, None]).astype(np.float32)
    seg = jnp.asarray(seg_np)                          # (N, P) batch indicator
    poolm = jnp.asarray(seg_np.T / float(hw))          # (P, N) segmented avg-pool

    vmem = pl.BlockSpec(memory_space=pltpu.MemorySpace.VMEM)
    out = pl.pallas_call(
        functools.partial(_enhanced_block_kernel,
                          n_batch=n, height=h, width=w, pad=pad),
        out_shape=jax.ShapeDtypeStruct((cout, p), jnp.float32),
        in_specs=[vmem] * 9,
        out_specs=vmem,
    )(x_pad, masks, w3, cparams, params["fc1w"], params["fc2w"], w7k, poolm, seg)

    # (Cout, N*H*W) -> NCHW
    return jnp.transpose(out.reshape(cout, n, h, w), (1, 0, 2, 3))


def init_params(key, in_channels, out_channels):
    ks = jax.random.split(key, 8)
    hidden = max(out_channels // 8, 1)
    return {
        # 3x3 conv kernel stored as (kh, kw, Cin, Cout)
        "w3": 0.1 * jax.random.normal(ks[0], (3, 3, in_channels, out_channels), jnp.float32),
        "b3": 0.1 * jax.random.normal(ks[1], (out_channels, 1), jnp.float32),
        "gamma": 1.0 + 0.1 * jax.random.normal(ks[2], (out_channels, 1), jnp.float32),
        "beta": 0.1 * jax.random.normal(ks[3], (out_channels, 1), jnp.float32),
        # CBAM channel MLP: Conv2d(C, C//8, 1) and Conv2d(C//8, C, 1) as matrices
        "fc1w": 0.3 * jax.random.normal(ks[4], (hidden, out_channels), jnp.float32),
        "fc1b": jnp.zeros((hidden, 1), jnp.float32),
        "fc2w": 0.3 * jax.random.normal(ks[5], (out_channels, hidden), jnp.float32),
        "fc2b": jnp.zeros((out_channels, 1), jnp.float32),
        # CBAM spatial 7x7 conv weight (in-ch=2, 7, 7), bias (1,)
        "w7": 0.1 * jax.random.normal(ks[6], (2, 7, 7), jnp.float32),
        "b7": 0.1 * jax.random.normal(ks[7], (1,), jnp.float32),
    }


# --------------------------------------------------------------------------- #
# Pure-JAX reference of the PyTorch EnhancedBlock forward (NCHW)
# --------------------------------------------------------------------------- #
def reference_forward(x_nchw, params):
    w3_oihw = jnp.transpose(params["w3"], (3, 2, 0, 1))
    conv = lax.conv_general_dilated(
        x_nchw, w3_oihw, (1, 1), ((1, 1), (1, 1)),
        dimension_numbers=("NCHW", "OIHW", "NCHW"))
    conv = conv + params["b3"].reshape(1, -1, 1, 1)

    mean = jnp.mean(conv, axis=(0, 2, 3), keepdims=True)
    var = jnp.mean((conv - mean) ** 2, axis=(0, 2, 3), keepdims=True)
    bn = (conv - mean) / jnp.sqrt(var + BN_EPS)
    bn = bn * params["gamma"].reshape(1, -1, 1, 1) + params["beta"].reshape(1, -1, 1, 1)
    sp = jnp.where(bn > 20.0, bn, jnp.log1p(jnp.exp(jnp.minimum(bn, 20.0))))
    out = bn * jnp.tanh(sp)

    avg = jnp.mean(out, axis=(2, 3))
    mx = jnp.max(out, axis=(2, 3))

    def fc(v):
        h1 = jnp.maximum(v @ params["fc1w"].T + params["fc1b"].reshape(1, -1), 0.0)
        return h1 @ params["fc2w"].T + params["fc2b"].reshape(1, -1)

    ch = 1.0 / (1.0 + jnp.exp(-(fc(avg) + fc(mx))))
    out = out * ch[:, :, None, None]

    avg_c = jnp.mean(out, axis=1, keepdims=True)
    max_c = jnp.max(out, axis=1, keepdims=True)
    sp_in = jnp.concatenate([avg_c, max_c], axis=1)
    w7 = params["w7"].reshape(1, 2, 7, 7)
    spat = lax.conv_general_dilated(
        sp_in, w7, (1, 1), ((3, 3), (3, 3)),
        dimension_numbers=("NCHW", "OIHW", "NCHW"))
    spat = 1.0 / (1.0 + jnp.exp(-(spat + params["b7"].reshape(1, 1, 1, 1))))
    return out * spat


if __name__ == "__main__":
    key = jax.random.PRNGKey(0)
    kx, kp = jax.random.split(key)

    N, Cin, Cout, H, W = 2, 4, 16, 16, 16        # EnhancedBlock(4, 16), stride=1
    x = jax.random.normal(kx, (N, Cin, H, W), jnp.float32)
    params = init_params(kp, Cin, Cout)

    out = jax.block_until_ready(enhanced_block(x, params))

    ref = reference_forward(x, params)
    assert out.shape == (N, Cout, H, W)
    assert bool(jnp.all(jnp.isfinite(out)))
    max_err = float(jnp.max(jnp.abs(out - ref)))
    assert bool(jnp.allclose(out, ref, atol=2e-2, rtol=2e-2)), max_err

    print("KERNEL_OK")
</pallas_src>

<mosaic_0001>
module attributes {stable_mosaic.version = 11 : i64} {
  func.func @_enhanced_block_kernel(%arg0: memref<4x640xf32, #tpu.memory_space<vmem>>, %arg1: memref<23x512xf32, #tpu.memory_space<vmem>>, %arg2: memref<9x16x4xbf16, #tpu.memory_space<vmem>>, %arg3: memref<16x6xf32, #tpu.memory_space<vmem>>, %arg4: memref<2x16xf32, #tpu.memory_space<vmem>>, %arg5: memref<16x2xf32, #tpu.memory_space<vmem>>, %arg6: memref<7x14xf32, #tpu.memory_space<vmem>>, %arg7: memref<512x2xf32, #tpu.memory_space<vmem>>, %arg8: memref<2x512xf32, #tpu.memory_space<vmem>>, %arg9: memref<16x512xf32, #tpu.memory_space<vmem>>) attributes {dimension_semantics = [], scalar_prefetch = 0 : i64, scratch_operands = 0 : i64, tpu.core_type = #tpu.core_type<tc>} {
    %c0 = arith.constant 0 : index
    %c0_0 = arith.constant 0 : index
    %0 = vector.load %arg0[%c0, %c0_0] : memref<4x640xf32, #tpu.memory_space<vmem>>, vector<4x640xf32>
    %c0_1 = arith.constant 0 : index
    %c0_2 = arith.constant 0 : index
    %1 = vector.load %arg1[%c0_1, %c0_2] : memref<23x512xf32, #tpu.memory_space<vmem>>, vector<23x512xf32>
    %cst = arith.constant 0.000000e+00 : f32
    %2 = vector.broadcast %cst : f32 to vector<16x512xf32>
    %3 = vector.extract_strided_slice %0 {offsets = [0, 47], sizes = [4, 512], strides = [1, 1]} : vector<4x640xf32> to vector<4x512xf32>
    %4 = vector.extract_strided_slice %1 {offsets = [0, 0], sizes = [1, 512], strides = [1, 1]} : vector<23x512xf32> to vector<1x512xf32>
    %5 = vector.broadcast %4 : vector<1x512xf32> to vector<4x512xf32>
    %6 = arith.mulf %3, %5 : vector<4x512xf32>
    %7 = arith.truncf %6 : vector<4x512xf32> to vector<4x512xbf16>
    %c0_3 = arith.constant 0 : index
    %c0_4 = arith.constant 0 : index
    %c0_5 = arith.constant 0 : index
    %8 = vector.load %arg2[%c0_3, %c0_4, %c0_5] : memref<9x16x4xbf16, #tpu.memory_space<vmem>>, vector<1x16x4xbf16>
    %9 = vector.shape_cast %8 : vector<1x16x4xbf16> to vector<16x4xbf16>
    %cst_6 = arith.constant dense<0.000000e+00> : vector<16x512xf32>
    %10 = tpu.matmul %9, %7, %cst_6 {dimension_numbers = #tpu.dot_dimension_numbers<[1], [0], [0], [1], [0, 0, 1, 1], [], []>} : vector<16x4xbf16>, vector<4x512xbf16>, vector<16x512xf32> -> vector<16x512xf32>
    %11 = arith.addf %2, %10 : vector<16x512xf32>
    %12 = vector.extract_strided_slice %0 {offsets = [0, 48], sizes = [4, 512], strides = [1, 1]} : vector<4x640xf32> to vector<4x512xf32>
    %13 = vector.extract_strided_slice %1 {offsets = [1, 0], sizes = [1, 512], strides = [1, 1]} : vector<23x512xf32> to vector<1x512xf32>
    %14 = vector.broadcast %13 : vector<1x512xf32> to vector<4x512xf32>
    %15 = arith.mulf %12, %14 : vector<4x512xf32>
    %16 = arith.truncf %15 : vector<4x512xf32> to vector<4x512xbf16>
    %c1 = arith.constant 1 : index
    %c0_7 = arith.constant 0 : index
    %c0_8 = arith.constant 0 : index
    %17 = vector.load %arg2[%c1, %c0_7, %c0_8] : memref<9x16x4xbf16, #tpu.memory_space<vmem>>, vector<1x16x4xbf16>
    %18 = vector.shape_cast %17 : vector<1x16x4xbf16> to vector<16x4xbf16>
    %cst_9 = arith.constant dense<0.000000e+00> : vector<16x512xf32>
    %19 = tpu.matmul %18, %16, %cst_9 {dimension_numbers = #tpu.dot_dimension_numbers<[1], [0], [0], [1], [0, 0, 1, 1], [], []>} : vector<16x4xbf16>, vector<4x512xbf16>, vector<16x512xf32> -> vector<16x512xf32>
    %20 = arith.addf %11, %19 : vector<16x512xf32>
    %21 = vector.extract_strided_slice %0 {offsets = [0, 49], sizes = [4, 512], strides = [1, 1]} : vector<4x640xf32> to vector<4x512xf32>
    %22 = vector.extract_strided_slice %1 {offsets = [2, 0], sizes = [1, 512], strides = [1, 1]} : vector<23x512xf32> to vector<1x512xf32>
    %23 = vector.broadcast %22 : vector<1x512xf32> to vector<4x512xf32>
    %24 = arith.mulf %21, %23 : vector<4x512xf32>
    %25 = arith.truncf %24 : vector<4x512xf32> to vector<4x512xbf16>
    %c2 = arith.constant 2 : index
    %c0_10 = arith.constant 0 : index
    %c0_11 = arith.constant 0 : index
    %26 = vector.load %arg2[%c2, %c0_10, %c0_11] : memref<9x16x4xbf16, #tpu.memory_space<vmem>>, vector<1x16x4xbf16>
    %27 = vector.shape_cast %26 : vector<1x16x4xbf16> to vector<16x4xbf16>
    %cst_12 = arith.constant dense<0.000000e+00> : vector<16x512xf32>
    %28 = tpu.matmul %27, %25, %cst_12 {dimension_numbers = #tpu.dot_dimension_numbers<[1], [0], [0], [1], [0, 0, 1, 1], [], []>} : vector<16x4xbf16>, vector<4x512xbf16>, vector<16x512xf32> -> vector<16x512xf32>
    %29 = arith.addf %20, %28 : vector<16x512xf32>
    %30 = vector.extract_strided_slice %0 {offsets = [0, 63], sizes = [4, 512], strides = [1, 1]} : vector<4x640xf32> to vector<4x512xf32>
    %31 = vector.extract_strided_slice %1 {offsets = [3, 0], sizes = [1, 512], strides = [1, 1]} : vector<23x512xf32> to vector<1x512xf32>
    %32 = vector.broadcast %31 : vector<1x512xf32> to vector<4x512xf32>
    %33 = arith.mulf %30, %32 : vector<4x512xf32>
    %34 = arith.truncf %33 : vector<4x512xf32> to vector<4x512xbf16>
    %c3 = arith.constant 3 : index
    %c0_13 = arith.constant 0 : index
    %c0_14 = arith.constant 0 : index
    %35 = vector.load %arg2[%c3, %c0_13, %c0_14] : memref<9x16x4xbf16, #tpu.memory_space<vmem>>, vector<1x16x4xbf16>
    %36 = vector.shape_cast %35 : vector<1x16x4xbf16> to vector<16x4xbf16>
    %cst_15 = arith.constant dense<0.000000e+00> : vector<16x512xf32>
    %37 = tpu.matmul %36, %34, %cst_15 {dimension_numbers = #tpu.dot_dimension_numbers<[1], [0], [0], [1], [0, 0, 1, 1], [], []>} : vector<16x4xbf16>, vector<4x512xbf16>, vector<16x512xf32> -> vector<16x512xf32>
    %38 = arith.addf %29, %37 : vector<16x512xf32>
    %39 = vector.extract_strided_slice %0 {offsets = [0, 64], sizes = [4, 512], strides = [1, 1]} : vector<4x640xf32> to vector<4x512xf32>
    %40 = vector.extract_strided_slice %1 {offsets = [4, 0], sizes = [1, 512], strides = [1, 1]} : vector<23x512xf32> to vector<1x512xf32>
    %41 = vector.broadcast %40 : vector<1x512xf32> to vector<4x512xf32>
    %42 = arith.mulf %39, %41 : vector<4x512xf32>
    %43 = arith.truncf %42 : vector<4x512xf32> to vector<4x512xbf16>
    %c4 = arith.constant 4 : index
    %c0_16 = arith.constant 0 : index
    %c0_17 = arith.constant 0 : index
    %44 = vector.load %arg2[%c4, %c0_16, %c0_17] : memref<9x16x4xbf16, #tpu.memory_space<vmem>>, vector<1x16x4xbf16>
    %45 = vector.shape_cast %44 : vector<1x16x4xbf16> to vector<16x4xbf16>
    %cst_18 = arith.constant dense<0.000000e+00> : vector<16x512xf32>
    %46 = tpu.matmul %45, %43, %cst_18 {dimension_numbers = #tpu.dot_dimension_numbers<[1], [0], [0], [1], [0, 0, 1, 1], [], []>} : vector<16x4xbf16>, vector<4x512xbf16>, vector<16x512xf32> -> vector<16x512xf32>
    %47 = arith.addf %38, %46 : vector<16x512xf32>
    %48 = vector.extract_strided_slice %0 {offsets = [0, 65], sizes = [4, 512], strides = [1, 1]} : vector<4x640xf32> to vector<4x512xf32>
    %49 = vector.extract_strided_slice %1 {offsets = [5, 0], sizes = [1, 512], strides = [1, 1]} : vector<23x512xf32> to vector<1x512xf32>
    %50 = vector.broadcast %49 : vector<1x512xf32> to vector<4x512xf32>
    %51 = arith.mulf %48, %50 : vector<4x512xf32>
    %52 = arith.truncf %51 : vector<4x512xf32> to vector<4x512xbf16>
    %c5 = arith.constant 5 : index
    %c0_19 = arith.constant 0 : index
    %c0_20 = arith.constant 0 : index
    %53 = vector.load %arg2[%c5, %c0_19, %c0_20] : memref<9x16x4xbf16, #tpu.memory_space<vmem>>, vector<1x16x4xbf16>
    %54 = vector.shape_cast %53 : vector<1x16x4xbf16> to vector<16x4xbf16>
    %cst_21 = arith.constant dense<0.000000e+00> : vector<16x512xf32>
    %55 = tpu.matmul %54, %52, %cst_21 {dimension_numbers = #tpu.dot_dimension_numbers<[1], [0], [0], [1], [0, 0, 1, 1], [], []>} : vector<16x4xbf16>, vector<4x512xbf16>, vector<16x512xf32> -> vector<16x512xf32>
    %56 = arith.addf %47, %55 : vector<16x512xf32>
    %57 = vector.extract_strided_slice %0 {offsets = [0, 79], sizes = [4, 512], strides = [1, 1]} : vector<4x640xf32> to vector<4x512xf32>
    %58 = vector.extract_strided_slice %1 {offsets = [6, 0], sizes = [1, 512], strides = [1, 1]} : vector<23x512xf32> to vector<1x512xf32>
    %59 = vector.broadcast %58 : vector<1x512xf32> to vector<4x512xf32>
    %60 = arith.mulf %57, %59 : vector<4x512xf32>
    %61 = arith.truncf %60 : vector<4x512xf32> to vector<4x512xbf16>
    %c6 = arith.constant 6 : index
    %c0_22 = arith.constant 0 : index
    %c0_23 = arith.constant 0 : index
    %62 = vector.load %arg2[%c6, %c0_22, %c0_23] : memref<9x16x4xbf16, #tpu.memory_space<vmem>>, vector<1x16x4xbf16>
    %63 = vector.shape_cast %62 : vector<1x16x4xbf16> to vector<16x4xbf16>
    %cst_24 = arith.constant dense<0.000000e+00> : vector<16x512xf32>
    %64 = tpu.matmul %63, %61, %cst_24 {dimension_numbers = #tpu.dot_dimension_numbers<[1], [0], [0], [1], [0, 0, 1, 1], [], []>} : vector<16x4xbf16>, vector<4x512xbf16>, vector<16x512xf32> -> vector<16x512xf32>
    %65 = arith.addf %56, %64 : vector<16x512xf32>
    %66 = vector.extract_strided_slice %0 {offsets = [0, 80], sizes = [4, 512], strides = [1, 1]} : vector<4x640xf32> to vector<4x512xf32>
    %67 = vector.extract_strided_slice %1 {offsets = [7, 0], sizes = [1, 512], strides = [1, 1]} : vector<23x512xf32> to vector<1x512xf32>
    %68 = vector.broadcast %67 : vector<1x512xf32> to vector<4x512xf32>
    %69 = arith.mulf %66, %68 : vector<4x512xf32>
    %70 = arith.truncf %69 : vector<4x512xf32> to vector<4x512xbf16>
    %c7 = arith.constant 7 : index
    %c0_25 = arith.constant 0 : index
    %c0_26 = arith.constant 0 : index
    %71 = vector.load %arg2[%c7, %c0_25, %c0_26] : memref<9x16x4xbf16, #tpu.memory_space<vmem>>, vector<1x16x4xbf16>
    %72 = vector.shape_cast %71 : vector<1x16x4xbf16> to vector<16x4xbf16>
    %cst_27 = arith.constant dense<0.000000e+00> : vector<16x512xf32>
    %73 = tpu.matmul %72, %70, %cst_27 {dimension_numbers = #tpu.dot_dimension_numbers<[1], [0], [0], [1], [0, 0, 1, 1], [], []>} : vector<16x4xbf16>, vector<4x512xbf16>, vector<16x512xf32> -> vector<16x512xf32>
    %74 = arith.addf %65, %73 : vector<16x512xf32>
    %75 = vector.extract_strided_slice %0 {offsets = [0, 81], sizes = [4, 512], strides = [1, 1]} : vector<4x640xf32> to vector<4x512xf32>
    %76 = vector.extract_strided_slice %1 {offsets = [8, 0], sizes = [1, 512], strides = [1, 1]} : vector<23x512xf32> to vector<1x512xf32>
    %77 = vector.broadcast %76 : vector<1x512xf32> to vector<4x512xf32>
    %78 = arith.mulf %75, %77 : vector<4x512xf32>
    %79 = arith.truncf %78 : vector<4x512xf32> to vector<4x512xbf16>
    %c8 = arith.constant 8 : index
    %c0_28 = arith.constant 0 : index
    %c0_29 = arith.constant 0 : index
    %80 = vector.load %arg2[%c8, %c0_28, %c0_29] : memref<9x16x4xbf16, #tpu.memory_space<vmem>>, vector<1x16x4xbf16>
    %81 = vector.shape_cast %80 : vector<1x16x4xbf16> to vector<16x4xbf16>
    %cst_30 = arith.constant dense<0.000000e+00> : vector<16x512xf32>
    %82 = tpu.matmul %81, %79, %cst_30 {dimension_numbers = #tpu.dot_dimension_numbers<[1], [0], [0], [1], [0, 0, 1, 1], [], []>} : vector<16x4xbf16>, vector<4x512xbf16>, vector<16x512xf32> -> vector<16x512xf32>
    %83 = arith.addf %74, %82 : vector<16x512xf32>
    %c0_31 = arith.constant 0 : index
    %c0_32 = arith.constant 0 : index
    %84 = vector.load %arg3[%c0_31, %c0_32] : memref<16x6xf32, #tpu.memory_space<vmem>>, vector<16x1xf32>
    %85 = vector.broadcast %84 : vector<16x1xf32> to vector<16x512xf32>
    %86 = arith.addf %83, %85 : vector<16x512xf32>
    %cst_33 = arith.constant dense<0.000000e+00> : vector<16xf32>
    %87 = vector.multi_reduction <add>, %86, %cst_33 [1] : vector<16x512xf32> to vector<16xf32>
    %88 = vector.shape_cast %87 : vector<16xf32> to vector<16x1xf32>
    %cst_34 = arith.constant 0.001953125 : f32
    %89 = vector.broadcast %cst_34 : f32 to vector<16x1xf32>
    %90 = arith.mulf %88, %89 : vector<16x1xf32>
    %91 = vector.broadcast %90 : vector<16x1xf32> to vector<16x512xf32>
    %92 = arith.subf %86, %91 : vector<16x512xf32>
    %93 = arith.mulf %92, %92 : vector<16x512xf32>
    %cst_35 = arith.constant dense<0.000000e+00> : vector<16xf32>
    %94 = vector.multi_reduction <add>, %93, %cst_35 [1] : vector<16x512xf32> to vector<16xf32>
    %95 = vector.shape_cast %94 : vector<16xf32> to vector<16x1xf32>
    %cst_36 = arith.constant 0.001953125 : f32
    %96 = vector.broadcast %cst_36 : f32 to vector<16x1xf32>
    %97 = arith.mulf %95, %96 : vector<16x1xf32>
    %c0_37 = arith.constant 0 : index
    %c1_38 = arith.constant 1 : index
    %98 = vector.load %arg3[%c0_37, %c1_38] : memref<16x6xf32, #tpu.memory_space<vmem>>, vector<16x1xf32>
    %cst_39 = arith.constant 9.99999974E-6 : f32
    %99 = vector.broadcast %cst_39 : f32 to vector<16x1xf32>
    %100 = arith.addf %97, %99 : vector<16x1xf32>
    %101 = math.rsqrt %100 : vector<16x1xf32>
    %102 = arith.mulf %98, %101 : vector<16x1xf32>
    %103 = vector.broadcast %102 : vector<16x1xf32> to vector<16x512xf32>
    %104 = arith.mulf %92, %103 : vector<16x512xf32>
    %c0_40 = arith.constant 0 : index
    %c2_41 = arith.constant 2 : index
    %105 = vector.load %arg3[%c0_40, %c2_41] : memref<16x6xf32, #tpu.memory_space<vmem>>, vector<16x1xf32>
    %106 = vector.broadcast %105 : vector<16x1xf32> to vector<16x512xf32>
    %107 = arith.addf %104, %106 : vector<16x512xf32>
    %cst_42 = arith.constant 2.000000e+01 : f32
    %108 = vector.broadcast %cst_42 : f32 to vector<16x512xf32>
    %109 = arith.minimumf %107, %108 : vector<16x512xf32>
    %110 = math.exp %109 : vector<16x512xf32>
    %cst_43 = arith.constant 2.000000e+00 : f32
    %111 = vector.broadcast %cst_43 : f32 to vector<16x512xf32>
    %112 = arith.addf %110, %111 : vector<16x512xf32>
    %113 = arith.mulf %110, %112 : vector<16x512xf32>
    %cst_44 = arith.constant 2.000000e+00 : f32
    %114 = vector.broadcast %cst_44 : f32 to vector<16x512xf32>
    %115 = arith.addf %113, %114 : vector<16x512xf32>
    %116 = tpu.reciprocal %115 {approx = true} : vector<16x512xf32> -> vector<16x512xf32>
    %117 = arith.mulf %113, %116 : vector<16x512xf32>
    %118 = arith.mulf %107, %117 : vector<16x512xf32>
    %c0_45 = arith.constant 0 : index
    %c0_46 = arith.constant 0 : index
    %119 = vector.load %arg7[%c0_45, %c0_46] : memref<512x2xf32, #tpu.memory_space<vmem>>, vector<512x2xf32>
    %cst_47 = arith.constant dense<0.000000e+00> : vector<16x2xf32>
    %120 = tpu.matmul %118, %119, %cst_47 {dimension_numbers = #tpu.dot_dimension_numbers<[1], [0], [0], [1], [0, 0, 1, 1], [], []>} : vector<16x512xf32>, vector<512x2xf32>, vector<16x2xf32> -> vector<16x2xf32>
    %121 = vector.extract_strided_slice %118 {offsets = [0, 0], sizes = [16, 256], strides = [1, 1]} : vector<16x512xf32> to vector<16x256xf32>
    %cst_48 = arith.constant dense<0xFF800000> : vector<16xf32>
    %122 = vector.multi_reduction <maximumf>, %121, %cst_48 [1] : vector<16x256xf32> to vector<16xf32>
    %123 = vector.shape_cast %122 : vector<16xf32> to vector<16x1xf32>
    %124 = vector.extract_strided_slice %118 {offsets = [0, 256], sizes = [16, 256], strides = [1, 1]} : vector<16x512xf32> to vector<16x256xf32>
    %cst_49 = arith.constant dense<0xFF800000> : vector<16xf32>
    %125 = vector.multi_reduction <maximumf>, %124, %cst_49 [1] : vector<16x256xf32> to vector<16xf32>
    %126 = vector.shape_cast %125 : vector<16xf32> to vector<16x1xf32>
    %127 = tpu.concatenate %123, %126 in 1 : vector<16x1xf32>, vector<16x1xf32> -> vector<16x2xf32>
    %128 = tpu.concatenate %120, %127 in 1 : vector<16x2xf32>, vector<16x2xf32> -> vector<16x4xf32>
    %c0_50 = arith.constant 0 : index
    %c0_51 = arith.constant 0 : index
    %129 = vector.load %arg4[%c0_50, %c0_51] : memref<2x16xf32, #tpu.memory_space<vmem>>, vector<2x16xf32>
    %cst_52 = arith.constant dense<0.000000e+00> : vector<2x4xf32>
    %130 = tpu.matmul %129, %128, %cst_52 {dimension_numbers = #tpu.dot_dimension_numbers<[1], [0], [0], [1], [0, 0, 1, 1], [], []>} : vector<2x16xf32>, vector<16x4xf32>, vector<2x4xf32> -> vector<2x4xf32>
    %c0_53 = arith.constant 0 : index
    %c4_54 = arith.constant 4 : index
    %131 = vector.load %arg3[%c0_53, %c4_54] : memref<16x6xf32, #tpu.memory_space<vmem>>, vector<2x1xf32>
    %132 = vector.broadcast %131 : vector<2x1xf32> to vector<2x4xf32>
    %133 = arith.addf %130, %132 : vector<2x4xf32>
    %cst_55 = arith.constant 0.000000e+00 : f32
    %134 = vector.broadcast %cst_55 : f32 to vector<2x4xf32>
    %135 = arith.maximumf %133, %134 : vector<2x4xf32>
    %c0_56 = arith.constant 0 : index
    %c0_57 = arith.constant 0 : index
    %136 = vector.load %arg5[%c0_56, %c0_57] : memref<16x2xf32, #tpu.memory_space<vmem>>, vector<16x2xf32>
    %cst_58 = arith.constant dense<0.000000e+00> : vector<16x4xf32>
    %137 = tpu.matmul %136, %135, %cst_58 {dimension_numbers = #tpu.dot_dimension_numbers<[1], [0], [0], [1], [0, 0, 1, 1], [], []>} : vector<16x2xf32>, vector<2x4xf32>, vector<16x4xf32> -> vector<16x4xf32>
    %c0_59 = arith.constant 0 : index
    %c3_60 = arith.constant 3 : index
    %138 = vector.load %arg3[%c0_59, %c3_60] : memref<16x6xf32, #tpu.memory_space<vmem>>, vector<16x1xf32>
    %139 = vector.broadcast %138 : vector<16x1xf32> to vector<16x4xf32>
    %140 = arith.addf %137, %139 : vector<16x4xf32>
    %141 = vector.extract_strided_slice %140 {offsets = [0, 0], sizes = [16, 2], strides = [1, 1]} : vector<16x4xf32> to vector<16x2xf32>
    %142 = vector.extract_strided_slice %140 {offsets = [0, 2], sizes = [16, 2], strides = [1, 1]} : vector<16x4xf32> to vector<16x2xf32>
    %143 = arith.addf %141, %142 : vector<16x2xf32>
    %cst_61 = arith.constant 0.000000e+00 : f32
    %144 = vector.broadcast %cst_61 : f32 to vector<16x2xf32>
    %145 = arith.subf %144, %143 : vector<16x2xf32>
    %146 = math.exp %145 : vector<16x2xf32>
    %cst_62 = arith.constant 1.000000e+00 : f32
    %147 = vector.broadcast %cst_62 : f32 to vector<16x2xf32>
    %148 = arith.addf %147, %146 : vector<16x2xf32>
    %149 = tpu.reciprocal %148 {approx = true} : vector<16x2xf32> -> vector<16x2xf32>
    %c0_63 = arith.constant 0 : index
    %c0_64 = arith.constant 0 : index
    %150 = vector.load %arg8[%c0_63, %c0_64] : memref<2x512xf32, #tpu.memory_space<vmem>>, vector<2x512xf32>
    %cst_65 = arith.constant dense<0.000000e+00> : vector<16x512xf32>
    %151 = tpu.matmul %149, %150, %cst_65 {dimension_numbers = #tpu.dot_dimension_numbers<[1], [0], [0], [1], [0, 0, 1, 1], [], []>} : vector<16x2xf32>, vector<2x512xf32>, vector<16x512xf32> -> vector<16x512xf32>
    %152 = arith.mulf %118, %151 : vector<16x512xf32>
    %cst_66 = arith.constant dense<0.000000e+00> : vector<512xf32>
    %153 = vector.multi_reduction <add>, %152, %cst_66 [0] : vector<16x512xf32> to vector<512xf32>
    %154 = vector.shape_cast %153 : vector<512xf32> to vector<1x512xf32>
    %cst_67 = arith.constant 6.250000e-02 : f32
    %155 = vector.broadcast %cst_67 : f32 to vector<1x512xf32>
    %156 = arith.mulf %154, %155 : vector<1x512xf32>
    %cst_68 = arith.constant dense<0xFF800000> : vector<512xf32>
    %157 = vector.multi_reduction <maximumf>, %152, %cst_68 [0] : vector<16x512xf32> to vector<512xf32>
    %158 = vector.shape_cast %157 : vector<512xf32> to vector<1x512xf32>
    %159 = tpu.concatenate %156, %158 in 0 : vector<1x512xf32>, vector<1x512xf32> -> vector<2x512xf32>
    %cst_69 = arith.constant 0.000000e+00 : f32
    %160 = vector.broadcast %cst_69 : f32 to vector<2x64xf32>
    %161 = tpu.concatenate %160, %159, %160 in 1 : vector<2x64xf32>, vector<2x512xf32>, vector<2x64xf32> -> vector<2x640xf32>
    %162 = vector.extract_strided_slice %161 {offsets = [0, 61], sizes = [2, 512], strides = [1, 1]} : vector<2x640xf32> to vector<2x512xf32>
    %163 = vector.extract_strided_slice %1 {offsets = [9, 0], sizes = [1, 512], strides = [1, 1]} : vector<23x512xf32> to vector<1x512xf32>
    %164 = vector.broadcast %163 : vector<1x512xf32> to vector<2x512xf32>
    %165 = arith.mulf %162, %164 : vector<2x512xf32>
    %166 = vector.extract_strided_slice %161 {offsets = [0, 62], sizes = [2, 512], strides = [1, 1]} : vector<2x640xf32> to vector<2x512xf32>
    %167 = vector.extract_strided_slice %1 {offsets = [10, 0], sizes = [1, 512], strides = [1, 1]} : vector<23x512xf32> to vector<1x512xf32>
    %168 = vector.broadcast %167 : vector<1x512xf32> to vector<2x512xf32>
    %169 = arith.mulf %166, %168 : vector<2x512xf32>
    %170 = vector.extract_strided_slice %161 {offsets = [0, 63], sizes = [2, 512], strides = [1, 1]} : vector<2x640xf32> to vector<2x512xf32>
    %171 = vector.extract_strided_slice %1 {offsets = [11, 0], sizes = [1, 512], strides = [1, 1]} : vector<23x512xf32> to vector<1x512xf32>
    %172 = vector.broadcast %171 : vector<1x512xf32> to vector<2x512xf32>
    %173 = arith.mulf %170, %172 : vector<2x512xf32>
    %174 = vector.extract_strided_slice %161 {offsets = [0, 64], sizes = [2, 512], strides = [1, 1]} : vector<2x640xf32> to vector<2x512xf32>
    %175 = vector.extract_strided_slice %1 {offsets = [12, 0], sizes = [1, 512], strides = [1, 1]} : vector<23x512xf32> to vector<1x512xf32>
    %176 = vector.broadcast %175 : vector<1x512xf32> to vector<2x512xf32>
    %177 = arith.mulf %174, %176 : vector<2x512xf32>
    %178 = vector.extract_strided_slice %161 {offsets = [0, 65], sizes = [2, 512], strides = [1, 1]} : vector<2x640xf32> to vector<2x512xf32>
    %179 = vector.extract_strided_slice %1 {offsets = [13, 0], sizes = [1, 512], strides = [1, 1]} : vector<23x512xf32> to vector<1x512xf32>
    %180 = vector.broadcast %179 : vector<1x512xf32> to vector<2x512xf32>
    %181 = arith.mulf %178, %180 : vector<2x512xf32>
    %182 = vector.extract_strided_slice %161 {offsets = [0, 66], sizes = [2, 512], strides = [1, 1]} : vector<2x640xf32> to vector<2x512xf32>
    %183 = vector.extract_strided_slice %1 {offsets = [14, 0], sizes = [1, 512], strides = [1, 1]} : vector<23x512xf32> to vector<1x512xf32>
    %184 = vector.broadcast %183 : vector<1x512xf32> to vector<2x512xf32>
    %185 = arith.mulf %182, %184 : vector<2x512xf32>
    %186 = vector.extract_strided_slice %161 {offsets = [0, 67], sizes = [2, 512], strides = [1, 1]} : vector<2x640xf32> to vector<2x512xf32>
    %187 = vector.extract_strided_slice %1 {offsets = [15, 0], sizes = [1, 512], strides = [1, 1]} : vector<23x512xf32> to vector<1x512xf32>
    %188 = vector.broadcast %187 : vector<1x512xf32> to vector<2x512xf32>
    %189 = arith.mulf %186, %188 : vector<2x512xf32>
    %190 = tpu.concatenate %165, %169, %173, %177, %181, %185, %189 in 0 : vector<2x512xf32>, vector<2x512xf32>, vector<2x512xf32>, vector<2x512xf32>, vector<2x512xf32>, vector<2x512xf32>, vector<2x512xf32> -> vector<14x512xf32>
    %cst_70 = arith.constant 0.000000e+00 : f32
    %191 = vector.broadcast %cst_70 : f32 to vector<14x64xf32>
    %192 = tpu.concatenate %191, %190, %191 in 1 : vector<14x64xf32>, vector<14x512xf32>, vector<14x64xf32> -> vector<14x640xf32>
    %c0_71 = arith.constant 0 : index
    %c0_72 = arith.constant 0 : index
    %193 = vector.load %arg6[%c0_71, %c0_72] : memref<7x14xf32, #tpu.memory_space<vmem>>, vector<7x14xf32>
    %cst_73 = arith.constant 0.000000e+00 : f32
    %194 = vector.broadcast %cst_73 : f32 to vector<1x512xf32>
    %195 = vector.extract_strided_slice %193 {offsets = [0, 0], sizes = [1, 14], strides = [1, 1]} : vector<7x14xf32> to vector<1x14xf32>
    %196 = vector.extract_strided_slice %192 {offsets = [0, 16], sizes = [14, 512], strides = [1, 1]} : vector<14x640xf32> to vector<14x512xf32>
    %cst_74 = arith.constant dense<0.000000e+00> : vector<1x512xf32>
    %197 = tpu.matmul %195, %196, %cst_74 {dimension_numbers = #tpu.dot_dimension_numbers<[1], [0], [0], [1], [0, 0, 1, 1], [], []>} : vector<1x14xf32>, vector<14x512xf32>, vector<1x512xf32> -> vector<1x512xf32>
    %198 = vector.extract_strided_slice %1 {offsets = [16, 0], sizes = [1, 512], strides = [1, 1]} : vector<23x512xf32> to vector<1x512xf32>
    %199 = arith.mulf %197, %198 : vector<1x512xf32>
    %200 = arith.addf %194, %199 : vector<1x512xf32>
    %201 = vector.extract_strided_slice %193 {offsets = [1, 0], sizes = [1, 14], strides = [1, 1]} : vector<7x14xf32> to vector<1x14xf32>
    %202 = vector.extract_strided_slice %192 {offsets = [0, 32], sizes = [14, 512], strides = [1, 1]} : vector<14x640xf32> to vector<14x512xf32>
    %cst_75 = arith.constant dense<0.000000e+00> : vector<1x512xf32>
    %203 = tpu.matmul %201, %202, %cst_75 {dimension_numbers = #tpu.dot_dimension_numbers<[1], [0], [0], [1], [0, 0, 1, 1], [], []>} : vector<1x14xf32>, vector<14x512xf32>, vector<1x512xf32> -> vector<1x512xf32>
    %204 = vector.extract_strided_slice %1 {offsets = [17, 0], sizes = [1, 512], strides = [1, 1]} : vector<23x512xf32> to vector<1x512xf32>
    %205 = arith.mulf %203, %204 : vector<1x512xf32>
    %206 = arith.addf %200, %205 : vector<1x512xf32>
    %207 = vector.extract_strided_slice %193 {offsets = [2, 0], sizes = [1, 14], strides = [1, 1]} : vector<7x14xf32> to vector<1x14xf32>
    %208 = vector.extract_strided_slice %192 {offsets = [0, 48], sizes = [14, 512], strides = [1, 1]} : vector<14x640xf32> to vector<14x512xf32>
    %cst_76 = arith.constant dense<0.000000e+00> : vector<1x512xf32>
    %209 = tpu.matmul %207, %208, %cst_76 {dimension_numbers = #tpu.dot_dimension_numbers<[1], [0], [0], [1], [0, 0, 1, 1], [], []>} : vector<1x14xf32>, vector<14x512xf32>, vector<1x512xf32> -> vector<1x512xf32>
    %210 = vector.extract_strided_slice %1 {offsets = [18, 0], sizes = [1, 512], strides = [1, 1]} : vector<23x512xf32> to vector<1x512xf32>
    %211 = arith.mulf %209, %210 : vector<1x512xf32>
    %212 = arith.addf %206, %211 : vector<1x512xf32>
    %213 = vector.extract_strided_slice %193 {offsets = [3, 0], sizes = [1, 14], strides = [1, 1]} : vector<7x14xf32> to vector<1x14xf32>
    %214 = vector.extract_strided_slice %192 {offsets = [0, 64], sizes = [14, 512], strides = [1, 1]} : vector<14x640xf32> to vector<14x512xf32>
    %cst_77 = arith.constant dense<0.000000e+00> : vector<1x512xf32>
    %215 = tpu.matmul %213, %214, %cst_77 {dimension_numbers = #tpu.dot_dimension_numbers<[1], [0], [0], [1], [0, 0, 1, 1], [], []>} : vector<1x14xf32>, vector<14x512xf32>, vector<1x512xf32> -> vector<1x512xf32>
    %216 = vector.extract_strided_slice %1 {offsets = [19, 0], sizes = [1, 512], strides = [1, 1]} : vector<23x512xf32> to vector<1x512xf32>
    %217 = arith.mulf %215, %216 : vector<1x512xf32>
    %218 = arith.addf %212, %217 : vector<1x512xf32>
    %219 = vector.extract_strided_slice %193 {offsets = [4, 0], sizes = [1, 14], strides = [1, 1]} : vector<7x14xf32> to vector<1x14xf32>
    %220 = vector.extract_strided_slice %192 {offsets = [0, 80], sizes = [14, 512], strides = [1, 1]} : vector<14x640xf32> to vector<14x512xf32>
    %cst_78 = arith.constant dense<0.000000e+00> : vector<1x512xf32>
    %221 = tpu.matmul %219, %220, %cst_78 {dimension_numbers = #tpu.dot_dimension_numbers<[1], [0], [0], [1], [0, 0, 1, 1], [], []>} : vector<1x14xf32>, vector<14x512xf32>, vector<1x512xf32> -> vector<1x512xf32>
    %222 = vector.extract_strided_slice %1 {offsets = [20, 0], sizes = [1, 512], strides = [1, 1]} : vector<23x512xf32> to vector<1x512xf32>
    %223 = arith.mulf %221, %222 : vector<1x512xf32>
    %224 = arith.addf %218, %223 : vector<1x512xf32>
    %225 = vector.extract_strided_slice %193 {offsets = [5, 0], sizes = [1, 14], strides = [1, 1]} : vector<7x14xf32> to vector<1x14xf32>
    %226 = vector.extract_strided_slice %192 {offsets = [0, 96], sizes = [14, 512], strides = [1, 1]} : vector<14x640xf32> to vector<14x512xf32>
    %cst_79 = arith.constant dense<0.000000e+00> : vector<1x512xf32>
    %227 = tpu.matmul %225, %226, %cst_79 {dimension_numbers = #tpu.dot_dimension_numbers<[1], [0], [0], [1], [0, 0, 1, 1], [], []>} : vector<1x14xf32>, vector<14x512xf32>, vector<1x512xf32> -> vector<1x512xf32>
    %228 = vector.extract_strided_slice %1 {offsets = [21, 0], sizes = [1, 512], strides = [1, 1]} : vector<23x512xf32> to vector<1x512xf32>
    %229 = arith.mulf %227, %228 : vector<1x512xf32>
    %230 = arith.addf %224, %229 : vector<1x512xf32>
    %231 = vector.extract_strided_slice %193 {offsets = [6, 0], sizes = [1, 14], strides = [1, 1]} : vector<7x14xf32> to vector<1x14xf32>
    %232 = vector.extract_strided_slice %192 {offsets = [0, 112], sizes = [14, 512], strides = [1, 1]} : vector<14x640xf32> to vector<14x512xf32>
    %cst_80 = arith.constant dense<0.000000e+00> : vector<1x512xf32>
    %233 = tpu.matmul %231, %232, %cst_80 {dimension_numbers = #tpu.dot_dimension_numbers<[1], [0], [0], [1], [0, 0, 1, 1], [], []>} : vector<1x14xf32>, vector<14x512xf32>, vector<1x512xf32> -> vector<1x512xf32>
    %234 = vector.extract_strided_slice %1 {offsets = [22, 0], sizes = [1, 512], strides = [1, 1]} : vector<23x512xf32> to vector<1x512xf32>
    %235 = arith.mulf %233, %234 : vector<1x512xf32>
    %236 = arith.addf %230, %235 : vector<1x512xf32>
    %c0_81 = arith.constant 0 : index
    %c5_82 = arith.constant 5 : index
    %237 = vector.load %arg3[%c0_81, %c5_82] : memref<16x6xf32, #tpu.memory_space<vmem>>, vector<1x1xf32>
    %238 = vector.broadcast %237 : vector<1x1xf32> to vector<1x512xf32>
    %239 = arith.addf %236, %238 : vector<1x512xf32>
    %cst_83 = arith.constant 0.000000e+00 : f32
    %240 = vector.broadcast %cst_83 : f32 to vector<1x512xf32>
    %241 = arith.subf %240, %239 : vector<1x512xf32>
    %242 = math.exp %241 : vector<1x512xf32>
    %cst_84 = arith.constant 1.000000e+00 : f32
    %243 = vector.broadcast %cst_84 : f32 to vector<1x512xf32>
    %244 = arith.addf %243, %242 : vector<1x512xf32>
    %245 = tpu.reciprocal %244 {approx = true} : vector<1x512xf32> -> vector<1x512xf32>
    %246 = vector.broadcast %245 : vector<1x512xf32> to vector<16x512xf32>
    %247 = arith.mulf %152, %246 : vector<16x512xf32>
    %c0_85 = arith.constant 0 : index
    %c0_86 = arith.constant 0 : index
    %248 = vector.load %arg9[%c0_85, %c0_86] : memref<16x512xf32, #tpu.memory_space<vmem>>, vector<16x512xf32>
    tpu.vector_store %arg9[%c0_85, %c0_86], %247 {strides = array<i32>} : memref<16x512xf32, #tpu.memory_space<vmem>>, vector<16x512xf32>,
    return
  }
}

</mosaic_0001>

<llo_original>
// kernel: tpu_custom_call.1
$region0: #{tpu_custom_call.1}
  #allocation0 [shape = 'u32[]', space=smem, size = 0x4, offset = 0x4, fixed_abs, tag = 'smem constant byte address 0x4 - core index']
  #allocation1 [shape = 'u32[72,128]{1,0:T(1,128)}', space=vmem, size = 0x9000, scoped, tag = 'internal scratch']
  %s0 = inlined_call_operand.vmem [shape: f32[4,640], index: 0, kind: input, shape index: {}]
  %s1 = inlined_call_operand.vmem [shape: f32[23,512], index: 1, kind: input, shape index: {}]
  %s2 = inlined_call_operand.vmem [shape: bf16[9,16,4], index: 2, kind: input, shape index: {}]
  %s3 = inlined_call_operand.vmem [shape: f32[16,6], index: 3, kind: input, shape index: {}]
  %s4 = inlined_call_operand.vmem [shape: f32[2,16], index: 4, kind: input, shape index: {}]
  %s5 = inlined_call_operand.vmem [shape: f32[16,2], index: 5, kind: input, shape index: {}]
  %s6 = inlined_call_operand.vmem [shape: f32[7,14], index: 6, kind: input, shape index: {}]
  %s7 = inlined_call_operand.vmem [shape: f32[512,2], index: 7, kind: input, shape index: {}]
  %s8 = inlined_call_operand.vmem [shape: f32[2,512], index: 8, kind: input, shape index: {}]
  %s9 = inlined_call_operand.hbm [shape: f32[16,512], index: 9, kind: output, shape index: {}]
  %s10 = sld [smem:[#allocation0]]
  $region46: #{tpu_custom_call.1} parent=0
    _
  %s12 = ssub.s32 1, %s10
  %s13 = scalar_select 0, %s12, %s10
  $region1: #{tpu_custom_call.1} parent=0
    #allocation2 [shape = 'u8[32768]{0}', space=vmem, size = 0x8000, scoped, tag = 'output window, operand 0, single buffered']
    #allocation3 [shape = 's32[1]{0}', space=sflag, size = 0x4, scoped, tag = 'scoped memory for tpu_custom_call.1']
    %14 = vsyncpa [#allocation3], 0
    // Predicated region
    $region2: #{tpu_custom_call.1} parent=1 // pred_check
      _
    $region3: #{tpu_custom_call.1} parent=1 // pred_check_branch
      %16 = sbr.rel (0) target = $region5
    $region4: #{tpu_custom_call.1} parent=1 // pred_region
      _
    $region5: #{tpu_custom_call.1} parent=1 // pred_fallthru
      _
    // Predicated region
    $region6: #{tpu_custom_call.1} parent=1 // pred_check
      _
    $region7: #{tpu_custom_call.1} parent=1 // pred_check_branch
      %18 = sbr.rel (0) target = $region9
    $region8: #{tpu_custom_call.1} parent=1 // pred_region
      _
    $region9: #{tpu_custom_call.1} parent=1 // pred_fallthru
      _
    // Predicated region
    $region10: #{tpu_custom_call.1} parent=1 // pred_check
      _
    $region11: #{tpu_custom_call.1} parent=1 // pred_check_branch
      %20 = sbr.rel (0) target = $region13
    $region12: #{tpu_custom_call.1} parent=1 // pred_region
      _
    $region13: #{tpu_custom_call.1} parent=1 // pred_fallthru
      _
    // Predicated region
    $region14: #{tpu_custom_call.1} parent=1 // pred_check
      _
    $region15: #{tpu_custom_call.1} parent=1 // pred_check_branch
      %22 = sbr.rel (0) target = $region17
    $region16: #{tpu_custom_call.1} parent=1 // pred_region
      _
    $region17: #{tpu_custom_call.1} parent=1 // pred_fallthru
      _
    // Predicated region
    $region18: #{tpu_custom_call.1} parent=1 // pred_check
      _
    $region19: #{tpu_custom_call.1} parent=1 // pred_check_branch
      %24 = sbr.rel (0) target = $region21
    $region20: #{tpu_custom_call.1} parent=1 // pred_region
      _
    $region21: #{tpu_custom_call.1} parent=1 // pred_fallthru
      _
    // Predicated region
    $region22: #{tpu_custom_call.1} parent=1 // pred_check
      _
    $region23: #{tpu_custom_call.1} parent=1 // pred_check_branch
      %26 = sbr.rel (0) target = $region25
    $region24: #{tpu_custom_call.1} parent=1 // pred_region
      _
    $region25: #{tpu_custom_call.1} parent=1 // pred_fallthru
      _
    // Predicated region
    $region26: #{tpu_custom_call.1} parent=1 // pred_check
      _
    $region27: #{tpu_custom_call.1} parent=1 // pred_check_branch
      %28 = sbr.rel (0) target = $region29
    $region28: #{tpu_custom_call.1} parent=1 // pred_region
      _
    $region29: #{tpu_custom_call.1} parent=1 // pred_fallthru
      _
    // Predicated region
    $region30: #{tpu_custom_call.1} parent=1 // pred_check
      _
    $region31: #{tpu_custom_call.1} parent=1 // pred_check_branch
      %30 = sbr.rel (0) target = $region33
    $region32: #{tpu_custom_call.1} parent=1 // pred_region
      _
    $region33: #{tpu_custom_call.1} parent=1 // pred_fallthru
      _
    // Predicated region
    $region34: #{tpu_custom_call.1} parent=1 // pred_check
      _
    $region35: #{tpu_custom_call.1} parent=1 // pred_check_branch
      %32 = sbr.rel (0) target = $region37
    $region36: #{tpu_custom_call.1} parent=1 // pred_region
      _
    $region37: #{tpu_custom_call.1} parent=1 // pred_fallthru
      _
    %v34 = vld [vmem:[%s0] sm:$0xff]
    %v35 = vld [vmem:[%s0 + $0x8] sm:$0xff]
    %v36 = vld [vmem:[%s0 + $0x10] sm:$0xf]
    %v37 = vld [vmem:[%s1] sm:$0xff]
    %v38 = vld [vmem:[%s1 + $0x8] sm:$0xff]
    %v39 = vld [vmem:[%s1 + $0x10] sm:$0xff]
    %v40 = vld [vmem:[%s1 + $0x18] sm:$0xff]
    %v41 = vld [vmem:[%s1 + $0x20] sm:$0xff]
    %v42 = vld [vmem:[%s1 + $0x28] sm:$0xff]
    %v43 = vld [vmem:[%s1 + $0x30] sm:$0xff]
    %v44 = vld [vmem:[%s1 + $0x38] sm:$0xff]
    %v45 = vld [vmem:[%s1 + $0x40] sm:$0x7f]
    %v46 = vld [vmem:[%s1 + $0x48] sm:$0x7f]
    %v47 = vld [vmem:[%s1 + $0x50] sm:$0x7f]
    %v48 = vld [vmem:[%s1 + $0x58] sm:$0x7f]
    %v49 = vperm.slane %v37, 0
    %v50 = vperm.slane %v38, 0
    %v51 = vperm.slane %v39, 0
    %v52 = vperm.slane %v40, 0
    %v57 = vrot.slane %v50, 4
    %v58 = vrot.slane %v52, 4
    %vm59 = vcmask 1043456
    %v60 = vsel %vm59, %v49, %v57
    %v61 = vsel %vm59, %v51, %v58
    %62 = vrot.lane.b32.xlu0 %v60, 47
    %v63 = vpop.permute.xlu0 %62
    %64 = vrot.lane.b32.xlu0 %v61, 47
    %v65 = vpop.permute.xlu0 %64
    %v66 = vrot.slane %v63, 4
    %v67 = vrot.slane %v65, 4
    %vm68 = vcmask 384000
    %v69 = vsel %vm68, %v66, %v63
    %v70 = vsel %vm59, %v66, %v67
    %v71 = vsel %vm68, %v70, %v65
    %v75 = vmul.f32 %v34, %v69
    %v76 = vmul.f32 %v35, %v71
    %v77 = vmul.f32 %v36, %v67
    %81 = vst [vmem:[#allocation1] ss:$2 sm:$0xff] %v75
    %s82 = scalar_lea.vmem [#allocation1], 16
    %83 = vst [vmem:[%s82] ss:$2 sm:$0xff] %v76
    %s84 = scalar_lea.vmem [#allocation1], 32
    %85 = vst [vmem:[%s84] ss:$2 sm:$0xff] %v77
    %v86 = vld.sshfl [vmem:[#allocation1] sm:$0xff pattern:$0x75316420]
    %v87 = vld.sshfl [vmem:[#allocation1 + $0x8] sm:$0xff pattern:$0x75316420]
    %v88 = vld.sshfl [vmem:[#allocation1 + $0x10] sm:$0xff pattern:$0x75316420]
    %v89 = vld.sshfl [vmem:[#allocation1 + $0x18] sm:$0xff pattern:$0x75316420]
    %v90 = vld.sshfl [vmem:[#allocation1 + $0x20] sm:$0xff pattern:$0x75316420]
    %v96 = vpack.c.bf16 %v86, %v86
    %v97 = vpack.c.bf16 %v87, %v87
    %v98 = vpack.c.bf16 %v88, %v88
    %v99 = vpack.c.bf16 %v89, %v89
    %v100 = vpack.c.bf16 %v90, %v90
    %v101 = vld [vmem:[%s2] sm:$0xf]
    %v102 = vld [vmem:[%s2 + $0x4] sm:$0xf]
    %v103 = vperm.slane %v37, 1
    %v104 = vperm.slane %v38, 1
    %v105 = vperm.slane %v39, 1
    %v106 = vperm.slane %v40, 1
    %v111 = vrot.slane %v104, 4
    %v112 = vrot.slane %v106, 4
    %v113 = vsel %vm59, %v103, %v111
    %v114 = vsel %vm59, %v105, %v112
    %115 = vrot.lane.b32.xlu0 %v113, 48
    %v116 = vpop.permute.xlu0 %115
    %117 = vrot.lane.b32.xlu0 %v114, 48
    %v118 = vpop.permute.xlu0 %117
    %v119 = vrot.slane %v116, 4
    %v120 = vrot.slane %v118, 4
    %vm121 = vcmask 392192
    %v122 = vsel %vm121, %v119, %v116
    %v123 = vsel %vm59, %v119, %v120
    %v124 = vsel %vm121, %v123, %v118
    %v128 = vmul.f32 %v34, %v122
    %v129 = vmul.f32 %v35, %v124
    %v130 = vmul.f32 %v36, %v120
    %134 = vst [vmem:[#allocation1] ss:$2 sm:$0xff] %v128
    %s135 = scalar_lea.vmem [#allocation1], 16
    %136 = vst [vmem:[%s135] ss:$2 sm:$0xff] %v129
    %s137 = scalar_lea.vmem [#allocation1], 32
    %138 = vst [vmem:[%s137] ss:$2 sm:$0xff] %v130
    %v139 = vld.sshfl [vmem:[#allocation1] sm:$0xff pattern:$0x75316420]
    %v140 = vld.sshfl [vmem:[#allocation1 + $0x8] sm:$0xff pattern:$0x75316420]
    %v141 = vld.sshfl [vmem:[#allocation1 + $0x10] sm:$0xff pattern:$0x75316420]
    %v142 = vld.sshfl [vmem:[#allocation1 + $0x18] sm:$0xff pattern:$0x75316420]
    %v143 = vld.sshfl [vmem:[#allocation1 + $0x20] sm:$0xff pattern:$0x75316420]
    %v149 = vpack.c.bf16 %v139, %v139
    %v150 = vpack.c.bf16 %v140, %v140
    %v151 = vpack.c.bf16 %v141, %v141
    %v152 = vpack.c.bf16 %v142, %v142
    %v153 = vpack.c.bf16 %v143, %v143
    %s154 = scalar_lea.vmem %s2, 8
    %v155 = vld [vmem:[%s154] sm:$0xf]
    %v156 = vld [vmem:[%s154 + $0x4] sm:$0xf]
    %v159 = vunpack.c.l.b16 %v155
    %v160 = vunpack.c.l.b16 %v156
    %v161 = vpack.c.b16 %v160, %v159
    %167 = vrot.lane.b32.xlu0 %v149, 80
    %v168 = vpop.permute.xlu0 %167
    %169 = vrot.lane.b32.xlu0 %v150, 80
    %v170 = vpop.permute.xlu0 %169
    %171 = vrot.lane.b32.xlu0 %v151, 80
    %v172 = vpop.permute.xlu0 %171
    %173 = vrot.lane.b32.xlu0 %v152, 80
    %v174 = vpop.permute.xlu0 %173
    %175 = vrot.lane.b32.xlu0 %v153, 80
    %v176 = vpop.permute.xlu0 %175
    %vm177 = vcmask 654336
    %v178 = vsel %vm177, %v168, %v170
    %v179 = vsel %vm177, %v170, %v172
    %v180 = vsel %vm177, %v172, %v174
    %v181 = vsel %vm177, %v174, %v176
    %vm182 = vcmask 31744
    %v184 = vsel %vm182, %v161, 0
    %vm186 = vcmask 1041408
    %v188 = vsel %vm186, %v178, 0
    %v191 = vsel %vm186, %v179, 0
    %v194 = vsel %vm186, %v180, 0
    %v197 = vsel %vm186, %v181, 0
    %199 = vmatpush.bf16.msra.mxu0 0
    %200 = vmatpush.bf16.msra.mxu0 0
    %201 = vmatpush.bf16.msra.mxu0 0
    %202 = vmatpush.bf16.msra.mxu0 0
    %203 = vmatpush.bf16.msra.mxu0 0
    %204 = vmatpush.bf16.msra.mxu0 0
    %205 = vmatpush.bf16.msra.mxu0 0
    %206 = vmatpush.bf16.msra.mxu0 %v188
    %207 = vmatmul.bf16.gmra.mxu0 %v184
    %v208 = vpop.f32.mrf.mxu0
    %v209 = vadd.f32 0.0, %v208
    %v210 = vpop.f32.mrf.mxu0
    %v211 = vadd.f32 0.0, %v210
    %212 = vdwg.mxu0
    %213 = vmatpush.bf16.msra.mxu0 0
    %214 = vmatpush.bf16.msra.mxu0 0
    %215 = vmatpush.bf16.msra.mxu0 0
    %216 = vmatpush.bf16.msra.mxu0 0
    %217 = vmatpush.bf16.msra.mxu0 0
    %218 = vmatpush.bf16.msra.mxu0 0
    %219 = vmatpush.bf16.msra.mxu0 0
    %220 = vmatpush.bf16.msra.mxu0 %v191
    %221 = vmatmul.bf16.gmra.mxu0 %v184
    %v222 = vpop.f32.mrf.mxu0
    %v223 = vadd.f32 0.0, %v222
    %v224 = vpop.f32.mrf.mxu0
    %v225 = vadd.f32 0.0, %v224
    %226 = vdwg.mxu0
    %227 = vmatpush.bf16.msra.mxu0 0
    %228 = vmatpush.bf16.msra.mxu0 0
    %229 = vmatpush.bf16.msra.mxu0 0
    %230 = vmatpush.bf16.msra.mxu0 0
    %231 = vmatpush.bf16.msra.mxu0 0
    %232 = vmatpush.bf16.msra.mxu0 0
    %233 = vmatpush.bf16.msra.mxu0 0
    %234 = vmatpush.bf16.msra.mxu0 %v194
    %235 = vmatmul.bf16.gmra.mxu0 %v184
    %v236 = vpop.f32.mrf.mxu0
    %v237 = vadd.f32 0.0, %v236
    %v238 = vpop.f32.mrf.mxu0
    %v239 = vadd.f32 0.0, %v238
    %240 = vdwg.mxu0
    %241 = vmatpush.bf16.msra.mxu0 0
    %242 = vmatpush.bf16.msra.mxu0 0
    %243 = vmatpush.bf16.msra.mxu0 0
    %244 = vmatpush.bf16.msra.mxu0 0
    %245 = vmatpush.bf16.msra.mxu0 0
    %246 = vmatpush.bf16.msra.mxu0 0
    %247 = vmatpush.bf16.msra.mxu0 0
    %248 = vmatpush.bf16.msra.mxu0 %v197
    %249 = vmatmul.bf16.gmra.mxu0 %v184
    %v250 = vpop.f32.mrf.mxu0
    %v251 = vadd.f32 0.0, %v250
    %v252 = vpop.f32.mrf.mxu0
    %v253 = vadd.f32 0.0, %v252
    %254 = vdwg.mxu0
    %v257 = vunpack.c.l.b16 %v101
    %v258 = vunpack.c.l.b16 %v102
    %v259 = vpack.c.b16 %v258, %v257
    %265 = vrot.lane.b32.xlu0 %v96, 81
    %v266 = vpop.permute.xlu0 %265
    %267 = vrot.lane.b32.xlu0 %v97, 81
    %v268 = vpop.permute.xlu0 %267
    %269 = vrot.lane.b32.xlu0 %v98, 81
    %v270 = vpop.permute.xlu0 %269
    %271 = vrot.lane.b32.xlu0 %v99, 81
    %v272 = vpop.permute.xlu0 %271
    %273 = vrot.lane.b32.xlu0 %v100, 81
    %v274 = vpop.permute.xlu0 %273
    %vm275 = vcmask 662528
    %v276 = vsel %vm275, %v266, %v268
    %v277 = vsel %vm275, %v268, %v270
    %v278 = vsel %vm275, %v270, %v272
    %v279 = vsel %vm275, %v272, %v274
    %v281 = vsel %vm182, %v259, 0
    %v284 = vsel %vm186, %v276, 0
    %v287 = vsel %vm186, %v277, 0
    %v290 = vsel %vm186, %v278, 0
    %v293 = vsel %vm186, %v279, 0
    %295 = vmatpush.bf16.msra.mxu0 0
    %296 = vmatpush.bf16.msra.mxu0 0
    %297 = vmatpush.bf16.msra.mxu0 0
    %298 = vmatpush.bf16.msra.mxu0 0
    %299 = vmatpush.bf16.msra.mxu0 0
    %300 = vmatpush.bf16.msra.mxu0 0
    %301 = vmatpush.bf16.msra.mxu0 0
    %302 = vmatpush.bf16.msra.mxu0 %v284
    %303 = vmatmul.bf16.gmra.mxu0 %v281
    %v304 = vpop.f32.mrf.mxu0
    %v305 = vadd.f32 %v209, %v304
    %v306 = vpop.f32.mrf.mxu0
    %v307 = vadd.f32 %v211, %v306
    %308 = vdwg.mxu0
    %309 = vmatpush.bf16.msra.mxu0 0
    %310 = vmatpush.bf16.msra.mxu0 0
    %311 = vmatpush.bf16.msra.mxu0 0
    %312 = vmatpush.bf16.msra.mxu0 0
    %313 = vmatpush.bf16.msra.mxu0 0
    %314 = vmatpush.bf16.msra.mxu0 0
    %315 = vmatpush.bf16.msra.mxu0 0
    %316 = vmatpush.bf16.msra.mxu0 %v287
    %317 = vmatmul.bf16.gmra.mxu0 %v281
    %v318 = vpop.f32.mrf.mxu0
    %v319 = vadd.f32 %v223, %v318
    %v320 = vpop.f32.mrf.mxu0
    %v321 = vadd.f32 %v225, %v320
    %322 = vdwg.mxu0
    %323 = vmatpush.bf16.msra.mxu0 0
    %324 = vmatpush.bf16.msra.mxu0 0
    %325 = vmatpush.bf16.msra.mxu0 0
    %326 = vmatpush.bf16.msra.mxu0 0
    %327 = vmatpush.bf16.msra.mxu0 0
    %328 = vmatpush.bf16.msra.mxu0 0
    %329 = vmatpush.bf16.msra.mxu0 0
    %330 = vmatpush.bf16.msra.mxu0 %v290
    %331 = vmatmul.bf16.gmra.mxu0 %v281
    %v332 = vpop.f32.mrf.mxu0
    %v333 = vadd.f32 %v237, %v332
    %v334 = vpop.f32.mrf.mxu0
    %v335 = vadd.f32 %v239, %v334
    %336 = vdwg.mxu0
    %337 = vmatpush.bf16.msra.mxu0 0
    %338 = vmatpush.bf16.msra.mxu0 0
    %339 = vmatpush.bf16.msra.mxu0 0
    %340 = vmatpush.bf16.msra.mxu0 0
    %341 = vmatpush.bf16.msra.mxu0 0
    %342 = vmatpush.bf16.msra.mxu0 0
    %343 = vmatpush.bf16.msra.mxu0 0
    %344 = vmatpush.bf16.msra.mxu0 %v293
    %345 = vmatmul.bf16.gmra.mxu0 %v281
    %v346 = vpop.f32.mrf.mxu0
    %v347 = vadd.f32 %v251, %v346
    %v348 = vpop.f32.mrf.mxu0
    %v349 = vadd.f32 %v253, %v348
    %350 = vdwg.mxu0
    %v351 = vperm.slane %v37, 2
    %v352 = vperm.slane %v38, 2
    %v353 = vperm.slane %v39, 2
    %v354 = vperm.slane %v40, 2
    %v359 = vrot.slane %v352, 4
    %v360 = vrot.slane %v354, 4
    %v361 = vsel %vm59, %v351, %v359
    %v362 = vsel %vm59, %v353, %v360
    %363 = vrot.lane.b32.xlu0 %v361, 49
    %v364 = vpop.permute.xlu0 %363
    %365 = vrot.lane.b32.xlu0 %v362, 49
    %v366 = vpop.permute.xlu0 %365
    %v367 = vrot.slane %v364, 4
    %v368 = vrot.slane %v366, 4
    %vm369 = vcmask 400384
    %v370 = vsel %vm369, %v367, %v364
    %v371 = vsel %vm59, %v367, %v368
    %v372 = vsel %vm369, %v371, %v366
    %v376 = vmul.f32 %v34, %v370
    %v377 = vmul.f32 %v35, %v372
    %v378 = vmul.f32 %v36, %v368
    %382 = vst [vmem:[#allocation1] ss:$2 sm:$0xff] %v376
    %s383 = scalar_lea.vmem [#allocation1], 16
    %384 = vst [vmem:[%s383] ss:$2 sm:$0xff] %v377
    %s385 = scalar_lea.vmem [#allocation1], 32
    %386 = vst [vmem:[%s385] ss:$2 sm:$0xff] %v378
    %v387 = vld.sshfl [vmem:[#allocation1] sm:$0xff pattern:$0x75316420]
    %v388 = vld.sshfl [vmem:[#allocation1 + $0x8] sm:$0xff pattern:$0x75316420]
    %v389 = vld.sshfl [vmem:[#allocation1 + $0x10] sm:$0xff pattern:$0x75316420]
    %v390 = vld.sshfl [vmem:[#allocation1 + $0x18] sm:$0xff pattern:$0x75316420]
    %v391 = vld.sshfl [vmem:[#allocation1 + $0x20] sm:$0xff pattern:$0x75316420]
    %v397 = vpack.c.bf16 %v387, %v387
    %v398 = vpack.c.bf16 %v388, %v388
    %v399 = vpack.c.bf16 %v389, %v389
    %v400 = vpack.c.bf16 %v390, %v390
    %v401 = vpack.c.bf16 %v391, %v391
    %s402 = scalar_lea.vmem %s2, 16
    %v403 = vld [vmem:[%s402] sm:$0xf]
    %v404 = vld [vmem:[%s402 + $0x4] sm:$0xf]
    %v407 = vunpack.c.l.b16 %v403
    %v408 = vunpack.c.l.b16 %v404
    %v409 = vpack.c.b16 %v408, %v407
    %415 = vrot.lane.b32.xlu0 %v397, 79
    %v416 = vpop.permute.xlu0 %415
    %417 = vrot.lane.b32.xlu0 %v398, 79
    %v418 = vpop.permute.xlu0 %417
    %419 = vrot.lane.b32.xlu0 %v399, 79
    %v420 = vpop.permute.xlu0 %419
    %421 = vrot.lane.b32.xlu0 %v400, 79
    %v422 = vpop.permute.xlu0 %421
    %423 = vrot.lane.b32.xlu0 %v401, 79
    %v424 = vpop.permute.xlu0 %423
    %vm425 = vcmask 646144
    %v426 = vsel %vm425, %v416, %v418
    %v427 = vsel %vm425, %v418, %v420
    %v428 = vsel %vm425, %v420, %v422
    %v429 = vsel %vm425, %v422, %v424
    %v431 = vsel %vm182, %v409, 0
    %v434 = vsel %vm186, %v426, 0
    %v437 = vsel %vm186, %v427, 0
    %v440 = vsel %vm186, %v428, 0
    %v443 = vsel %vm186, %v429, 0
    %445 = vmatpush.bf16.msra.mxu0 0
    %446 = vmatpush.bf16.msra.mxu0 0
    %447 = vmatpush.bf16.msra.mxu0 0
    %448 = vmatpush.bf16.msra.mxu0 0
    %449 = vmatpush.bf16.msra.mxu0 0
    %450 = vmatpush.bf16.msra.mxu0 0
    %451 = vmatpush.bf16.msra.mxu0 0
    %452 = vmatpush.bf16.msra.mxu0 %v434
    %453 = vmatmul.bf16.gmra.mxu0 %v431
    %v454 = vpop.f32.mrf.mxu0
    %v455 = vadd.f32 0.0, %v454
    %v456 = vpop.f32.mrf.mxu0
    %v457 = vadd.f32 0.0, %v456
    %458 = vdwg.mxu0
    %459 = vmatpush.bf16.msra.mxu0 0
    %460 = vmatpush.bf16.msra.mxu0 0
    %461 = vmatpush.bf16.msra.mxu0 0
    %462 = vmatpush.bf16.msra.mxu0 0
    %463 = vmatpush.bf16.msra.mxu0 0
    %464 = vmatpush.bf16.msra.mxu0 0
    %465 = vmatpush.bf16.msra.mxu0 0
    %466 = vmatpush.bf16.msra.mxu0 %v437
    %467 = vmatmul.bf16.gmra.mxu0 %v431
    %v468 = vpop.f32.mrf.mxu0
    %v469 = vadd.f32 0.0, %v468
    %v470 = vpop.f32.mrf.mxu0
    %v471 = vadd.f32 0.0, %v470
    %472 = vdwg.mxu0
    %473 = vmatpush.bf16.msra.mxu0 0
    %474 = vmatpush.bf16.msra.mxu0 0
    %475 = vmatpush.bf16.msra.mxu0 0
    %476 = vmatpush.bf16.msra.mxu0 0
    %477 = vmatpush.bf16.msra.mxu0 0
    %478 = vmatpush.bf16.msra.mxu0 0
    %479 = vmatpush.bf16.msra.mxu0 0
    %480 = vmatpush.bf16.msra.mxu0 %v440
    %481 = vmatmul.bf16.gmra.mxu0 %v431
    %v482 = vpop.f32.mrf.mxu0
    %v483 = vadd.f32 0.0, %v482
    %v484 = vpop.f32.mrf.mxu0
    %v485 = vadd.f32 0.0, %v484
    %486 = vdwg.mxu0
    %487 = vmatpush.bf16.msra.mxu0 0
    %488 = vmatpush.bf16.msra.mxu0 0
    %489 = vmatpush.bf16.msra.mxu0 0
    %490 = vmatpush.bf16.msra.mxu0 0
    %491 = vmatpush.bf16.msra.mxu0 0
    %492 = vmatpush.bf16.msra.mxu0 0
    %493 = vmatpush.bf16.msra.mxu0 0
    %494 = vmatpush.bf16.msra.mxu0 %v443
    %495 = vmatmul.bf16.gmra.mxu0 %v431
    %v496 = vpop.f32.mrf.mxu0
    %v497 = vadd.f32 0.0, %v496
    %v498 = vpop.f32.mrf.mxu0
    %v499 = vadd.f32 0.0, %v498
    %500 = vdwg.mxu0
    %v501 = vadd.f32 %v305, %v455
    %v502 = vadd.f32 %v319, %v469
    %v503 = vadd.f32 %v333, %v483
    %v504 = vadd.f32 %v347, %v497
    %v505 = vadd.f32 %v307, %v457
    %v506 = vadd.f32 %v321, %v471
    %v507 = vadd.f32 %v335, %v485
    %v508 = vadd.f32 %v349, %v499
    %v509 = vperm.slane %v37, 3
    %v510 = vperm.slane %v38, 3
    %v511 = vperm.slane %v39, 3
    %v512 = vperm.slane %v40, 3
    %v517 = vrot.slane %v510, 4
    %v518 = vrot.slane %v512, 4
    %v519 = vsel %vm59, %v509, %v517
    %v520 = vsel %vm59, %v511, %v518
    %521 = vrot.lane.b32.xlu0 %v519, 63
    %v522 = vpop.permute.xlu0 %521
    %523 = vrot.lane.b32.xlu0 %v520, 63
    %v524 = vpop.permute.xlu0 %523
    %v525 = vrot.slane %v522, 4
    %v526 = vrot.slane %v524, 4
    %vm527 = vcmask 515072
    %v528 = vsel %vm527, %v525, %v522
    %v529 = vsel %vm59, %v525, %v526
    %v530 = vsel %vm527, %v529, %v524
    %v534 = vmul.f32 %v34, %v528
    %v535 = vmul.f32 %v35, %v530
    %v536 = vmul.f32 %v36, %v526
    %540 = vst [vmem:[#allocation1] ss:$2 sm:$0xff] %v534
    %s541 = scalar_lea.vmem [#allocation1], 16
    %542 = vst [vmem:[%s541] ss:$2 sm:$0xff] %v535
    %s543 = scalar_lea.vmem [#allocation1], 32
    %544 = vst [vmem:[%s543] ss:$2 sm:$0xff] %v536
    %v545 = vld.sshfl [vmem:[#allocation1] sm:$0xff pattern:$0x75316420]
    %v546 = vld.sshfl [vmem:[#allocation1 + $0x8] sm:$0xff pattern:$0x75316420]
    %v547 = vld.sshfl [vmem:[#allocation1 + $0x10] sm:$0xff pattern:$0x75316420]
    %v548 = vld.sshfl [vmem:[#allocation1 + $0x18] sm:$0xff pattern:$0x75316420]
    %v549 = vld.sshfl [vmem:[#allocation1 + $0x20] sm:$0xff pattern:$0x75316420]
    %v555 = vpack.c.bf16 %v545, %v545
    %v556 = vpack.c.bf16 %v546, %v546
    %v557 = vpack.c.bf16 %v547, %v547
    %v558 = vpack.c.bf16 %v548, %v548
    %v559 = vpack.c.bf16 %v549, %v549
    %s560 = scalar_lea.vmem %s2, 24
    %v561 = vld [vmem:[%s560] sm:$0xf]
    %v562 = vld [vmem:[%s560 + $0x4] sm:$0xf]
    %v565 = vunpack.c.l.b16 %v561
    %v566 = vunpack.c.l.b16 %v562
    %v567 = vpack.c.b16 %v566, %v565
    %573 = vrot.lane.b32.xlu0 %v555, 65
    %v574 = vpop.permute.xlu0 %573
    %575 = vrot.lane.b32.xlu0 %v556, 65
    %v576 = vpop.permute.xlu0 %575
    %577 = vrot.lane.b32.xlu0 %v557, 65
    %v578 = vpop.permute.xlu0 %577
    %579 = vrot.lane.b32.xlu0 %v558, 65
    %v580 = vpop.permute.xlu0 %579
    %581 = vrot.lane.b32.xlu0 %v559, 65
    %v582 = vpop.permute.xlu0 %581
    %vm583 = vcmask 531456
    %v584 = vsel %vm583, %v574, %v576
    %v585 = vsel %vm583, %v576, %v578
    %v586 = vsel %vm583, %v578, %v580
    %v587 = vsel %vm583, %v580, %v582
    %v589 = vsel %vm182, %v567, 0
    %v592 = vsel %vm186, %v584, 0
    %v595 = vsel %vm186, %v585, 0
    %v598 = vsel %vm186, %v586, 0
    %v601 = vsel %vm186, %v587, 0
    %603 = vmatpush.bf16.msra.mxu0 0
    %604 = vmatpush.bf16.msra.mxu0 0
    %605 = vmatpush.bf16.msra.mxu0 0
    %606 = vmatpush.bf16.msra.mxu0 0
    %607 = vmatpush.bf16.msra.mxu0 0
    %608 = vmatpush.bf16.msra.mxu0 0
    %609 = vmatpush.bf16.msra.mxu0 0
    %610 = vmatpush.bf16.msra.mxu0 %v592
    %611 = vmatmul.bf16.gmra.mxu0 %v589
    %v612 = vpop.f32.mrf.mxu0
    %v613 = vadd.f32 0.0, %v612
    %v614 = vpop.f32.mrf.mxu0
    %v615 = vadd.f32 0.0, %v614
    %616 = vdwg.mxu0
    %617 = vmatpush.bf16.msra.mxu0 0
    %618 = vmatpush.bf16.msra.mxu0 0
    %619 = vmatpush.bf16.msra.mxu0 0
    %620 = vmatpush.bf16.msra.mxu0 0
    %621 = vmatpush.bf16.msra.mxu0 0
    %622 = vmatpush.bf16.msra.mxu0 0
    %623 = vmatpush.bf16.msra.mxu0 0
    %624 = vmatpush.bf16.msra.mxu0 %v595
    %625 = vmatmul.bf16.gmra.mxu0 %v589
    %v626 = vpop.f32.mrf.mxu0
    %v627 = vadd.f32 0.0, %v626
    %v628 = vpop.f32.mrf.mxu0
    %v629 = vadd.f32 0.0, %v628
    %630 = vdwg.mxu0
    %631 = vmatpush.bf16.msra.mxu0 0
    %632 = vmatpush.bf16.msra.mxu0 0
    %633 = vmatpush.bf16.msra.mxu0 0
    %634 = vmatpush.bf16.msra.mxu0 0
    %635 = vmatpush.bf16.msra.mxu0 0
    %636 = vmatpush.bf16.msra.mxu0 0
    %637 = vmatpush.bf16.msra.mxu0 0
    %638 = vmatpush.bf16.msra.mxu0 %v598
    %639 = vmatmul.bf16.gmra.mxu0 %v589
    %v640 = vpop.f32.mrf.mxu0
    %v641 = vadd.f32 0.0, %v640
    %v642 = vpop.f32.mrf.mxu0
    %v643 = vadd.f32 0.0, %v642
    %644 = vdwg.mxu0
    %645 = vmatpush.bf16.msra.mxu0 0
    %646 = vmatpush.bf16.msra.mxu0 0
    %647 = vmatpush.bf16.msra.mxu0 0
    %648 = vmatpush.bf16.msra.mxu0 0
    %649 = vmatpush.bf16.msra.mxu0 0
    %650 = vmatpush.bf16.msra.mxu0 0
    %651 = vmatpush.bf16.msra.mxu0 0
    %652 = vmatpush.bf16.msra.mxu0 %v601
    %653 = vmatmul.bf16.gmra.mxu0 %v589
    %v654 = vpop.f32.mrf.mxu0
    %v655 = vadd.f32 0.0, %v654
    %v656 = vpop.f32.mrf.mxu0
    %v657 = vadd.f32 0.0, %v656
    %658 = vdwg.mxu0
    %v659 = vadd.f32 %v501, %v613
    %v660 = vadd.f32 %v502, %v627
    %v661 = vadd.f32 %v503, %v641
    %v662 = vadd.f32 %v504, %v655
    %v663 = vadd.f32 %v505, %v615
    %v664 = vadd.f32 %v506, %v629
    %v665 = vadd.f32 %v507, %v643
    %v666 = vadd.f32 %v508, %v657
    %v667 = vperm.slane %v37, 4
    %v668 = vperm.slane %v38, 4
    %v669 = vperm.slane %v39, 4
    %v670 = vperm.slane %v40, 4
    %v675 = vrot.slane %v668, 4
    %v676 = vrot.slane %v670, 4
    %v677 = vsel %vm59, %v667, %v675
    %v678 = vsel %vm59, %v669, %v676
    %679 = vrot.lane.b32.xlu0 %v677, 64
    %v680 = vpop.permute.xlu0 %679
    %681 = vrot.lane.b32.xlu0 %v678, 64
    %v682 = vpop.permute.xlu0 %681
    %v683 = vrot.slane %v680, 4
    %v684 = vrot.slane %v682, 4
    %vm685 = vcmask 523264
    %v686 = vsel %vm685, %v683, %v680
    %v687 = vsel %vm59, %v683, %v684
    %v688 = vsel %vm685, %v687, %v682
    %v692 = vmul.f32 %v34, %v686
    %v693 = vmul.f32 %v35, %v688
    %v694 = vmul.f32 %v36, %v684
    %698 = vst [vmem:[#allocation1] ss:$2 sm:$0xff] %v692
    %s699 = scalar_lea.vmem [#allocation1], 16
    %700 = vst [vmem:[%s699] ss:$2 sm:$0xff] %v693
    %s701 = scalar_lea.vmem [#allocation1], 32
    %702 = vst [vmem:[%s701] ss:$2 sm:$0xff] %v694
    %v703 = vld.sshfl [vmem:[#allocation1] sm:$0xff pattern:$0x75316420]
    %v704 = vld.sshfl [vmem:[#allocation1 + $0x8] sm:$0xff pattern:$0x75316420]
    %v705 = vld.sshfl [vmem:[#allocation1 + $0x10] sm:$0xff pattern:$0x75316420]
    %v706 = vld.sshfl [vmem:[#allocation1 + $0x18] sm:$0xff pattern:$0x75316420]
    %v707 = vld.sshfl [vmem:[#allocation1 + $0x20] sm:$0xff pattern:$0x75316420]
    %v713 = vpack.c.bf16 %v703, %v703
    %v714 = vpack.c.bf16 %v704, %v704
    %v715 = vpack.c.bf16 %v705, %v705
    %v716 = vpack.c.bf16 %v706, %v706
    %v717 = vpack.c.bf16 %v707, %v707
    %s718 = scalar_lea.vmem %s2, 32
    %v719 = vld [vmem:[%s718] sm:$0xf]
    %v720 = vld [vmem:[%s718 + $0x4] sm:$0xf]
    %v723 = vunpack.c.l.b16 %v719
    %v724 = vunpack.c.l.b16 %v720
    %v725 = vpack.c.b16 %v724, %v723
    %731 = vrot.lane.b32.xlu0 %v713, 64
    %v732 = vpop.permute.xlu0 %731
    %733 = vrot.lane.b32.xlu0 %v714, 64
    %v734 = vpop.permute.xlu0 %733
    %735 = vrot.lane.b32.xlu0 %v715, 64
    %v736 = vpop.permute.xlu0 %735
    %737 = vrot.lane.b32.xlu0 %v716, 64
    %v738 = vpop.permute.xlu0 %737
    %739 = vrot.lane.b32.xlu0 %v717, 64
    %v740 = vpop.permute.xlu0 %739
    %vm741 = vcmask 523264
    %v742 = vsel %vm741, %v732, %v734
    %v743 = vsel %vm741, %v734, %v736
    %v744 = vsel %vm741, %v736, %v738
    %v745 = vsel %vm741, %v738, %v740
    %v747 = vsel %vm182, %v725, 0
    %v750 = vsel %vm186, %v742, 0
    %v753 = vsel %vm186, %v743, 0
    %v756 = vsel %vm186, %v744, 0
    %v759 = vsel %vm186, %v745, 0
    %761 = vmatpush.bf16.msra.mxu0 0
    %762 = vmatpush.bf16.msra.mxu0 0
    %763 = vmatpush.bf16.msra.mxu0 0
    %764 = vmatpush.bf16.msra.mxu0 0
    %765 = vmatpush.bf16.msra.mxu0 0
    %766 = vmatpush.bf16.msra.mxu0 0
    %767 = vmatpush.bf16.msra.mxu0 0
    %768 = vmatpush.bf16.msra.mxu0 %v750
    %769 = vmatmul.bf16.gmra.mxu0 %v747
    %v770 = vpop.f32.mrf.mxu0
    %v771 = vadd.f32 0.0, %v770
    %v772 = vpop.f32.mrf.mxu0
    %v773 = vadd.f32 0.0, %v772
    %774 = vdwg.mxu0
    %775 = vmatpush.bf16.msra.mxu0 0
    %776 = vmatpush.bf16.msra.mxu0 0
    %777 = vmatpush.bf16.msra.mxu0 0
    %778 = vmatpush.bf16.msra.mxu0 0
    %779 = vmatpush.bf16.msra.mxu0 0
    %780 = vmatpush.bf16.msra.mxu0 0
    %781 = vmatpush.bf16.msra.mxu0 0
    %782 = vmatpush.bf16.msra.mxu0 %v753
    %783 = vmatmul.bf16.gmra.mxu0 %v747
    %v784 = vpop.f32.mrf.mxu0
    %v785 = vadd.f32 0.0, %v784
    %v786 = vpop.f32.mrf.mxu0
    %v787 = vadd.f32 0.0, %v786
    %788 = vdwg.mxu0
    %789 = vmatpush.bf16.msra.mxu0 0
    %790 = vmatpush.bf16.msra.mxu0 0
    %791 = vmatpush.bf16.msra.mxu0 0
    %792 = vmatpush.bf16.msra.mxu0 0
    %793 = vmatpush.bf16.msra.mxu0 0
    %794 = vmatpush.bf16.msra.mxu0 0
    %795 = vmatpush.bf16.msra.mxu0 0
    %796 = vmatpush.bf16.msra.mxu0 %v756
    %797 = vmatmul.bf16.gmra.mxu0 %v747
    %v798 = vpop.f32.mrf.mxu0
    %v799 = vadd.f32 0.0, %v798
    %v800 = vpop.f32.mrf.mxu0
    %v801 = vadd.f32 0.0, %v800
    %802 = vdwg.mxu0
    %803 = vmatpush.bf16.msra.mxu0 0
    %804 = vmatpush.bf16.msra.mxu0 0
    %805 = vmatpush.bf16.msra.mxu0 0
    %806 = vmatpush.bf16.msra.mxu0 0
    %807 = vmatpush.bf16.msra.mxu0 0
    %808 = vmatpush.bf16.msra.mxu0 0
    %809 = vmatpush.bf16.msra.mxu0 0
    %810 = vmatpush.bf16.msra.mxu0 %v759
    %811 = vmatmul.bf16.gmra.mxu0 %v747
    %v812 = vpop.f32.mrf.mxu0
    %v813 = vadd.f32 0.0, %v812
    %v814 = vpop.f32.mrf.mxu0
    %v815 = vadd.f32 0.0, %v814
    %816 = vdwg.mxu0
    %v817 = vadd.f32 %v659, %v771
    %v818 = vadd.f32 %v660, %v785
    %v819 = vadd.f32 %v661, %v799
    %v820 = vadd.f32 %v662, %v813
    %v821 = vadd.f32 %v663, %v773
    %v822 = vadd.f32 %v664, %v787
    %v823 = vadd.f32 %v665, %v801
    %v824 = vadd.f32 %v666, %v815
    %v825 = vperm.slane %v37, 5
    %v826 = vperm.slane %v38, 5
    %v827 = vperm.slane %v39, 5
    %v828 = vperm.slane %v40, 5
    %v833 = vrot.slane %v826, 4
    %v834 = vrot.slane %v828, 4
    %v835 = vsel %vm59, %v825, %v833
    %v836 = vsel %vm59, %v827, %v834
    %837 = vrot.lane.b32.xlu0 %v835, 65
    %v838 = vpop.permute.xlu0 %837
    %839 = vrot.lane.b32.xlu0 %v836, 65
    %v840 = vpop.permute.xlu0 %839
    %v841 = vrot.slane %v838, 4
    %v842 = vrot.slane %v840, 4
    %vm843 = vcmask 531456
    %v844 = vsel %vm843, %v841, %v838
    %v845 = vsel %vm59, %v841, %v842
    %v846 = vsel %vm843, %v845, %v840
    %v850 = vmul.f32 %v34, %v844
    %v851 = vmul.f32 %v35, %v846
    %v852 = vmul.f32 %v36, %v842
    %856 = vst [vmem:[#allocation1] ss:$2 sm:$0xff] %v850
    %s857 = scalar_lea.vmem [#allocation1], 16
    %858 = vst [vmem:[%s857] ss:$2 sm:$0xff] %v851
    %s859 = scalar_lea.vmem [#allocation1], 32
    %860 = vst [vmem:[%s859] ss:$2 sm:$0xff] %v852
    %v861 = vld.sshfl [vmem:[#allocation1] sm:$0xff pattern:$0x75316420]
    %v862 = vld.sshfl [vmem:[#allocation1 + $0x8] sm:$0xff pattern:$0x75316420]
    %v863 = vld.sshfl [vmem:[#allocation1 + $0x10] sm:$0xff pattern:$0x75316420]
    %v864 = vld.sshfl [vmem:[#allocation1 + $0x18] sm:$0xff pattern:$0x75316420]
    %v865 = vld.sshfl [vmem:[#allocation1 + $0x20] sm:$0xff pattern:$0x75316420]
    %v871 = vpack.c.bf16 %v861, %v861
    %v872 = vpack.c.bf16 %v862, %v862
    %v873 = vpack.c.bf16 %v863, %v863
    %v874 = vpack.c.bf16 %v864, %v864
    %v875 = vpack.c.bf16 %v865, %v865
    %s876 = scalar_lea.vmem %s2, 40
    %v877 = vld [vmem:[%s876] sm:$0xf]
    %v878 = vld [vmem:[%s876 + $0x4] sm:$0xf]
    %v881 = vunpack.c.l.b16 %v877
    %v882 = vunpack.c.l.b16 %v878
    %v883 = vpack.c.b16 %v882, %v881
    %889 = vrot.lane.b32.xlu0 %v871, 63
    %v890 = vpop.permute.xlu0 %889
    %891 = vrot.lane.b32.xlu0 %v872, 63
    %v892 = vpop.permute.xlu0 %891
    %893 = vrot.lane.b32.xlu0 %v873, 63
    %v894 = vpop.permute.xlu0 %893
    %895 = vrot.lane.b32.xlu0 %v874, 63
    %v896 = vpop.permute.xlu0 %895
    %897 = vrot.lane.b32.xlu0 %v875, 63
    %v898 = vpop.permute.xlu0 %897
    %vm899 = vcmask 515072
    %v900 = vsel %vm899, %v890, %v892
    %v901 = vsel %vm899, %v892, %v894
    %v902 = vsel %vm899, %v894, %v896
    %v903 = vsel %vm899, %v896, %v898
    %v905 = vsel %vm182, %v883, 0
    %v908 = vsel %vm186, %v900, 0
    %v911 = vsel %vm186, %v901, 0
    %v914 = vsel %vm186, %v902, 0
    %v917 = vsel %vm186, %v903, 0
    %919 = vmatpush.bf16.msra.mxu0 0
    %920 = vmatpush.bf16.msra.mxu0 0
    %921 = vmatpush.bf16.msra.mxu0 0
    %922 = vmatpush.bf16.msra.mxu0 0
    %923 = vmatpush.bf16.msra.mxu0 0
    %924 = vmatpush.bf16.msra.mxu0 0
    %925 = vmatpush.bf16.msra.mxu0 0
    %926 = vmatpush.bf16.msra.mxu0 %v908
    %927 = vmatmul.bf16.gmra.mxu0 %v905
    %v928 = vpop.f32.mrf.mxu0
    %v929 = vadd.f32 0.0, %v928
    %v930 = vpop.f32.mrf.mxu0
    %v931 = vadd.f32 0.0, %v930
    %932 = vdwg.mxu0
    %933 = vmatpush.bf16.msra.mxu0 0
    %934 = vmatpush.bf16.msra.mxu0 0
    %935 = vmatpush.bf16.msra.mxu0 0
    %936 = vmatpush.bf16.msra.mxu0 0
    %937 = vmatpush.bf16.msra.mxu0 0
    %938 = vmatpush.bf16.msra.mxu0 0
    %939 = vmatpush.bf16.msra.mxu0 0
    %940 = vmatpush.bf16.msra.mxu0 %v911
    %941 = vmatmul.bf16.gmra.mxu0 %v905
    %v942 = vpop.f32.mrf.mxu0
    %v943 = vadd.f32 0.0, %v942
    %v944 = vpop.f32.mrf.mxu0
    %v945 = vadd.f32 0.0, %v944
    %946 = vdwg.mxu0
    %947 = vmatpush.bf16.msra.mxu0 0
    %948 = vmatpush.bf16.msra.mxu0 0
    %949 = vmatpush.bf16.msra.mxu0 0
    %950 = vmatpush.bf16.msra.mxu0 0
    %951 = vmatpush.bf16.msra.mxu0 0
    %952 = vmatpush.bf16.msra.mxu0 0
    %953 = vmatpush.bf16.msra.mxu0 0
    %954 = vmatpush.bf16.msra.mxu0 %v914
    %955 = vmatmul.bf16.gmra.mxu0 %v905
    %v956 = vpop.f32.mrf.mxu0
    %v957 = vadd.f32 0.0, %v956
    %v958 = vpop.f32.mrf.mxu0
    %v959 = vadd.f32 0.0, %v958
    %960 = vdwg.mxu0
    %961 = vmatpush.bf16.msra.mxu0 0
    %962 = vmatpush.bf16.msra.mxu0 0
    %963 = vmatpush.bf16.msra.mxu0 0
    %964 = vmatpush.bf16.msra.mxu0 0
    %965 = vmatpush.bf16.msra.mxu0 0
    %966 = vmatpush.bf16.msra.mxu0 0
    %967 = vmatpush.bf16.msra.mxu0 0
    %968 = vmatpush.bf16.msra.mxu0 %v917
    %969 = vmatmul.bf16.gmra.mxu0 %v905
    %v970 = vpop.f32.mrf.mxu0
    %v971 = vadd.f32 0.0, %v970
    %v972 = vpop.f32.mrf.mxu0
    %v973 = vadd.f32 0.0, %v972
    %974 = vdwg.mxu0
    %v975 = vadd.f32 %v817, %v929
    %v976 = vadd.f32 %v818, %v943
    %v977 = vadd.f32 %v819, %v957
    %v978 = vadd.f32 %v820, %v971
    %v979 = vadd.f32 %v821, %v931
    %v980 = vadd.f32 %v822, %v945
    %v981 = vadd.f32 %v823, %v959
    %v982 = vadd.f32 %v824, %v973
    %v983 = vperm.slane %v37, 6
    %v984 = vperm.slane %v38, 6
    %v985 = vperm.slane %v39, 6
    %v986 = vperm.slane %v40, 6
    %v991 = vrot.slane %v984, 4
    %v992 = vrot.slane %v986, 4
    %v993 = vsel %vm59, %v983, %v991
    %v994 = vsel %vm59, %v985, %v992
    %995 = vrot.lane.b32.xlu0 %v993, 79
    %v996 = vpop.permute.xlu0 %995
    %997 = vrot.lane.b32.xlu0 %v994, 79
    %v998 = vpop.permute.xlu0 %997
    %v999 = vrot.slane %v996, 4
    %v1000 = vrot.slane %v998, 4
    %vm1001 = vcmask 646144
    %v1002 = vsel %vm1001, %v999, %v996
    %v1003 = vsel %vm59, %v999, %v1000
    %v1004 = vsel %vm1001, %v1003, %v998
    %v1008 = vmul.f32 %v34, %v1002
    %v1009 = vmul.f32 %v35, %v1004
    %v1010 = vmul.f32 %v36, %v1000
    %1014 = vst [vmem:[#allocation1] ss:$2 sm:$0xff] %v1008
    %s1015 = scalar_lea.vmem [#allocation1], 16
    %1016 = vst [vmem:[%s1015] ss:$2 sm:$0xff] %v1009
    %s1017 = scalar_lea.vmem [#allocation1], 32
    %1018 = vst [vmem:[%s1017] ss:$2 sm:$0xff] %v1010
    %v1019 = vld.sshfl [vmem:[#allocation1] sm:$0xff pattern:$0x75316420]
    %v1020 = vld.sshfl [vmem:[#allocation1 + $0x8] sm:$0xff pattern:$0x75316420]
    %v1021 = vld.sshfl [vmem:[#allocation1 + $0x10] sm:$0xff pattern:$0x75316420]
    %v1022 = vld.sshfl [vmem:[#allocation1 + $0x18] sm:$0xff pattern:$0x75316420]
    %v1023 = vld.sshfl [vmem:[#allocation1 + $0x20] sm:$0xff pattern:$0x75316420]
    %v1029 = vpack.c.bf16 %v1019, %v1019
    %v1030 = vpack.c.bf16 %v1020, %v1020
    %v1031 = vpack.c.bf16 %v1021, %v1021
    %v1032 = vpack.c.bf16 %v1022, %v1022
    %v1033 = vpack.c.bf16 %v1023, %v1023
    %s1034 = scalar_lea.vmem %s2, 48
    %v1035 = vld [vmem:[%s1034] sm:$0xf]
    %v1036 = vld [vmem:[%s1034 + $0x4] sm:$0xf]
    %v1039 = vunpack.c.l.b16 %v1035
    %v1040 = vunpack.c.l.b16 %v1036
    %v1041 = vpack.c.b16 %v1040, %v1039
    %1047 = vrot.lane.b32.xlu0 %v1029, 49
    %v1048 = vpop.permute.xlu0 %1047
    %1049 = vrot.lane.b32.xlu0 %v1030, 49
    %v1050 = vpop.permute.xlu0 %1049
    %1051 = vrot.lane.b32.xlu0 %v1031, 49
    %v1052 = vpop.permute.xlu0 %1051
    %1053 = vrot.lane.b32.xlu0 %v1032, 49
    %v1054 = vpop.permute.xlu0 %1053
    %1055 = vrot.lane.b32.xlu0 %v1033, 49
    %v1056 = vpop.permute.xlu0 %1055
    %vm1057 = vcmask 400384
    %v1058 = vsel %vm1057, %v1048, %v1050
    %v1059 = vsel %vm1057, %v1050, %v1052
    %v1060 = vsel %vm1057, %v1052, %v1054
    %v1061 = vsel %vm1057, %v1054, %v1056
    %v1063 = vsel %vm182, %v1041, 0
    %v1066 = vsel %vm186, %v1058, 0
    %v1069 = vsel %vm186, %v1059, 0
    %v1072 = vsel %vm186, %v1060, 0
    %v1075 = vsel %vm186, %v1061, 0
    %1077 = vmatpush.bf16.msra.mxu0 0
    %1078 = vmatpush.bf16.msra.mxu0 0
    %1079 = vmatpush.bf16.msra.mxu0 0
    %1080 = vmatpush.bf16.msra.mxu0 0
    %1081 = vmatpush.bf16.msra.mxu0 0
    %1082 = vmatpush.bf16.msra.mxu0 0
    %1083 = vmatpush.bf16.msra.mxu0 0
    %1084 = vmatpush.bf16.msra.mxu0 %v1066
    %1085 = vmatmul.bf16.gmra.mxu0 %v1063
    %v1086 = vpop.f32.mrf.mxu0
    %v1087 = vadd.f32 0.0, %v1086
    %v1088 = vpop.f32.mrf.mxu0
    %v1089 = vadd.f32 0.0, %v1088
    %1090 = vdwg.mxu0
    %1091 = vmatpush.bf16.msra.mxu0 0
    %1092 = vmatpush.bf16.msra.mxu0 0
    %1093 = vmatpush.bf16.msra.mxu0 0
    %1094 = vmatpush.bf16.msra.mxu0 0
    %1095 = vmatpush.bf16.msra.mxu0 0
    %1096 = vmatpush.bf16.msra.mxu0 0
    %1097 = vmatpush.bf16.msra.mxu0 0
    %1098 = vmatpush.bf16.msra.mxu0 %v1069
    %1099 = vmatmul.bf16.gmra.mxu0 %v1063
    %v1100 = vpop.f32.mrf.mxu0
    %v1101 = vadd.f32 0.0, %v1100
    %v1102 = vpop.f32.mrf.mxu0
    %v1103 = vadd.f32 0.0, %v1102
    %1104 = vdwg.mxu0
    %1105 = vmatpush.bf16.msra.mxu0 0
    %1106 = vmatpush.bf16.msra.mxu0 0
    %1107 = vmatpush.bf16.msra.mxu0 0
    %1108 = vmatpush.bf16.msra.mxu0 0
    %1109 = vmatpush.bf16.msra.mxu0 0
    %1110 = vmatpush.bf16.msra.mxu0 0
    %1111 = vmatpush.bf16.msra.mxu0 0
    %1112 = vmatpush.bf16.msra.mxu0 %v1072
    %1113 = vmatmul.bf16.gmra.mxu0 %v1063
    %v1114 = vpop.f32.mrf.mxu0
    %v1115 = vadd.f32 0.0, %v1114
    %v1116 = vpop.f32.mrf.mxu0
    %v1117 = vadd.f32 0.0, %v1116
    %1118 = vdwg.mxu0
    %1119 = vmatpush.bf16.msra.mxu0 0
    %1120 = vmatpush.bf16.msra.mxu0 0
    %1121 = vmatpush.bf16.msra.mxu0 0
    %1122 = vmatpush.bf16.msra.mxu0 0
    %1123 = vmatpush.bf16.msra.mxu0 0
    %1124 = vmatpush.bf16.msra.mxu0 0
    %1125 = vmatpush.bf16.msra.mxu0 0
    %1126 = vmatpush.bf16.msra.mxu0 %v1075
    %1127 = vmatmul.bf16.gmra.mxu0 %v1063
    %v1128 = vpop.f32.mrf.mxu0
    %v1129 = vadd.f32 0.0, %v1128
    %v1130 = vpop.f32.mrf.mxu0
    %v1131 = vadd.f32 0.0, %v1130
    %1132 = vdwg.mxu0
    %v1133 = vadd.f32 %v975, %v1087
    %v1134 = vadd.f32 %v976, %v1101
    %v1135 = vadd.f32 %v977, %v1115
    %v1136 = vadd.f32 %v978, %v1129
    %v1137 = vadd.f32 %v979, %v1089
    %v1138 = vadd.f32 %v980, %v1103
    %v1139 = vadd.f32 %v981, %v1117
    %v1140 = vadd.f32 %v982, %v1131
    %v1141 = vperm.slane %v37, 7
    %v1142 = vperm.slane %v38, 7
    %v1143 = vperm.slane %v39, 7
    %v1144 = vperm.slane %v40, 7
    %v1149 = vrot.slane %v1142, 4
    %v1150 = vrot.slane %v1144, 4
    %v1151 = vsel %vm59, %v1141, %v1149
    %v1152 = vsel %vm59, %v1143, %v1150
    %1153 = vrot.lane.b32.xlu0 %v1151, 80
    %v1154 = vpop.permute.xlu0 %1153
    %1155 = vrot.lane.b32.xlu0 %v1152, 80
    %v1156 = vpop.permute.xlu0 %1155
    %v1157 = vrot.slane %v1154, 4
    %v1158 = vrot.slane %v1156, 4
    %vm1159 = vcmask 654336
    %v1160 = vsel %vm1159, %v1157, %v1154
    %v1161 = vsel %vm59, %v1157, %v1158
    %v1162 = vsel %vm1159, %v1161, %v1156
    %v1166 = vmul.f32 %v34, %v1160
    %v1167 = vmul.f32 %v35, %v1162
    %v1168 = vmul.f32 %v36, %v1158
    %1172 = vst [vmem:[#allocation1] ss:$2 sm:$0xff] %v1166
    %s1173 = scalar_lea.vmem [#allocation1], 16
    %1174 = vst [vmem:[%s1173] ss:$2 sm:$0xff] %v1167
    %s1175 = scalar_lea.vmem [#allocation1], 32
    %1176 = vst [vmem:[%s1175] ss:$2 sm:$0xff] %v1168
    %v1177 = vld.sshfl [vmem:[#allocation1] sm:$0xff pattern:$0x75316420]
    %v1178 = vld.sshfl [vmem:[#allocation1 + $0x8] sm:$0xff pattern:$0x75316420]
    %v1179 = vld.sshfl [vmem:[#allocation1 + $0x10] sm:$0xff pattern:$0x75316420]
    %v1180 = vld.sshfl [vmem:[#allocation1 + $0x18] sm:$0xff pattern:$0x75316420]
    %v1181 = vld.sshfl [vmem:[#allocation1 + $0x20] sm:$0xff pattern:$0x75316420]
    %v1187 = vpack.c.bf16 %v1177, %v1177
    %v1188 = vpack.c.bf16 %v1178, %v1178
    %v1189 = vpack.c.bf16 %v1179, %v1179
    %v1190 = vpack.c.bf16 %v1180, %v1180
    %v1191 = vpack.c.bf16 %v1181, %v1181
    %s1192 = scalar_lea.vmem %s2, 56
    %v1193 = vld [vmem:[%s1192] sm:$0xf]
    %v1194 = vld [vmem:[%s1192 + $0x4] sm:$0xf]
    %v1197 = vunpack.c.l.b16 %v1193
    %v1198 = vunpack.c.l.b16 %v1194
    %v1199 = vpack.c.b16 %v1198, %v1197
    %1205 = vrot.lane.b32.xlu0 %v1187, 48
    %v1206 = vpop.permute.xlu0 %1205
    %1207 = vrot.lane.b32.xlu0 %v1188, 48
    %v1208 = vpop.permute.xlu0 %1207
    %1209 = vrot.lane.b32.xlu0 %v1189, 48
    %v1210 = vpop.permute.xlu0 %1209
    %1211 = vrot.lane.b32.xlu0 %v1190, 48
    %v1212 = vpop.permute.xlu0 %1211
    %1213 = vrot.lane.b32.xlu0 %v1191, 48
    %v1214 = vpop.permute.xlu0 %1213
    %vm1215 = vcmask 392192
    %v1216 = vsel %vm1215, %v1206, %v1208
    %v1217 = vsel %vm1215, %v1208, %v1210
    %v1218 = vsel %vm1215, %v1210, %v1212
    %v1219 = vsel %vm1215, %v1212, %v1214
    %v1221 = vsel %vm182, %v1199, 0
    %v1224 = vsel %vm186, %v1216, 0
    %v1227 = vsel %vm186, %v1217, 0
    %v1230 = vsel %vm186, %v1218, 0
    %v1233 = vsel %vm186, %v1219, 0
    %1235 = vmatpush.bf16.msra.mxu0 0
    %1236 = vmatpush.bf16.msra.mxu0 0
    %1237 = vmatpush.bf16.msra.mxu0 0
    %1238 = vmatpush.bf16.msra.mxu0 0
    %1239 = vmatpush.bf16.msra.mxu0 0
    %1240 = vmatpush.bf16.msra.mxu0 0
    %1241 = vmatpush.bf16.msra.mxu0 0
    %1242 = vmatpush.bf16.msra.mxu0 %v1224
    %1243 = vmatmul.bf16.gmra.mxu0 %v1221
    %v1244 = vpop.f32.mrf.mxu0
    %v1245 = vadd.f32 0.0, %v1244
    %v1246 = vpop.f32.mrf.mxu0
    %v1247 = vadd.f32 0.0, %v1246
    %1248 = vdwg.mxu0
    %1249 = vmatpush.bf16.msra.mxu0 0
    %1250 = vmatpush.bf16.msra.mxu0 0
    %1251 = vmatpush.bf16.msra.mxu0 0
    %1252 = vmatpush.bf16.msra.mxu0 0
    %1253 = vmatpush.bf16.msra.mxu0 0
    %1254 = vmatpush.bf16.msra.mxu0 0
    %1255 = vmatpush.bf16.msra.mxu0 0
    %1256 = vmatpush.bf16.msra.mxu0 %v1227
    %1257 = vmatmul.bf16.gmra.mxu0 %v1221
    %v1258 = vpop.f32.mrf.mxu0
    %v1259 = vadd.f32 0.0, %v1258
    %v1260 = vpop.f32.mrf.mxu0
    %v1261 = vadd.f32 0.0, %v1260
    %1262 = vdwg.mxu0
    %1263 = vmatpush.bf16.msra.mxu0 0
    %1264 = vmatpush.bf16.msra.mxu0 0
    %1265 = vmatpush.bf16.msra.mxu0 0
    %1266 = vmatpush.bf16.msra.mxu0 0
    %1267 = vmatpush.bf16.msra.mxu0 0
    %1268 = vmatpush.bf16.msra.mxu0 0
    %1269 = vmatpush.bf16.msra.mxu0 0
    %1270 = vmatpush.bf16.msra.mxu0 %v1230
    %1271 = vmatmul.bf16.gmra.mxu0 %v1221
    %v1272 = vpop.f32.mrf.mxu0
    %v1273 = vadd.f32 0.0, %v1272
    %v1274 = vpop.f32.mrf.mxu0
    %v1275 = vadd.f32 0.0, %v1274
    %1276 = vdwg.mxu0
    %1277 = vmatpush.bf16.msra.mxu0 0
    %1278 = vmatpush.bf16.msra.mxu0 0
    %1279 = vmatpush.bf16.msra.mxu0 0
    %1280 = vmatpush.bf16.msra.mxu0 0
    %1281 = vmatpush.bf16.msra.mxu0 0
    %1282 = vmatpush.bf16.msra.mxu0 0
    %1283 = vmatpush.bf16.msra.mxu0 0
    %1284 = vmatpush.bf16.msra.mxu0 %v1233
    %1285 = vmatmul.bf16.gmra.mxu0 %v1221
    %v1286 = vpop.f32.mrf.mxu0
    %v1287 = vadd.f32 0.0, %v1286
    %v1288 = vpop.f32.mrf.mxu0
    %v1289 = vadd.f32 0.0, %v1288
    %1290 = vdwg.mxu0
    %v1291 = vadd.f32 %v1133, %v1245
    %v1292 = vadd.f32 %v1134, %v1259
    %v1293 = vadd.f32 %v1135, %v1273
    %v1294 = vadd.f32 %v1136, %v1287
    %v1295 = vadd.f32 %v1137, %v1247
    %v1296 = vadd.f32 %v1138, %v1261
    %v1297 = vadd.f32 %v1139, %v1275
    %v1298 = vadd.f32 %v1140, %v1289
    %v1299 = vperm.slane %v41, 0
    %v1300 = vperm.slane %v42, 0
    %v1301 = vperm.slane %v43, 0
    %v1302 = vperm.slane %v44, 0
    %v1307 = vrot.slane %v1300, 4
    %v1308 = vrot.slane %v1302, 4
    %v1309 = vsel %vm59, %v1299, %v1307
    %v1310 = vsel %vm59, %v1301, %v1308
    %1311 = vrot.lane.b32.xlu0 %v1309, 81
    %v1312 = vpop.permute.xlu0 %1311
    %1313 = vrot.lane.b32.xlu0 %v1310, 81
    %v1314 = vpop.permute.xlu0 %1313
    %v1315 = vrot.slane %v1312, 4
    %v1316 = vrot.slane %v1314, 4
    %vm1317 = vcmask 662528
    %v1318 = vsel %vm1317, %v1315, %v1312
    %v1319 = vsel %vm59, %v1315, %v1316
    %v1320 = vsel %vm1317, %v1319, %v1314
    %v1324 = vmul.f32 %v34, %v1318
    %v1325 = vmul.f32 %v35, %v1320
    %v1326 = vmul.f32 %v36, %v1316
    %1330 = vst [vmem:[#allocation1] ss:$2 sm:$0xff] %v1324
    %s1331 = scalar_lea.vmem [#allocation1], 16
    %1332 = vst [vmem:[%s1331] ss:$2 sm:$0xff] %v1325
    %s1333 = scalar_lea.vmem [#allocation1], 32
    %1334 = vst [vmem:[%s1333] ss:$2 sm:$0xff] %v1326
    %v1335 = vld.sshfl [vmem:[#allocation1] sm:$0xff pattern:$0x75316420]
    %v1336 = vld.sshfl [vmem:[#allocation1 + $0x8] sm:$0xff pattern:$0x75316420]
    %v1337 = vld.sshfl [vmem:[#allocation1 + $0x10] sm:$0xff pattern:$0x75316420]
    %v1338 = vld.sshfl [vmem:[#allocation1 + $0x18] sm:$0xff pattern:$0x75316420]
    %v1339 = vld.sshfl [vmem:[#allocation1 + $0x20] sm:$0xff pattern:$0x75316420]
    %v1345 = vpack.c.bf16 %v1335, %v1335
    %v1346 = vpack.c.bf16 %v1336, %v1336
    %v1347 = vpack.c.bf16 %v1337, %v1337
    %v1348 = vpack.c.bf16 %v1338, %v1338
    %v1349 = vpack.c.bf16 %v1339, %v1339
    %s1350 = scalar_lea.vmem %s2, 64
    %v1351 = vld [vmem:[%s1350] sm:$0xf]
    %v1352 = vld [vmem:[%s1350 + $0x4] sm:$0xf]
    %v1355 = vunpack.c.l.b16 %v1351
    %v1356 = vunpack.c.l.b16 %v1352
    %v1357 = vpack.c.b16 %v1356, %v1355
    %1363 = vrot.lane.b32.xlu0 %v1345, 47
    %v1364 = vpop.permute.xlu0 %1363
    %1365 = vrot.lane.b32.xlu0 %v1346, 47
    %v1366 = vpop.permute.xlu0 %1365
    %1367 = vrot.lane.b32.xlu0 %v1347, 47
    %v1368 = vpop.permute.xlu0 %1367
    %1369 = vrot.lane.b32.xlu0 %v1348, 47
    %v1370 = vpop.permute.xlu0 %1369
    %1371 = vrot.lane.b32.xlu0 %v1349, 47
    %v1372 = vpop.permute.xlu0 %1371
    %vm1373 = vcmask 384000
    %v1374 = vsel %vm1373, %v1364, %v1366
    %v1375 = vsel %vm1373, %v1366, %v1368
    %v1376 = vsel %vm1373, %v1368, %v1370
    %v1377 = vsel %vm1373, %v1370, %v1372
    %v1379 = vsel %vm182, %v1357, 0
    %v1382 = vsel %vm186, %v1374, 0
    %v1385 = vsel %vm186, %v1375, 0
    %v1388 = vsel %vm186, %v1376, 0
    %v1391 = vsel %vm186, %v1377, 0
    %1393 = vmatpush.bf16.msra.mxu0 0
    %1394 = vmatpush.bf16.msra.mxu0 0
    %1395 = vmatpush.bf16.msra.mxu0 0
    %1396 = vmatpush.bf16.msra.mxu0 0
    %1397 = vmatpush.bf16.msra.mxu0 0
    %1398 = vmatpush.bf16.msra.mxu0 0
    %1399 = vmatpush.bf16.msra.mxu0 0
    %1400 = vmatpush.bf16.msra.mxu0 %v1382
    %1401 = vmatmul.bf16.gmra.mxu0 %v1379
    %v1402 = vpop.f32.mrf.mxu0
    %v1403 = vadd.f32 0.0, %v1402
    %v1404 = vpop.f32.mrf.mxu0
    %v1405 = vadd.f32 0.0, %v1404
    %1406 = vdwg.mxu0
    %1407 = vmatpush.bf16.msra.mxu0 0
    %1408 = vmatpush.bf16.msra.mxu0 0
    %1409 = vmatpush.bf16.msra.mxu0 0
    %1410 = vmatpush.bf16.msra.mxu0 0
    %1411 = vmatpush.bf16.msra.mxu0 0
    %1412 = vmatpush.bf16.msra.mxu0 0
    %1413 = vmatpush.bf16.msra.mxu0 0
    %1414 = vmatpush.bf16.msra.mxu0 %v1385
    %1415 = vmatmul.bf16.gmra.mxu0 %v1379
    %v1416 = vpop.f32.mrf.mxu0
    %v1417 = vadd.f32 0.0, %v1416
    %v1418 = vpop.f32.mrf.mxu0
    %v1419 = vadd.f32 0.0, %v1418
    %1420 = vdwg.mxu0
    %1421 = vmatpush.bf16.msra.mxu0 0
    %1422 = vmatpush.bf16.msra.mxu0 0
    %1423 = vmatpush.bf16.msra.mxu0 0
    %1424 = vmatpush.bf16.msra.mxu0 0
    %1425 = vmatpush.bf16.msra.mxu0 0
    %1426 = vmatpush.bf16.msra.mxu0 0
    %1427 = vmatpush.bf16.msra.mxu0 0
    %1428 = vmatpush.bf16.msra.mxu0 %v1388
    %1429 = vmatmul.bf16.gmra.mxu0 %v1379
    %v1430 = vpop.f32.mrf.mxu0
    %v1431 = vadd.f32 0.0, %v1430
    %v1432 = vpop.f32.mrf.mxu0
    %v1433 = vadd.f32 0.0, %v1432
    %1434 = vdwg.mxu0
    %1435 = vmatpush.bf16.msra.mxu0 0
    %1436 = vmatpush.bf16.msra.mxu0 0
    %1437 = vmatpush.bf16.msra.mxu0 0
    %1438 = vmatpush.bf16.msra.mxu0 0
    %1439 = vmatpush.bf16.msra.mxu0 0
    %1440 = vmatpush.bf16.msra.mxu0 0
    %1441 = vmatpush.bf16.msra.mxu0 0
    %1442 = vmatpush.bf16.msra.mxu0 %v1391
    %1443 = vmatmul.bf16.gmra.mxu0 %v1379
    %v1444 = vpop.f32.mrf.mxu0
    %v1445 = vadd.f32 0.0, %v1444
    %v1446 = vpop.f32.mrf.mxu0
    %v1447 = vadd.f32 0.0, %v1446
    %1448 = vdwg.mxu0
    %v1449 = vadd.f32 %v1291, %v1403
    %v1450 = vadd.f32 %v1292, %v1417
    %v1451 = vadd.f32 %v1293, %v1431
    %v1452 = vadd.f32 %v1294, %v1445
    %v1453 = vadd.f32 %v1295, %v1405
    %v1454 = vadd.f32 %v1296, %v1419
    %v1455 = vadd.f32 %v1297, %v1433
    %v1456 = vadd.f32 %v1298, %v1447
    %v1457 = vld [vmem:[%s3] sm:$0xff]
    %v1458 = vld [vmem:[%s3 + $0x8] sm:$0xff]
    %1460 = vset.pattern.permute.xlu0 0
    %1461 = vperm.xlu0 %1460, %v1457
    %v1462 = vpop.permute.xlu0 %1461
    %1465 = vset.pattern.permute.xlu0 0
    %1466 = vperm.xlu0 %1465, %v1458
    %v1467 = vpop.permute.xlu0 %1466
    %v1469 = vadd.f32 %v1449, %v1462
    %v1470 = vadd.f32 %v1450, %v1462
    %v1471 = vadd.f32 %v1451, %v1462
    %v1472 = vadd.f32 %v1452, %v1462
    %v1473 = vadd.f32 %v1453, %v1467
    %v1474 = vadd.f32 %v1454, %v1467
    %v1475 = vadd.f32 %v1455, %v1467
    %v1476 = vadd.f32 %v1456, %v1467
    %v1477 = vadd.f32 %v1469, %v1470
    %v1478 = vadd.f32 %v1477, %v1471
    %v1479 = vadd.f32 %v1478, %v1472
    %1480 = vadd.xlane.f32.xlu0 %v1479
    %v1481 = vpop.xlane.xlu0 %1480
    %v1482 = vadd.f32 %v1473, %v1474
    %v1483 = vadd.f32 %v1482, %v1475
    %v1484 = vadd.f32 %v1483, %v1476
    %1485 = vadd.xlane.f32.xlu0 %v1484
    %v1486 = vpop.xlane.xlu0 %1485
    %v1487 = vmul.f32 %v1481, 0.001953125
    %v1488 = vmul.f32 %v1486, 0.001953125
    %v1489 = vsub.f32 %v1469, %v1487
    %v1490 = vsub.f32 %v1470, %v1487
    %v1491 = vsub.f32 %v1471, %v1487
    %v1492 = vsub.f32 %v1472, %v1487
    %v1493 = vsub.f32 %v1473, %v1488
    %v1494 = vsub.f32 %v1474, %v1488
    %v1495 = vsub.f32 %v1475, %v1488
    %v1496 = vsub.f32 %v1476, %v1488
    %v1497 = vmul.f32 %v1489, %v1489
    %v1498 = vmul.f32 %v1490, %v1490
    %v1499 = vmul.f32 %v1491, %v1491
    %v1500 = vmul.f32 %v1492, %v1492
    %v1501 = vmul.f32 %v1493, %v1493
    %v1502 = vmul.f32 %v1494, %v1494
    %v1503 = vmul.f32 %v1495, %v1495
    %v1504 = vmul.f32 %v1496, %v1496
    %v1505 = vadd.f32 %v1497, %v1498
    %v1506 = vadd.f32 %v1505, %v1499
    %v1507 = vadd.f32 %v1506, %v1500
    %1508 = vadd.xlane.f32.xlu0 %v1507
    %v1509 = vpop.xlane.xlu0 %1508
    %v1510 = vadd.f32 %v1501, %v1502
    %v1511 = vadd.f32 %v1510, %v1503
    %v1512 = vadd.f32 %v1511, %v1504
    %1513 = vadd.xlane.f32.xlu0 %v1512
    %v1514 = vpop.xlane.xlu0 %1513
    %v1515 = vmul.f32 %v1509, 0.001953125
    %v1516 = vmul.f32 %v1514, 0.001953125
    %v1517 = vadd.f32 %v1515, 1e-05
    %v1518 = vadd.f32 %v1516, 1e-05
    %v1519 = vrsqrt.pop %v1517
    %v1520 = vmul.f32 %v1519, %v1517
    %v1521 = vmul.f32 %v1520, %v1519
    %v1522 = vmul.f32 0.5, %v1521
    %v1523 = vsub.f32 1.5, %v1522
    %v1524 = vmul.f32 %v1519, %v1523
    %vm1525 = vweird.f32 %v1517
    %vm1526 = vweird.f32 %v1519
    %vm1527 = vmor %vm1525, %vm1526
    %v1528 = vsel %vm1527, %v1519, %v1524
    %v1529 = vrsqrt.pop %v1518
    %v1530 = vmul.f32 %v1529, %v1518
    %v1531 = vmul.f32 %v1530, %v1529
    %v1532 = vmul.f32 0.5, %v1531
    %v1533 = vsub.f32 1.5, %v1532
    %v1534 = vmul.f32 %v1529, %v1533
    %vm1535 = vweird.f32 %v1518
    %vm1536 = vweird.f32 %v1529
    %vm1537 = vmor %vm1535, %vm1536
    %v1538 = vsel %vm1537, %v1529, %v1534
    %v1539 = vmul.f32 %v1457, %v1528
    %v1540 = vmul.f32 %v1458, %v1538
    %1542 = vset.pattern.permute.xlu0 1
    %1543 = vperm.xlu0 %1542, %v1539
    %v1544 = vpop.permute.xlu0 %1543
    %1547 = vset.pattern.permute.xlu0 1
    %1548 = vperm.xlu0 %1547, %v1540
    %v1549 = vpop.permute.xlu0 %1548
    %v1551 = vmul.f32 %v1489, %v1544
    %v1552 = vmul.f32 %v1490, %v1544
    %v1553 = vmul.f32 %v1491, %v1544
    %v1554 = vmul.f32 %v1492, %v1544
    %v1555 = vmul.f32 %v1493, %v1549
    %v1556 = vmul.f32 %v1494, %v1549
    %v1557 = vmul.f32 %v1495, %v1549
    %v1558 = vmul.f32 %v1496, %v1549
    %1559 = vset.pattern.permute.xlu0 2
    %1560 = vperm.xlu0 %1559, %v1457
    %v1561 = vpop.permute.xlu0 %1560
    %1563 = vset.pattern.permute.xlu0 2
    %1564 = vperm.xlu0 %1563, %v1458
    %v1565 = vpop.permute.xlu0 %1564
    %v1567 = vadd.f32 %v1551, %v1561
    %v1568 = vadd.f32 %v1552, %v1561
    %v1569 = vadd.f32 %v1553, %v1561
    %v1570 = vadd.f32 %v1554, %v1561
    %v1571 = vadd.f32 %v1555, %v1565
    %v1572 = vadd.f32 %v1556, %v1565
    %v1573 = vadd.f32 %v1557, %v1565
    %v1574 = vadd.f32 %v1558, %v1565
    %v1575 = vmin.f32 %v1567, 20.0
    %v1576 = vmin.f32 %v1568, 20.0
    %v1577 = vmin.f32 %v1569, 20.0
    %v1578 = vmin.f32 %v1570, 20.0
    %v1579 = vmin.f32 %v1571, 20.0
    %v1580 = vmin.f32 %v1572, 20.0
    %v1581 = vmin.f32 %v1573, 20.0
    %v1582 = vmin.f32 %v1574, 20.0
    %v1583 = vmul.f32 %v1575, 1.442695
    %v1584 = vpow.pop %v1583
    %v1585 = vmul.f32 %v1576, 1.442695
    %v1586 = vpow.pop %v1585
    %v1587 = vmul.f32 %v1577, 1.442695
    %v1588 = vpow.pop %v1587
    %v1589 = vmul.f32 %v1578, 1.442695
    %v1590 = vpow.pop %v1589
    %v1591 = vmul.f32 %v1579, 1.442695
    %v1592 = vpow.pop %v1591
    %v1593 = vmul.f32 %v1580, 1.442695
    %v1594 = vpow.pop %v1593
    %v1595 = vmul.f32 %v1581, 1.442695
    %v1596 = vpow.pop %v1595
    %v1597 = vmul.f32 %v1582, 1.442695
    %v1598 = vpow.pop %v1597
    %v1599 = vadd.f32 %v1584, 2.0
    %v1600 = vadd.f32 %v1586, 2.0
    %v1601 = vadd.f32 %v1588, 2.0
    %v1602 = vadd.f32 %v1590, 2.0
    %v1603 = vadd.f32 %v1592, 2.0
    %v1604 = vadd.f32 %v1594, 2.0
    %v1605 = vadd.f32 %v1596, 2.0
    %v1606 = vadd.f32 %v1598, 2.0
    %v1607 = vmul.f32 %v1584, %v1599
    %v1608 = vmul.f32 %v1586, %v1600
    %v1609 = vmul.f32 %v1588, %v1601
    %v1610 = vmul.f32 %v1590, %v1602
    %v1611 = vmul.f32 %v1592, %v1603
    %v1612 = vmul.f32 %v1594, %v1604
    %v1613 = vmul.f32 %v1596, %v1605
    %v1614 = vmul.f32 %v1598, %v1606
    %v1615 = vadd.f32 %v1607, 2.0
    %v1616 = vadd.f32 %v1608, 2.0
    %v1617 = vadd.f32 %v1609, 2.0
    %v1618 = vadd.f32 %v1610, 2.0
    %v1619 = vadd.f32 %v1611, 2.0
    %v1620 = vadd.f32 %v1612, 2.0
    %v1621 = vadd.f32 %v1613, 2.0
    %v1622 = vadd.f32 %v1614, 2.0
    %v1623 = vrcp.pop %v1615
    %v1624 = vrcp.pop %v1616
    %v1625 = vrcp.pop %v1617
    %v1626 = vrcp.pop %v1618
    %v1627 = vrcp.pop %v1619
    %v1628 = vrcp.pop %v1620
    %v1629 = vrcp.pop %v1621
    %v1630 = vrcp.pop %v1622
    %v1631 = vmul.f32 %v1607, %v1623
    %v1632 = vmul.f32 %v1608, %v1624
    %v1633 = vmul.f32 %v1609, %v1625
    %v1634 = vmul.f32 %v1610, %v1626
    %v1635 = vmul.f32 %v1611, %v1627
    %v1636 = vmul.f32 %v1612, %v1628
    %v1637 = vmul.f32 %v1613, %v1629
    %v1638 = vmul.f32 %v1614, %v1630
    %v1639 = vmul.f32 %v1567, %v1631
    %v1640 = vmul.f32 %v1568, %v1632
    %v1641 = vmul.f32 %v1569, %v1633
    %v1642 = vmul.f32 %v1570, %v1634
    %v1643 = vmul.f32 %v1571, %v1635
    %v1644 = vmul.f32 %v1572, %v1636
    %v1645 = vmul.f32 %v1573, %v1637
    %v1646 = vmul.f32 %v1574, %v1638
    %v1647 = vld [vmem:[%s7] sm:$0xff]
    %v1648 = vld [vmem:[%s7 + $0x8] sm:$0xff]
    %v1649 = vld [vmem:[%s7 + $0x10] sm:$0xff]
    %v1650 = vld [vmem:[%s7 + $0x18] sm:$0xff]
    %v1651 = vld [vmem:[%s7 + $0x20] sm:$0xff]
    %v1652 = vld [vmem:[%s7 + $0x28] sm:$0xff]
    %v1653 = vld [vmem:[%s7 + $0x30] sm:$0xff]
    %v1654 = vld [vmem:[%s7 + $0x38] sm:$0xff]
    %v1655 = vld [vmem:[%s7 + $0x40] sm:$0xff]
    %v1656 = vld [vmem:[%s7 + $0x48] sm:$0xff]
    %v1657 = vld [vmem:[%s7 + $0x50] sm:$0xff]
    %v1658 = vld [vmem:[%s7 + $0x58] sm:$0xff]
    %v1659 = vld [vmem:[%s7 + $0x60] sm:$0xff]
    %v1660 = vld [vmem:[%s7 + $0x68] sm:$0xff]
    %v1661 = vld [vmem:[%s7 + $0x70] sm:$0xff]
    %v1662 = vld [vmem:[%s7 + $0x78] sm:$0xff]
    %v1663 = vld [vmem:[%s7 + $0x80] sm:$0xff]
    %v1664 = vld [vmem:[%s7 + $0x88] sm:$0xff]
    %v1665 = vld [vmem:[%s7 + $0x90] sm:$0xff]
    %v1666 = vld [vmem:[%s7 + $0x98] sm:$0xff]
    %v1667 = vld [vmem:[%s7 + $0xa0] sm:$0xff]
    %v1668 = vld [vmem:[%s7 + $0xa8] sm:$0xff]
    %v1669 = vld [vmem:[%s7 + $0xb0] sm:$0xff]
    %v1670 = vld [vmem:[%s7 + $0xb8] sm:$0xff]
    %v1671 = vld [vmem:[%s7 + $0xc0] sm:$0xff]
    %v1672 = vld [vmem:[%s7 + $0xc8] sm:$0xff]
    %v1673 = vld [vmem:[%s7 + $0xd0] sm:$0xff]
    %v1674 = vld [vmem:[%s7 + $0xd8] sm:$0xff]
    %v1675 = vld [vmem:[%s7 + $0xe0] sm:$0xff]
    %v1676 = vld [vmem:[%s7 + $0xe8] sm:$0xff]
    %v1677 = vld [vmem:[%s7 + $0xf0] sm:$0xff]
    %v1678 = vld [vmem:[%s7 + $0xf8] sm:$0xff]
    %v1679 = vld [vmem:[%s7 + $0x100] sm:$0xff]
    %v1680 = vld [vmem:[%s7 + $0x108] sm:$0xff]
    %v1681 = vld [vmem:[%s7 + $0x110] sm:$0xff]
    %v1682 = vld [vmem:[%s7 + $0x118] sm:$0xff]
    %v1683 = vld [vmem:[%s7 + $0x120] sm:$0xff]
    %v1684 = vld [vmem:[%s7 + $0x128] sm:$0xff]
    %v1685 = vld [vmem:[%s7 + $0x130] sm:$0xff]
    %v1686 = vld [vmem:[%s7 + $0x138] sm:$0xff]
    %v1687 = vld [vmem:[%s7 + $0x140] sm:$0xff]
    %v1688 = vld [vmem:[%s7 + $0x148] sm:$0xff]
    %v1689 = vld [vmem:[%s7 + $0x150] sm:$0xff]
    %v1690 = vld [vmem:[%s7 + $0x158] sm:$0xff]
    %v1691 = vld [vmem:[%s7 + $0x160] sm:$0xff]
    %v1692 = vld [vmem:[%s7 + $0x168] sm:$0xff]
    %v1693 = vld [vmem:[%s7 + $0x170] sm:$0xff]
    %v1694 = vld [vmem:[%s7 + $0x178] sm:$0xff]
    %v1695 = vld [vmem:[%s7 + $0x180] sm:$0xff]
    %v1696 = vld [vmem:[%s7 + $0x188] sm:$0xff]
    %v1697 = vld [vmem:[%s7 + $0x190] sm:$0xff]
    %v1698 = vld [vmem:[%s7 + $0x198] sm:$0xff]
    %v1699 = vld [vmem:[%s7 + $0x1a0] sm:$0xff]
    %v1700 = vld [vmem:[%s7 + $0x1a8] sm:$0xff]
    %v1701 = vld [vmem:[%s7 + $0x1b0] sm:$0xff]
    %v1702 = vld [vmem:[%s7 + $0x1b8] sm:$0xff]
    %v1703 = vld [vmem:[%s7 + $0x1c0] sm:$0xff]
    %v1704 = vld [vmem:[%s7 + $0x1c8] sm:$0xff]
    %v1705 = vld [vmem:[%s7 + $0x1d0] sm:$0xff]
    %v1706 = vld [vmem:[%s7 + $0x1d8] sm:$0xff]
    %v1707 = vld [vmem:[%s7 + $0x1e0] sm:$0xff]
    %v1708 = vld [vmem:[%s7 + $0x1e8] sm:$0xff]
    %v1709 = vld [vmem:[%s7 + $0x1f0] sm:$0xff]
    %v1710 = vld [vmem:[%s7 + $0x1f8] sm:$0xff]
    %1711 = vmatpush.msra.mxu0 %v1662
    %1712 = vmatpush.msra.mxu0 %v1661
    %1713 = vmatpush.msra.mxu0 %v1660
    %1714 = vmatpush.msra.mxu0 %v1659
    %1715 = vmatpush.msra.mxu0 %v1658
    %1716 = vmatpush.msra.mxu0 %v1657
    %1717 = vmatpush.msra.mxu0 %v1656
    %1718 = vmatpush.msra.mxu0 %v1655
    %1719 = vmatpush.msra.mxu0 %v1654
    %1720 = vmatpush.msra.mxu0 %v1653
    %1721 = vmatpush.msra.mxu0 %v1652
    %1722 = vmatpush.msra.mxu0 %v1651
    %1723 = vmatpush.msra.mxu0 %v1650
    %1724 = vmatpush.msra.mxu0 %v1649
    %1725 = vmatpush.msra.mxu0 %v1648
    %1726 = vmatpush.msra.mxu0 %v1647
    %1727 = vmatmul.f32.gmra.mxu0 %v1639
    %v1728 = vpop.f32.mrf.mxu0
    %v1729 = vadd.f32 0.0, %v1728
    %1730 = vmatmul.f32.gmra.mxu0 %v1643
    %v1731 = vpop.f32.mrf.mxu0
    %v1732 = vadd.f32 0.0, %v1731
    %1733 = vdwg.mxu0
    %1734 = vmatpush.msra.mxu0 %v1678
    %1735 = vmatpush.msra.mxu0 %v1677
    %1736 = vmatpush.msra.mxu0 %v1676
    %1737 = vmatpush.msra.mxu0 %v1675
    %1738 = vmatpush.msra.mxu0 %v1674
    %1739 = vmatpush.msra.mxu0 %v1673
    %1740 = vmatpush.msra.mxu0 %v1672
    %1741 = vmatpush.msra.mxu0 %v1671
    %1742 = vmatpush.msra.mxu0 %v1670
    %1743 = vmatpush.msra.mxu0 %v1669
    %1744 = vmatpush.msra.mxu0 %v1668
    %1745 = vmatpush.msra.mxu0 %v1667
    %1746 = vmatpush.msra.mxu0 %v1666
    %1747 = vmatpush.msra.mxu0 %v1665
    %1748 = vmatpush.msra.mxu0 %v1664
    %1749 = vmatpush.msra.mxu0 %v1663
    %1750 = vmatmul.f32.gmra.mxu0 %v1640
    %v1751 = vpop.f32.mrf.mxu0
    %v1752 = vadd.f32 %v1729, %v1751
    %1753 = vmatmul.f32.gmra.mxu0 %v1644
    %v1754 = vpop.f32.mrf.mxu0
    %v1755 = vadd.f32 %v1732, %v1754
    %1756 = vdwg.mxu0
    %1757 = vmatpush.msra.mxu0 %v1694
    %1758 = vmatpush.msra.mxu0 %v1693
    %1759 = vmatpush.msra.mxu0 %v1692
    %1760 = vmatpush.msra.mxu0 %v1691
    %1761 = vmatpush.msra.mxu0 %v1690
    %1762 = vmatpush.msra.mxu0 %v1689
    %1763 = vmatpush.msra.mxu0 %v1688
    %1764 = vmatpush.msra.mxu0 %v1687
    %1765 = vmatpush.msra.mxu0 %v1686
    %1766 = vmatpush.msra.mxu0 %v1685
    %1767 = vmatpush.msra.mxu0 %v1684
    %1768 = vmatpush.msra.mxu0 %v1683
    %1769 = vmatpush.msra.mxu0 %v1682
    %1770 = vmatpush.msra.mxu0 %v1681
    %1771 = vmatpush.msra.mxu0 %v1680
    %1772 = vmatpush.msra.mxu0 %v1679
    %1773 = vmatmul.f32.gmra.mxu0 %v1641
    %v1774 = vpop.f32.mrf.mxu0
    %v1775 = vadd.f32 %v1752, %v1774
    %1776 = vmatmul.f32.gmra.mxu0 %v1645
    %v1777 = vpop.f32.mrf.mxu0
    %v1778 = vadd.f32 %v1755, %v1777
    %1779 = vdwg.mxu0
    %1780 = vmatpush.msra.mxu0 %v1710
    %1781 = vmatpush.msra.mxu0 %v1709
    %1782 = vmatpush.msra.mxu0 %v1708
    %1783 = vmatpush.msra.mxu0 %v1707
    %1784 = vmatpush.msra.mxu0 %v1706
    %1785 = vmatpush.msra.mxu0 %v1705
    %1786 = vmatpush.msra.mxu0 %v1704
    %1787 = vmatpush.msra.mxu0 %v1703
    %1788 = vmatpush.msra.mxu0 %v1702
    %1789 = vmatpush.msra.mxu0 %v1701
    %1790 = vmatpush.msra.mxu0 %v1700
    %1791 = vmatpush.msra.mxu0 %v1699
    %1792 = vmatpush.msra.mxu0 %v1698
    %1793 = vmatpush.msra.mxu0 %v1697
    %1794 = vmatpush.msra.mxu0 %v1696
    %1795 = vmatpush.msra.mxu0 %v1695
    %1796 = vmatmul.f32.gmra.mxu0 %v1642
    %v1797 = vpop.f32.mrf.mxu0
    %v1798 = vadd.f32 %v1775, %v1797
    %1799 = vmatmul.f32.gmra.mxu0 %v1646
    %v1800 = vpop.f32.mrf.mxu0
    %v1801 = vadd.f32 %v1778, %v1800
    %1802 = vdwg.mxu0
    %v1803 = vmax.f32 %v1639, %v1640
    %1804 = vmax.xlane.f32.xlu0 %v1803
    %v1805 = vpop.xlane.xlu0 %1804
    %v1806 = vmax.f32 %v1643, %v1644
    %1807 = vmax.xlane.f32.xlu0 %v1806
    %v1808 = vpop.xlane.xlu0 %1807
    %v1809 = vmax.f32 %v1641, %v1642
    %1810 = vmax.xlane.f32.xlu0 %v1809
    %v1811 = vpop.xlane.xlu0 %1810
    %v1812 = vmax.f32 %v1645, %v1646
    %1813 = vmax.xlane.f32.xlu0 %v1812
    %v1814 = vpop.xlane.xlu0 %1813
    %vm1815 = vcmask 7168
    %v1816 = vsel %vm1815, %v1805, %v1811
    %v1817 = vsel %vm1815, %v1808, %v1814
    %1820 = vrot.lane.b32.xlu0 %v1816, 2
    %v1821 = vpop.permute.xlu0 %1820
    %1822 = vrot.lane.b32.xlu0 %v1817, 2
    %v1823 = vpop.permute.xlu0 %1822
    %vm1826 = vcmask 15360
    %v1827 = vsel %vm1826, %v1798, %v1821
    %v1828 = vsel %vm1826, %v1801, %v1823
    %v1829 = vld [vmem:[%s4] sm:$0x3]
    %v1830 = vld [vmem:[%s3] sm:$0x3]
    %1832 = vset.pattern.permute.xlu0 4
    %1833 = vperm.xlu0 %1832, %v1830
    %v1834 = vpop.permute.xlu0 %1833
    %vm1836 = vcmask 130048
    %v1838 = vsel %vm1836, %v1829, 0
    %1840 = vmatpush.msra.mxu0 0.0
    %1841 = vmatpush.msra.mxu0 0.0
    %1842 = vmatpush.msra.mxu0 0.0
    %1843 = vmatpush.msra.mxu0 0.0
    %1844 = vmatpush.msra.mxu0 0.0
    %1845 = vmatpush.msra.mxu0 0.0
    %1846 = vmatpush.msra.mxu0 0.0
    %1847 = vmatpush.msra.mxu0 0.0
    %1848 = vmatpush.msra.mxu0 0.0
    %1849 = vmatpush.msra.mxu0 0.0
    %1850 = vmatpush.msra.mxu0 0.0
    %1851 = vmatpush.msra.mxu0 0.0
    %1852 = vmatpush.msra.mxu0 0.0
    %1853 = vmatpush.msra.mxu0 0.0
    %1854 = vmatpush.msra.mxu0 %v1828
    %1855 = vmatpush.msra.mxu0 %v1827
    %1856 = vmatmul.f32.gmra.mxu0 %v1838
    %v1857 = vpop.f32.mrf.mxu0
    %v1858 = vadd.f32 %v1834, %v1857
    %1859 = vdwg.mxu0
    %v1860 = vmax.f32 %v1858, 0.0
    %v1861 = vld [vmem:[%s5] sm:$0xff]
    %v1862 = vld [vmem:[%s5 + $0x8] sm:$0xff]
    %1863 = vset.pattern.permute.xlu0 3
    %1864 = vperm.xlu0 %1863, %v1457
    %v1865 = vpop.permute.xlu0 %1864
    %1867 = vset.pattern.permute.xlu0 3
    %1868 = vperm.xlu0 %1867, %v1458
    %v1869 = vpop.permute.xlu0 %1868
    %v1872 = vsel %vm1826, %v1861, 0
    %v1875 = vsel %vm1826, %v1862, 0
    %v1878 = vsel %vm186, %v1860, 0
    %1880 = vmatpush.msra.mxu0 0.0
    %1881 = vmatpush.msra.mxu0 0.0
    %1882 = vmatpush.msra.mxu0 0.0
    %1883 = vmatpush.msra.mxu0 0.0
    %1884 = vmatpush.msra.mxu0 0.0
    %1885 = vmatpush.msra.mxu0 0.0
    %1886 = vmatpush.msra.mxu0 0.0
    %1887 = vmatpush.msra.mxu0 0.0
    %1888 = vmatpush.msra.mxu0 0.0
    %1889 = vmatpush.msra.mxu0 0.0
    %1890 = vmatpush.msra.mxu0 0.0
    %1891 = vmatpush.msra.mxu0 0.0
    %1892 = vmatpush.msra.mxu0 0.0
    %1893 = vmatpush.msra.mxu0 0.0
    %1894 = vmatpush.msra.mxu0 0.0
    %1895 = vmatpush.msra.mxu0 %v1878
    %1896 = vmatmul.f32.gmra.mxu0 %v1872
    %v1897 = vpop.f32.mrf.mxu0
    %v1898 = vadd.f32 %v1865, %v1897
    %1899 = vmatmul.f32.gmra.mxu0 %v1875
    %v1900 = vpop.f32.mrf.mxu0
    %v1901 = vadd.f32 %v1869, %v1900
    %1902 = vdwg.mxu0
    %1905 = vrot.lane.b32.xlu0 %v1898, 126
    %v1906 = vpop.permute.xlu0 %1905
    %1907 = vrot.lane.b32.xlu0 %v1901, 126
    %v1908 = vpop.permute.xlu0 %1907
    %v1911 = vadd.f32 %v1898, %v1906
    %v1912 = vadd.f32 %v1901, %v1908
    %v1913 = vsub.f32 0.0, %v1911
    %v1914 = vsub.f32 0.0, %v1912
    %v1915 = vmul.f32 %v1913, 1.442695
    %v1916 = vpow.pop %v1915
    %v1917 = vmul.f32 %v1914, 1.442695
    %v1918 = vpow.pop %v1917
    %v1919 = vadd.f32 %v1916, 1.0
    %v1920 = vadd.f32 %v1918, 1.0
    %v1921 = vrcp.pop %v1919
    %v1922 = vrcp.pop %v1920
    %v1923 = vld [vmem:[%s8] sm:$0xff]
    %1925 = vst [vmem:[#allocation1] ss:$4 sm:$0xff] %v1923
    %v1926 = vld.sshfl [vmem:[#allocation1] sm:$0xff pattern:$0x73625140]
    %v1927 = vld.sshfl [vmem:[#allocation1 + $0x8] sm:$0xff pattern:$0x73625140]
    %v1928 = vld.sshfl [vmem:[#allocation1 + $0x10] sm:$0xff pattern:$0x73625140]
    %v1929 = vld.sshfl [vmem:[#allocation1 + $0x18] sm:$0xff pattern:$0x73625140]
    %v1931 = vsel %vm1826, %v1921, 0
    %v1934 = vsel %vm1826, %v1922, 0
    %v1936 = vsel %vm186, %v1926, 0
    %v1938 = vsel %vm186, %v1927, 0
    %v1940 = vsel %vm186, %v1928, 0
    %v1942 = vsel %vm186, %v1929, 0
    %1944 = vmatpush.msra.mxu0 0.0
    %1945 = vmatpush.msra.mxu0 0.0
    %1946 = vmatpush.msra.mxu0 0.0
    %1947 = vmatpush.msra.mxu0 0.0
    %1948 = vmatpush.msra.mxu0 0.0
    %1949 = vmatpush.msra.mxu0 0.0
    %1950 = vmatpush.msra.mxu0 0.0
    %1951 = vmatpush.msra.mxu0 0.0
    %1952 = vmatpush.msra.mxu0 0.0
    %1953 = vmatpush.msra.mxu0 0.0
    %1954 = vmatpush.msra.mxu0 0.0
    %1955 = vmatpush.msra.mxu0 0.0
    %1956 = vmatpush.msra.mxu0 0.0
    %1957 = vmatpush.msra.mxu0 0.0
    %1958 = vmatpush.msra.mxu0 0.0
    %1959 = vmatpush.msra.mxu0 %v1936
    %1960 = vmatmul.f32.gmra.mxu0 %v1931
    %v1961 = vpop.f32.mrf.mxu0
    %v1962 = vadd.f32 0.0, %v1961
    %1963 = vmatmul.f32.gmra.mxu0 %v1934
    %v1964 = vpop.f32.mrf.mxu0
    %v1965 = vadd.f32 0.0, %v1964
    %1966 = vdwg.mxu0
    %1967 = vmatpush.msra.mxu0 0.0
    %1968 = vmatpush.msra.mxu0 0.0
    %1969 = vmatpush.msra.mxu0 0.0
    %1970 = vmatpush.msra.mxu0 0.0
    %1971 = vmatpush.msra.mxu0 0.0
    %1972 = vmatpush.msra.mxu0 0.0
    %1973 = vmatpush.msra.mxu0 0.0
    %1974 = vmatpush.msra.mxu0 0.0
    %1975 = vmatpush.msra.mxu0 0.0
    %1976 = vmatpush.msra.mxu0 0.0
    %1977 = vmatpush.msra.mxu0 0.0
    %1978 = vmatpush.msra.mxu0 0.0
    %1979 = vmatpush.msra.mxu0 0.0
    %1980 = vmatpush.msra.mxu0 0.0
    %1981 = vmatpush.msra.mxu0 0.0
    %1982 = vmatpush.msra.mxu0 %v1938
    %1983 = vmatmul.f32.gmra.mxu0 %v1931
    %v1984 = vpop.f32.mrf.mxu0
    %v1985 = vadd.f32 0.0, %v1984
    %1986 = vmatmul.f32.gmra.mxu0 %v1934
    %v1987 = vpop.f32.mrf.mxu0
    %v1988 = vadd.f32 0.0, %v1987
    %1989 = vdwg.mxu0
    %1990 = vmatpush.msra.mxu0 0.0
    %1991 = vmatpush.msra.mxu0 0.0
    %1992 = vmatpush.msra.mxu0 0.0
    %1993 = vmatpush.msra.mxu0 0.0
    %1994 = vmatpush.msra.mxu0 0.0
    %1995 = vmatpush.msra.mxu0 0.0
    %1996 = vmatpush.msra.mxu0 0.0
    %1997 = vmatpush.msra.mxu0 0.0
    %1998 = vmatpush.msra.mxu0 0.0
    %1999 = vmatpush.msra.mxu0 0.0
    %2000 = vmatpush.msra.mxu0 0.0
    %2001 = vmatpush.msra.mxu0 0.0
    %2002 = vmatpush.msra.mxu0 0.0
    %2003 = vmatpush.msra.mxu0 0.0
    %2004 = vmatpush.msra.mxu0 0.0
    %2005 = vmatpush.msra.mxu0 %v1940
    %2006 = vmatmul.f32.gmra.mxu0 %v1931
    %v2007 = vpop.f32.mrf.mxu0
    %v2008 = vadd.f32 0.0, %v2007
    %2009 = vmatmul.f32.gmra.mxu0 %v1934
    %v2010 = vpop.f32.mrf.mxu0
    %v2011 = vadd.f32 0.0, %v2010
    %2012 = vdwg.mxu0
    %2013 = vmatpush.msra.mxu0 0.0
    %2014 = vmatpush.msra.mxu0 0.0
    %2015 = vmatpush.msra.mxu0 0.0
    %2016 = vmatpush.msra.mxu0 0.0
    %2017 = vmatpush.msra.mxu0 0.0
    %2018 = vmatpush.msra.mxu0 0.0
    %2019 = vmatpush.msra.mxu0 0.0
    %2020 = vmatpush.msra.mxu0 0.0
    %2021 = vmatpush.msra.mxu0 0.0
    %2022 = vmatpush.msra.mxu0 0.0
    %2023 = vmatpush.msra.mxu0 0.0
    %2024 = vmatpush.msra.mxu0 0.0
    %2025 = vmatpush.msra.mxu0 0.0
    %2026 = vmatpush.msra.mxu0 0.0
    %2027 = vmatpush.msra.mxu0 0.0
    %2028 = vmatpush.msra.mxu0 %v1942
    %2029 = vmatmul.f32.gmra.mxu0 %v1931
    %v2030 = vpop.f32.mrf.mxu0
    %v2031 = vadd.f32 0.0, %v2030
    %2032 = vmatmul.f32.gmra.mxu0 %v1934
    %v2033 = vpop.f32.mrf.mxu0
    %v2034 = vadd.f32 0.0, %v2033
    %2035 = vdwg.mxu0
    %v2036 = vmul.f32 %v1639, %v1962
    %v2037 = vmul.f32 %v1640, %v1985
    %v2038 = vmul.f32 %v1641, %v2008
    %v2039 = vmul.f32 %v1642, %v2031
    %v2040 = vmul.f32 %v1643, %v1965
    %v2041 = vmul.f32 %v1644, %v1988
    %v2042 = vmul.f32 %v1645, %v2011
    %v2043 = vmul.f32 %v1646, %v2034
    %v2044 = vadd.f32 %v2036, %v2040
    %v2045 = vrot.slane %v2044, 4
    %v2046 = vadd.f32 %v2044, %v2045
    %v2047 = vrot.slane %v2046, 2
    %v2048 = vadd.f32 %v2046, %v2047
    %v2049 = vrot.slane %v2048, 1
    %v2050 = vadd.f32 %v2048, %v2049
    %v2051 = vadd.f32 %v2037, %v2041
    %v2052 = vrot.slane %v2051, 4
    %v2053 = vadd.f32 %v2051, %v2052
    %v2054 = vrot.slane %v2053, 2
    %v2055 = vadd.f32 %v2053, %v2054
    %v2056 = vrot.slane %v2055, 1
    %v2057 = vadd.f32 %v2055, %v2056
    %v2058 = vadd.f32 %v2038, %v2042
    %v2059 = vrot.slane %v2058, 4
    %v2060 = vadd.f32 %v2058, %v2059
    %v2061 = vrot.slane %v2060, 2
    %v2062 = vadd.f32 %v2060, %v2061
    %v2063 = vrot.slane %v2062, 1
    %v2064 = vadd.f32 %v2062, %v2063
    %v2065 = vadd.f32 %v2039, %v2043
    %v2066 = vrot.slane %v2065, 4
    %v2067 = vadd.f32 %v2065, %v2066
    %v2068 = vrot.slane %v2067, 2
    %v2069 = vadd.f32 %v2067, %v2068
    %v2070 = vrot.slane %v2069, 1
    %v2071 = vadd.f32 %v2069, %v2070
    %v2072 = vmul.f32 %v2050, 0.0625
    %v2073 = vmul.f32 %v2057, 0.0625
    %v2074 = vmul.f32 %v2064, 0.0625
    %v2075 = vmul.f32 %v2071, 0.0625
    %v2076 = vmax.f32 %v2036, %v2040
    %v2077 = vrot.slane %v2076, 4
    %v2078 = vmax.f32 %v2076, %v2077
    %v2079 = vrot.slane %v2078, 2
    %v2080 = vmax.f32 %v2078, %v2079
    %v2081 = vrot.slane %v2080, 1
    %v2082 = vmax.f32 %v2080, %v2081
    %v2083 = vmax.f32 %v2037, %v2041
    %v2084 = vrot.slane %v2083, 4
    %v2085 = vmax.f32 %v2083, %v2084
    %v2086 = vrot.slane %v2085, 2
    %v2087 = vmax.f32 %v2085, %v2086
    %v2088 = vrot.slane %v2087, 1
    %v2089 = vmax.f32 %v2087, %v2088
    %v2090 = vmax.f32 %v2038, %v2042
    %v2091 = vrot.slane %v2090, 4
    %v2092 = vmax.f32 %v2090, %v2091
    %v2093 = vrot.slane %v2092, 2
    %v2094 = vmax.f32 %v2092, %v2093
    %v2095 = vrot.slane %v2094, 1
    %v2096 = vmax.f32 %v2094, %v2095
    %v2097 = vmax.f32 %v2039, %v2043
    %v2098 = vrot.slane %v2097, 4
    %v2099 = vmax.f32 %v2097, %v2098
    %v2100 = vrot.slane %v2099, 2
    %v2101 = vmax.f32 %v2099, %v2100
    %v2102 = vrot.slane %v2101, 1
    %v2103 = vmax.f32 %v2101, %v2102
    %vm2104 = vcmask 1040384
    %v2105 = vsel %vm2104, %v2072, %v2082
    %v2106 = vsel %vm2104, %v2073, %v2089
    %v2107 = vsel %vm2104, %v2074, %v2096
    %v2108 = vsel %vm2104, %v2075, %v2103
    %2113 = vrot.lane.b32.xlu0 %v2105, 64
    %v2114 = vpop.permute.xlu0 %2113
    %2115 = vrot.lane.b32.xlu0 %v2106, 64
    %v2116 = vpop.permute.xlu0 %2115
    %2117 = vrot.lane.b32.xlu0 %v2107, 64
    %v2118 = vpop.permute.xlu0 %2117
    %2119 = vrot.lane.b32.xlu0 %v2108, 64
    %v2120 = vpop.permute.xlu0 %2119
    %v2121 = vsel %vm685, %v2114, %v2116
    %v2122 = vsel %vm685, %v2116, %v2118
    %v2123 = vsel %vm685, %v2118, %v2120
    %v2129 = vsel %vm685, 0.0, %v2114
    %v2130 = vsel %vm685, %v2120, 0.0
    %v2131 = vperm.slane %v41, 1
    %v2132 = vperm.slane %v42, 1
    %v2133 = vperm.slane %v43, 1
    %v2134 = vperm.slane %v44, 1
    %2139 = vrot.lane.b32.xlu0 %v2131, 61
    %v2140 = vpop.permute.xlu0 %2139
    %2141 = vrot.lane.b32.xlu0 %v2132, 61
    %v2142 = vpop.permute.xlu0 %2141
    %2143 = vrot.lane.b32.xlu0 %v2133, 61
    %v2144 = vpop.permute.xlu0 %2143
    %2145 = vrot.lane.b32.xlu0 %v2134, 61
    %v2146 = vpop.permute.xlu0 %2145
    %vm2147 = vcmask 498688
    %v2148 = vsel %vm2147, %v2140, %v2142
    %v2149 = vsel %vm2147, %v2142, %v2144
    %v2150 = vsel %vm2147, %v2144, %v2146
    %v2156 = vmul.f32 %v2129, %v2140
    %v2157 = vmul.f32 %v2121, %v2148
    %v2158 = vmul.f32 %v2122, %v2149
    %v2159 = vmul.f32 %v2123, %v2150
    %v2160 = vmul.f32 %v2130, %v2146
    %v2161 = vperm.slane %v41, 2
    %v2162 = vperm.slane %v42, 2
    %v2163 = vperm.slane %v43, 2
    %v2164 = vperm.slane %v44, 2
    %2169 = vrot.lane.b32.xlu0 %v2161, 62
    %v2170 = vpop.permute.xlu0 %2169
    %2171 = vrot.lane.b32.xlu0 %v2162, 62
    %v2172 = vpop.permute.xlu0 %2171
    %2173 = vrot.lane.b32.xlu0 %v2163, 62
    %v2174 = vpop.permute.xlu0 %2173
    %2175 = vrot.lane.b32.xlu0 %v2164, 62
    %v2176 = vpop.permute.xlu0 %2175
    %vm2177 = vcmask 506880
    %v2178 = vsel %vm2177, %v2170, %v2172
    %v2179 = vsel %vm2177, %v2172, %v2174
    %v2180 = vsel %vm2177, %v2174, %v2176
    %v2186 = vmul.f32 %v2129, %v2170
    %v2187 = vmul.f32 %v2121, %v2178
    %v2188 = vmul.f32 %v2122, %v2179
    %v2189 = vmul.f32 %v2123, %v2180
    %v2190 = vmul.f32 %v2130, %v2176
    %v2191 = vperm.slane %v41, 3
    %v2192 = vperm.slane %v42, 3
    %v2193 = vperm.slane %v43, 3
    %v2194 = vperm.slane %v44, 3
    %2199 = vrot.lane.b32.xlu0 %v2191, 63
    %v2200 = vpop.permute.xlu0 %2199
    %2201 = vrot.lane.b32.xlu0 %v2192, 63
    %v2202 = vpop.permute.xlu0 %2201
    %2203 = vrot.lane.b32.xlu0 %v2193, 63
    %v2204 = vpop.permute.xlu0 %2203
    %2205 = vrot.lane.b32.xlu0 %v2194, 63
    %v2206 = vpop.permute.xlu0 %2205
    %v2207 = vsel %vm527, %v2200, %v2202
    %v2208 = vsel %vm527, %v2202, %v2204
    %v2209 = vsel %vm527, %v2204, %v2206
    %v2215 = vmul.f32 %v2129, %v2200
    %v2216 = vmul.f32 %v2121, %v2207
    %v2217 = vmul.f32 %v2122, %v2208
    %v2218 = vmul.f32 %v2123, %v2209
    %v2219 = vmul.f32 %v2130, %v2206
    %v2220 = vperm.slane %v41, 4
    %v2221 = vperm.slane %v42, 4
    %v2222 = vperm.slane %v43, 4
    %v2223 = vperm.slane %v44, 4
    %2228 = vrot.lane.b32.xlu0 %v2220, 64
    %v2229 = vpop.permute.xlu0 %2228
    %2230 = vrot.lane.b32.xlu0 %v2221, 64
    %v2231 = vpop.permute.xlu0 %2230
    %2232 = vrot.lane.b32.xlu0 %v2222, 64
    %v2233 = vpop.permute.xlu0 %2232
    %2234 = vrot.lane.b32.xlu0 %v2223, 64
    %v2235 = vpop.permute.xlu0 %2234
    %v2236 = vsel %vm685, %v2229, %v2231
    %v2237 = vsel %vm685, %v2231, %v2233
    %v2238 = vsel %vm685, %v2233, %v2235
    %v2244 = vmul.f32 %v2129, %v2229
    %v2245 = vmul.f32 %v2121, %v2236
    %v2246 = vmul.f32 %v2122, %v2237
    %v2247 = vmul.f32 %v2123, %v2238
    %v2248 = vmul.f32 %v2130, %v2235
    %v2249 = vperm.slane %v41, 5
    %v2250 = vperm.slane %v42, 5
    %v2251 = vperm.slane %v43, 5
    %v2252 = vperm.slane %v44, 5
    %2257 = vrot.lane.b32.xlu0 %v2249, 65
    %v2258 = vpop.permute.xlu0 %2257
    %2259 = vrot.lane.b32.xlu0 %v2250, 65
    %v2260 = vpop.permute.xlu0 %2259
    %2261 = vrot.lane.b32.xlu0 %v2251, 65
    %v2262 = vpop.permute.xlu0 %2261
    %2263 = vrot.lane.b32.xlu0 %v2252, 65
    %v2264 = vpop.permute.xlu0 %2263
    %v2265 = vsel %vm843, %v2258, %v2260
    %v2266 = vsel %vm843, %v2260, %v2262
    %v2267 = vsel %vm843, %v2262, %v2264
    %v2273 = vmul.f32 %v2129, %v2258
    %v2274 = vmul.f32 %v2121, %v2265
    %v2275 = vmul.f32 %v2122, %v2266
    %v2276 = vmul.f32 %v2123, %v2267
    %v2277 = vmul.f32 %v2130, %v2264
    %v2278 = vperm.slane %v41, 6
    %v2279 = vperm.slane %v42, 6
    %v2280 = vperm.slane %v43, 6
    %v2281 = vperm.slane %v44, 6
    %2286 = vrot.lane.b32.xlu0 %v2278, 66
    %v2287 = vpop.permute.xlu0 %2286
    %2288 = vrot.lane.b32.xlu0 %v2279, 66
    %v2289 = vpop.permute.xlu0 %2288
    %2290 = vrot.lane.b32.xlu0 %v2280, 66
    %v2291 = vpop.permute.xlu0 %2290
    %2292 = vrot.lane.b32.xlu0 %v2281, 66
    %v2293 = vpop.permute.xlu0 %2292
    %vm2294 = vcmask 539648
    %v2295 = vsel %vm2294, %v2287, %v2289
    %v2296 = vsel %vm2294, %v2289, %v2291
    %v2297 = vsel %vm2294, %v2291, %v2293
    %v2303 = vmul.f32 %v2129, %v2287
    %v2304 = vmul.f32 %v2121, %v2295
    %v2305 = vmul.f32 %v2122, %v2296
    %v2306 = vmul.f32 %v2123, %v2297
    %v2307 = vmul.f32 %v2130, %v2293
    %v2308 = vperm.slane %v41, 7
    %v2309 = vperm.slane %v42, 7
    %v2310 = vperm.slane %v43, 7
    %v2311 = vperm.slane %v44, 7
    %2316 = vrot.lane.b32.xlu0 %v2308, 67
    %v2317 = vpop.permute.xlu0 %2316
    %2318 = vrot.lane.b32.xlu0 %v2309, 67
    %v2319 = vpop.permute.xlu0 %2318
    %2320 = vrot.lane.b32.xlu0 %v2310, 67
    %v2321 = vpop.permute.xlu0 %2320
    %2322 = vrot.lane.b32.xlu0 %v2311, 67
    %v2323 = vpop.permute.xlu0 %2322
    %vm2324 = vcmask 547840
    %v2325 = vsel %vm2324, %v2317, %v2319
    %v2326 = vsel %vm2324, %v2319, %v2321
    %v2327 = vsel %vm2324, %v2321, %v2323
    %v2333 = vmul.f32 %v2129, %v2317
    %v2334 = vmul.f32 %v2121, %v2325
    %v2335 = vmul.f32 %v2122, %v2326
    %v2336 = vmul.f32 %v2123, %v2327
    %v2337 = vmul.f32 %v2130, %v2323
    %v2343 = vrot.slane %v2186, 6
    %v2344 = vrot.slane %v2187, 6
    %v2345 = vrot.slane %v2188, 6
    %v2346 = vrot.slane %v2189, 6
    %v2347 = vrot.slane %v2190, 6
    %2348 = vrot.lane.b32.xlu0 %v2343, 127
    %v2349 = vpop.permute.xlu0 %2348
    %2350 = vrot.lane.b32.xlu0 %v2344, 127
    %v2351 = vpop.permute.xlu0 %2350
    %2352 = vrot.lane.b32.xlu0 %v2345, 127
    %v2353 = vpop.permute.xlu0 %2352
    %2354 = vrot.lane.b32.xlu0 %v2346, 127
    %v2355 = vpop.permute.xlu0 %2354
    %2356 = vrot.lane.b32.xlu0 %v2347, 127
    %v2357 = vpop.permute.xlu0 %2356
    %vm2358 = vcmask 1039360
    %v2359 = vsel %vm2358, %v2349, %v2351
    %v2360 = vsel %vm2358, %v2351, %v2353
    %v2361 = vsel %vm2358, %v2353, %v2355
    %v2362 = vsel %vm2358, %v2355, %v2357
    %v2373 = vrot.slane %v2215, 4
    %v2374 = vrot.slane %v2216, 4
    %v2375 = vrot.slane %v2217, 4
    %v2376 = vrot.slane %v2218, 4
    %v2377 = vrot.slane %v2219, 4
    %2378 = vrot.lane.b32.xlu0 %v2373, 126
    %v2379 = vpop.permute.xlu0 %2378
    %2380 = vrot.lane.b32.xlu0 %v2374, 126
    %v2381 = vpop.permute.xlu0 %2380
    %2382 = vrot.lane.b32.xlu0 %v2375, 126
    %v2383 = vpop.permute.xlu0 %2382
    %2384 = vrot.lane.b32.xlu0 %v2376, 126
    %v2385 = vpop.permute.xlu0 %2384
    %2386 = vrot.lane.b32.xlu0 %v2377, 126
    %v2387 = vpop.permute.xlu0 %2386
    %vm2388 = vcmask 1031168
    %v2389 = vsel %vm2388, %v2379, %v2381
    %v2390 = vsel %vm2388, %v2381, %v2383
    %v2391 = vsel %vm2388, %v2383, %v2385
    %v2392 = vsel %vm2388, %v2385, %v2387
    %v2403 = vrot.slane %v2244, 2
    %v2404 = vrot.slane %v2245, 2
    %v2405 = vrot.slane %v2246, 2
    %v2406 = vrot.slane %v2247, 2
    %v2407 = vrot.slane %v2248, 2
    %2408 = vrot.lane.b32.xlu0 %v2403, 125
    %v2409 = vpop.permute.xlu0 %2408
    %2410 = vrot.lane.b32.xlu0 %v2404, 125
    %v2411 = vpop.permute.xlu0 %2410
    %2412 = vrot.lane.b32.xlu0 %v2405, 125
    %v2413 = vpop.permute.xlu0 %2412
    %2414 = vrot.lane.b32.xlu0 %v2406, 125
    %v2415 = vpop.permute.xlu0 %2414
    %2416 = vrot.lane.b32.xlu0 %v2407, 125
    %v2417 = vpop.permute.xlu0 %2416
    %vm2418 = vcmask 1022976
    %v2419 = vsel %vm2418, %v2409, %v2411
    %v2420 = vsel %vm2418, %v2411, %v2413
    %v2421 = vsel %vm2418, %v2413, %v2415
    %v2422 = vsel %vm2418, %v2415, %v2417
    %2433 = vrot.lane.b32.xlu0 %v2273, 124
    %v2434 = vpop.permute.xlu0 %2433
    %2435 = vrot.lane.b32.xlu0 %v2274, 124
    %v2436 = vpop.permute.xlu0 %2435
    %2437 = vrot.lane.b32.xlu0 %v2275, 124
    %v2438 = vpop.permute.xlu0 %2437
    %2439 = vrot.lane.b32.xlu0 %v2276, 124
    %v2440 = vpop.permute.xlu0 %2439
    %2441 = vrot.lane.b32.xlu0 %v2277, 124
    %v2442 = vpop.permute.xlu0 %2441
    %vm2443 = vcmask 1014784
    %v2444 = vsel %vm2443, %v2434, %v2436
    %v2445 = vsel %vm2443, %v2436, %v2438
    %v2446 = vsel %vm2443, %v2438, %v2440
    %v2447 = vsel %vm2443, %v2440, %v2442
    %v2458 = vrot.slane %v2303, 6
    %v2459 = vrot.slane %v2304, 6
    %v2460 = vrot.slane %v2305, 6
    %v2461 = vrot.slane %v2306, 6
    %v2462 = vrot.slane %v2307, 6
    %2463 = vrot.lane.b32.xlu0 %v2458, 123
    %v2464 = vpop.permute.xlu0 %2463
    %2465 = vrot.lane.b32.xlu0 %v2459, 123
    %v2466 = vpop.permute.xlu0 %2465
    %2467 = vrot.lane.b32.xlu0 %v2460, 123
    %v2468 = vpop.permute.xlu0 %2467
    %2469 = vrot.lane.b32.xlu0 %v2461, 123
    %v2470 = vpop.permute.xlu0 %2469
    %2471 = vrot.lane.b32.xlu0 %v2462, 123
    %v2472 = vpop.permute.xlu0 %2471
    %vm2473 = vcmask 1006592
    %v2474 = vsel %vm2473, %v2464, %v2466
    %v2475 = vsel %vm2473, %v2466, %v2468
    %v2476 = vsel %vm2473, %v2468, %v2470
    %v2477 = vsel %vm2473, %v2470, %v2472
    %v2488 = vrot.slane %v2333, 4
    %v2489 = vrot.slane %v2334, 4
    %v2490 = vrot.slane %v2335, 4
    %v2491 = vrot.slane %v2336, 4
    %v2492 = vrot.slane %v2337, 4
    %2493 = vrot.lane.b32.xlu0 %v2488, 122
    %v2494 = vpop.permute.xlu0 %2493
    %2495 = vrot.lane.b32.xlu0 %v2489, 122
    %v2496 = vpop.permute.xlu0 %2495
    %2497 = vrot.lane.b32.xlu0 %v2490, 122
    %v2498 = vpop.permute.xlu0 %2497
    %2499 = vrot.lane.b32.xlu0 %v2491, 122
    %v2500 = vpop.permute.xlu0 %2499
    %2501 = vrot.lane.b32.xlu0 %v2492, 122
    %v2502 = vpop.permute.xlu0 %2501
    %vm2503 = vcmask 998400
    %v2504 = vsel %vm2503, %v2494, %v2496
    %v2505 = vsel %vm2503, %v2496, %v2498
    %v2506 = vsel %vm2503, %v2498, %v2500
    %v2507 = vsel %vm2503, %v2500, %v2502
    %v2513 = vsel %vm186, %v2156, %v2359
    %v2514 = vsel %vm186, %v2157, %v2360
    %v2515 = vsel %vm186, %v2158, %v2361
    %v2516 = vsel %vm186, %v2159, %v2362
    %v2517 = vsel %vm186, %v2160, %v2357
    %v2518 = vsel %vm59, %v2513, %v2389
    %v2519 = vsel %vm59, %v2514, %v2390
    %v2520 = vsel %vm59, %v2515, %v2391
    %v2521 = vsel %vm59, %v2516, %v2392
    %v2522 = vsel %vm59, %v2517, %v2387
    %vm2523 = vcmask 1045504
    %v2524 = vsel %vm2523, %v2518, %v2419
    %v2525 = vsel %vm2523, %v2519, %v2420
    %v2526 = vsel %vm2523, %v2520, %v2421
    %v2527 = vsel %vm2523, %v2521, %v2422
    %v2528 = vsel %vm2523, %v2522, %v2417
    %v2529 = vsel %vm186, %v2444, %v2474
    %v2530 = vsel %vm186, %v2445, %v2475
    %v2531 = vsel %vm186, %v2446, %v2476
    %v2532 = vsel %vm186, %v2447, %v2477
    %v2533 = vsel %vm186, %v2442, %v2472
    %v2534 = vsel %vm59, %v2529, %v2504
    %v2535 = vsel %vm59, %v2530, %v2505
    %v2536 = vsel %vm59, %v2531, %v2506
    %v2537 = vsel %vm59, %v2532, %v2507
    %v2538 = vsel %vm59, %v2533, %v2502
    %2549 = vrot.lane.b32.xlu0 %v2524, 3
    %v2550 = vpop.permute.xlu0 %2549
    %2551 = vrot.lane.b32.xlu0 %v2525, 3
    %v2552 = vpop.permute.xlu0 %2551
    %2553 = vrot.lane.b32.xlu0 %v2526, 3
    %v2554 = vpop.permute.xlu0 %2553
    %2555 = vrot.lane.b32.xlu0 %v2527, 3
    %v2556 = vpop.permute.xlu0 %2555
    %2557 = vrot.lane.b32.xlu0 %v2528, 3
    %v2558 = vpop.permute.xlu0 %2557
    %2559 = vrot.lane.b32.xlu0 %v2534, 3
    %v2560 = vpop.permute.xlu0 %2559
    %2561 = vrot.lane.b32.xlu0 %v2535, 3
    %v2562 = vpop.permute.xlu0 %2561
    %2563 = vrot.lane.b32.xlu0 %v2536, 3
    %v2564 = vpop.permute.xlu0 %2563
    %2565 = vrot.lane.b32.xlu0 %v2537, 3
    %v2566 = vpop.permute.xlu0 %2565
    %2567 = vrot.lane.b32.xlu0 %v2538, 3
    %v2568 = vpop.permute.xlu0 %2567
    %vm2569 = vcmask 23552
    %v2570 = vsel %vm2569, %v2550, %v2552
    %v2571 = vsel %vm2569, %v2552, %v2554
    %v2572 = vsel %vm2569, %v2554, %v2556
    %v2573 = vsel %vm2569, %v2556, %v2558
    %v2574 = vsel %vm2569, %v2560, %v2562
    %v2575 = vsel %vm2569, %v2562, %v2564
    %v2576 = vsel %vm2569, %v2564, %v2566
    %v2577 = vsel %vm2569, %v2566, %v2568
    %v2582 = vsel %vm685, 0.0, %v2550
    %v2583 = vsel %vm685, 0.0, %v2560
    %v2584 = vsel %vm685, %v2573, 0.0
    %v2585 = vsel %vm685, %v2577, 0.0
    %v2586 = vld [vmem:[%s6] sm:$0x7f]
    %2591 = vrot.lane.b32.xlu0 %v2582, 112
    %v2592 = vpop.permute.xlu0 %2591
    %2593 = vrot.lane.b32.xlu0 %v2570, 112
    %v2594 = vpop.permute.xlu0 %2593
    %2595 = vrot.lane.b32.xlu0 %v2571, 112
    %v2596 = vpop.permute.xlu0 %2595
    %2597 = vrot.lane.b32.xlu0 %v2572, 112
    %v2598 = vpop.permute.xlu0 %2597
    %2599 = vrot.lane.b32.xlu0 %v2584, 112
    %v2600 = vpop.permute.xlu0 %2599
    %2601 = vrot.lane.b32.xlu0 %v2583, 112
    %v2602 = vpop.permute.xlu0 %2601
    %2603 = vrot.lane.b32.xlu0 %v2574, 112
    %v2604 = vpop.permute.xlu0 %2603
    %2605 = vrot.lane.b32.xlu0 %v2575, 112
    %v2606 = vpop.permute.xlu0 %2605
    %2607 = vrot.lane.b32.xlu0 %v2576, 112
    %v2608 = vpop.permute.xlu0 %2607
    %2609 = vrot.lane.b32.xlu0 %v2585, 112
    %v2610 = vpop.permute.xlu0 %2609
    %vm2611 = vcmask 916480
    %v2612 = vsel %vm2611, %v2592, %v2594
    %v2613 = vsel %vm2611, %v2594, %v2596
    %v2614 = vsel %vm2611, %v2596, %v2598
    %v2615 = vsel %vm2611, %v2598, %v2600
    %v2616 = vsel %vm2611, %v2602, %v2604
    %v2617 = vsel %vm2611, %v2604, %v2606
    %v2618 = vsel %vm2611, %v2606, %v2608
    %v2619 = vsel %vm2611, %v2608, %v2610
    %vm2624 = vcmask 113664
    %v2626 = vsel %vm2624, %v2586, 0
    %v2628 = vsel %vm2523, %v2616, 0
    %v2630 = vsel %vm2523, %v2617, 0
    %v2632 = vsel %vm2523, %v2618, 0
    %v2634 = vsel %vm2523, %v2619, 0
    %2636 = vmatpush.msra.mxu0 0.0
    %2637 = vmatpush.msra.mxu0 0.0
    %2638 = vmatpush.msra.mxu0 0.0
    %2639 = vmatpush.msra.mxu0 0.0
    %2640 = vmatpush.msra.mxu0 0.0
    %2641 = vmatpush.msra.mxu0 0.0
    %2642 = vmatpush.msra.mxu0 0.0
    %2643 = vmatpush.msra.mxu0 0.0
    %2644 = vmatpush.msra.mxu0 0.0
    %2645 = vmatpush.msra.mxu0 0.0
    %2646 = vmatpush.msra.mxu0 0.0
    %2647 = vmatpush.msra.mxu0 0.0
    %2648 = vmatpush.msra.mxu0 0.0
    %2649 = vmatpush.msra.mxu0 0.0
    %2650 = vmatpush.msra.mxu0 %v2628
    %2651 = vmatpush.msra.mxu0 %v2612
    %2652 = vmatmul.f32.gmra.mxu0 %v2626
    %v2653 = vpop.f32.mrf.mxu0
    %v2654 = vadd.f32 0.0, %v2653
    %2655 = vdwg.mxu0
    %2656 = vmatpush.msra.mxu0 0.0
    %2657 = vmatpush.msra.mxu0 0.0
    %2658 = vmatpush.msra.mxu0 0.0
    %2659 = vmatpush.msra.mxu0 0.0
    %2660 = vmatpush.msra.mxu0 0.0
    %2661 = vmatpush.msra.mxu0 0.0
    %2662 = vmatpush.msra.mxu0 0.0
    %2663 = vmatpush.msra.mxu0 0.0
    %2664 = vmatpush.msra.mxu0 0.0
    %2665 = vmatpush.msra.mxu0 0.0
    %2666 = vmatpush.msra.mxu0 0.0
    %2667 = vmatpush.msra.mxu0 0.0
    %2668 = vmatpush.msra.mxu0 0.0
    %2669 = vmatpush.msra.mxu0 0.0
    %2670 = vmatpush.msra.mxu0 %v2630
    %2671 = vmatpush.msra.mxu0 %v2613
    %2672 = vmatmul.f32.gmra.mxu0 %v2626
    %v2673 = vpop.f32.mrf.mxu0
    %v2674 = vadd.f32 0.0, %v2673
    %2675 = vdwg.mxu0
    %2676 = vmatpush.msra.mxu0 0.0
    %2677 = vmatpush.msra.mxu0 0.0
    %2678 = vmatpush.msra.mxu0 0.0
    %2679 = vmatpush.msra.mxu0 0.0
    %2680 = vmatpush.msra.mxu0 0.0
    %2681 = vmatpush.msra.mxu0 0.0
    %2682 = vmatpush.msra.mxu0 0.0
    %2683 = vmatpush.msra.mxu0 0.0
    %2684 = vmatpush.msra.mxu0 0.0
    %2685 = vmatpush.msra.mxu0 0.0
    %2686 = vmatpush.msra.mxu0 0.0
    %2687 = vmatpush.msra.mxu0 0.0
    %2688 = vmatpush.msra.mxu0 0.0
    %2689 = vmatpush.msra.mxu0 0.0
    %2690 = vmatpush.msra.mxu0 %v2632
    %2691 = vmatpush.msra.mxu0 %v2614
    %2692 = vmatmul.f32.gmra.mxu0 %v2626
    %v2693 = vpop.f32.mrf.mxu0
    %v2694 = vadd.f32 0.0, %v2693
    %2695 = vdwg.mxu0
    %2696 = vmatpush.msra.mxu0 0.0
    %2697 = vmatpush.msra.mxu0 0.0
    %2698 = vmatpush.msra.mxu0 0.0
    %2699 = vmatpush.msra.mxu0 0.0
    %2700 = vmatpush.msra.mxu0 0.0
    %2701 = vmatpush.msra.mxu0 0.0
    %2702 = vmatpush.msra.mxu0 0.0
    %2703 = vmatpush.msra.mxu0 0.0
    %2704 = vmatpush.msra.mxu0 0.0
    %2705 = vmatpush.msra.mxu0 0.0
    %2706 = vmatpush.msra.mxu0 0.0
    %2707 = vmatpush.msra.mxu0 0.0
    %2708 = vmatpush.msra.mxu0 0.0
    %2709 = vmatpush.msra.mxu0 0.0
    %2710 = vmatpush.msra.mxu0 %v2634
    %2711 = vmatpush.msra.mxu0 %v2615
    %2712 = vmatmul.f32.gmra.mxu0 %v2626
    %v2713 = vpop.f32.mrf.mxu0
    %v2714 = vadd.f32 0.0, %v2713
    %2715 = vdwg.mxu0
    %v2716 = vmul.f32 %v2654, %v45
    %v2717 = vmul.f32 %v2674, %v46
    %v2718 = vmul.f32 %v2694, %v47
    %v2719 = vmul.f32 %v2714, %v48
    %v2720 = vadd.f32 %v2716, 0.0
    %v2721 = vadd.f32 %v2717, 0.0
    %v2722 = vadd.f32 %v2718, 0.0
    %v2723 = vadd.f32 %v2719, 0.0
    %v2724 = vrot.slane %v2586, 1
    %2725 = vrot.lane.b32.xlu0 %v2582, 96
    %v2726 = vpop.permute.xlu0 %2725
    %2727 = vrot.lane.b32.xlu0 %v2570, 96
    %v2728 = vpop.permute.xlu0 %2727
    %2729 = vrot.lane.b32.xlu0 %v2571, 96
    %v2730 = vpop.permute.xlu0 %2729
    %2731 = vrot.lane.b32.xlu0 %v2572, 96
    %v2732 = vpop.permute.xlu0 %2731
    %2733 = vrot.lane.b32.xlu0 %v2584, 96
    %v2734 = vpop.permute.xlu0 %2733
    %2735 = vrot.lane.b32.xlu0 %v2583, 96
    %v2736 = vpop.permute.xlu0 %2735
    %2737 = vrot.lane.b32.xlu0 %v2574, 96
    %v2738 = vpop.permute.xlu0 %2737
    %2739 = vrot.lane.b32.xlu0 %v2575, 96
    %v2740 = vpop.permute.xlu0 %2739
    %2741 = vrot.lane.b32.xlu0 %v2576, 96
    %v2742 = vpop.permute.xlu0 %2741
    %2743 = vrot.lane.b32.xlu0 %v2585, 96
    %v2744 = vpop.permute.xlu0 %2743
    %vm2745 = vcmask 785408
    %v2746 = vsel %vm2745, %v2726, %v2728
    %v2747 = vsel %vm2745, %v2728, %v2730
    %v2748 = vsel %vm2745, %v2730, %v2732
    %v2749 = vsel %vm2745, %v2732, %v2734
    %v2750 = vsel %vm2745, %v2736, %v2738
    %v2751 = vsel %vm2745, %v2738, %v2740
    %v2752 = vsel %vm2745, %v2740, %v2742
    %v2753 = vsel %vm2745, %v2742, %v2744
    %v2758 = vsel %vm2624, %v2724, 0
    %v2760 = vsel %vm2523, %v2750, 0
    %v2762 = vsel %vm2523, %v2751, 0
    %v2764 = vsel %vm2523, %v2752, 0
    %v2766 = vsel %vm2523, %v2753, 0
    %2768 = vmatpush.msra.mxu0 0.0
    %2769 = vmatpush.msra.mxu0 0.0
    %2770 = vmatpush.msra.mxu0 0.0
    %2771 = vmatpush.msra.mxu0 0.0
    %2772 = vmatpush.msra.mxu0 0.0
    %2773 = vmatpush.msra.mxu0 0.0
    %2774 = vmatpush.msra.mxu0 0.0
    %2775 = vmatpush.msra.mxu0 0.0
    %2776 = vmatpush.msra.mxu0 0.0
    %2777 = vmatpush.msra.mxu0 0.0
    %2778 = vmatpush.msra.mxu0 0.0
    %2779 = vmatpush.msra.mxu0 0.0
    %2780 = vmatpush.msra.mxu0 0.0
    %2781 = vmatpush.msra.mxu0 0.0
    %2782 = vmatpush.msra.mxu0 %v2760
    %2783 = vmatpush.msra.mxu0 %v2746
    %2784 = vmatmul.f32.gmra.mxu0 %v2758
    %v2785 = vpop.f32.mrf.mxu0
    %v2786 = vadd.f32 0.0, %v2785
    %2787 = vdwg.mxu0
    %2788 = vmatpush.msra.mxu0 0.0
    %2789 = vmatpush.msra.mxu0 0.0
    %2790 = vmatpush.msra.mxu0 0.0
    %2791 = vmatpush.msra.mxu0 0.0
    %2792 = vmatpush.msra.mxu0 0.0
    %2793 = vmatpush.msra.mxu0 0.0
    %2794 = vmatpush.msra.mxu0 0.0
    %2795 = vmatpush.msra.mxu0 0.0
    %2796 = vmatpush.msra.mxu0 0.0
    %2797 = vmatpush.msra.mxu0 0.0
    %2798 = vmatpush.msra.mxu0 0.0
    %2799 = vmatpush.msra.mxu0 0.0
    %2800 = vmatpush.msra.mxu0 0.0
    %2801 = vmatpush.msra.mxu0 0.0
    %2802 = vmatpush.msra.mxu0 %v2762
    %2803 = vmatpush.msra.mxu0 %v2747
    %2804 = vmatmul.f32.gmra.mxu0 %v2758
    %v2805 = vpop.f32.mrf.mxu0
    %v2806 = vadd.f32 0.0, %v2805
    %2807 = vdwg.mxu0
    %2808 = vmatpush.msra.mxu0 0.0
    %2809 = vmatpush.msra.mxu0 0.0
    %2810 = vmatpush.msra.mxu0 0.0
    %2811 = vmatpush.msra.mxu0 0.0
    %2812 = vmatpush.msra.mxu0 0.0
    %2813 = vmatpush.msra.mxu0 0.0
    %2814 = vmatpush.msra.mxu0 0.0
    %2815 = vmatpush.msra.mxu0 0.0
    %2816 = vmatpush.msra.mxu0 0.0
    %2817 = vmatpush.msra.mxu0 0.0
    %2818 = vmatpush.msra.mxu0 0.0
    %2819 = vmatpush.msra.mxu0 0.0
    %2820 = vmatpush.msra.mxu0 0.0
    %2821 = vmatpush.msra.mxu0 0.0
    %2822 = vmatpush.msra.mxu0 %v2764
    %2823 = vmatpush.msra.mxu0 %v2748
    %2824 = vmatmul.f32.gmra.mxu0 %v2758
    %v2825 = vpop.f32.mrf.mxu0
    %v2826 = vadd.f32 0.0, %v2825
    %2827 = vdwg.mxu0
    %2828 = vmatpush.msra.mxu0 0.0
    %2829 = vmatpush.msra.mxu0 0.0
    %2830 = vmatpush.msra.mxu0 0.0
    %2831 = vmatpush.msra.mxu0 0.0
    %2832 = vmatpush.msra.mxu0 0.0
    %2833 = vmatpush.msra.mxu0 0.0
    %2834 = vmatpush.msra.mxu0 0.0
    %2835 = vmatpush.msra.mxu0 0.0
    %2836 = vmatpush.msra.mxu0 0.0
    %2837 = vmatpush.msra.mxu0 0.0
    %2838 = vmatpush.msra.mxu0 0.0
    %2839 = vmatpush.msra.mxu0 0.0
    %2840 = vmatpush.msra.mxu0 0.0
    %2841 = vmatpush.msra.mxu0 0.0
    %2842 = vmatpush.msra.mxu0 %v2766
    %2843 = vmatpush.msra.mxu0 %v2749
    %2844 = vmatmul.f32.gmra.mxu0 %v2758
    %v2845 = vpop.f32.mrf.mxu0
    %v2846 = vadd.f32 0.0, %v2845
    %2847 = vdwg.mxu0
    %v2852 = vrot.slane %v45, 1
    %v2853 = vrot.slane %v46, 1
    %v2854 = vrot.slane %v47, 1
    %v2855 = vrot.slane %v48, 1
    %v2860 = vmul.f32 %v2786, %v2852
    %v2861 = vmul.f32 %v2806, %v2853
    %v2862 = vmul.f32 %v2826, %v2854
    %v2863 = vmul.f32 %v2846, %v2855
    %v2864 = vadd.f32 %v2720, %v2860
    %v2865 = vadd.f32 %v2721, %v2861
    %v2866 = vadd.f32 %v2722, %v2862
    %v2867 = vadd.f32 %v2723, %v2863
    %v2868 = vrot.slane %v2586, 2
    %2869 = vrot.lane.b32.xlu0 %v2582, 80
    %v2870 = vpop.permute.xlu0 %2869
    %2871 = vrot.lane.b32.xlu0 %v2570, 80
    %v2872 = vpop.permute.xlu0 %2871
    %2873 = vrot.lane.b32.xlu0 %v2571, 80
    %v2874 = vpop.permute.xlu0 %2873
    %2875 = vrot.lane.b32.xlu0 %v2572, 80
    %v2876 = vpop.permute.xlu0 %2875
    %2877 = vrot.lane.b32.xlu0 %v2584, 80
    %v2878 = vpop.permute.xlu0 %2877
    %2879 = vrot.lane.b32.xlu0 %v2583, 80
    %v2880 = vpop.permute.xlu0 %2879
    %2881 = vrot.lane.b32.xlu0 %v2574, 80
    %v2882 = vpop.permute.xlu0 %2881
    %2883 = vrot.lane.b32.xlu0 %v2575, 80
    %v2884 = vpop.permute.xlu0 %2883
    %2885 = vrot.lane.b32.xlu0 %v2576, 80
    %v2886 = vpop.permute.xlu0 %2885
    %2887 = vrot.lane.b32.xlu0 %v2585, 80
    %v2888 = vpop.permute.xlu0 %2887
    %v2889 = vsel %vm1159, %v2870, %v2872
    %v2890 = vsel %vm1159, %v2872, %v2874
    %v2891 = vsel %vm1159, %v2874, %v2876
    %v2892 = vsel %vm1159, %v2876, %v2878
    %v2893 = vsel %vm1159, %v2880, %v2882
    %v2894 = vsel %vm1159, %v2882, %v2884
    %v2895 = vsel %vm1159, %v2884, %v2886
    %v2896 = vsel %vm1159, %v2886, %v2888
    %v2901 = vsel %vm2624, %v2868, 0
    %v2903 = vsel %vm2523, %v2893, 0
    %v2905 = vsel %vm2523, %v2894, 0
    %v2907 = vsel %vm2523, %v2895, 0
    %v2909 = vsel %vm2523, %v2896, 0
    %2911 = vmatpush.msra.mxu0 0.0
    %2912 = vmatpush.msra.mxu0 0.0
    %2913 = vmatpush.msra.mxu0 0.0
    %2914 = vmatpush.msra.mxu0 0.0
    %2915 = vmatpush.msra.mxu0 0.0
    %2916 = vmatpush.msra.mxu0 0.0
    %2917 = vmatpush.msra.mxu0 0.0
    %2918 = vmatpush.msra.mxu0 0.0
    %2919 = vmatpush.msra.mxu0 0.0
    %2920 = vmatpush.msra.mxu0 0.0
    %2921 = vmatpush.msra.mxu0 0.0
    %2922 = vmatpush.msra.mxu0 0.0
    %2923 = vmatpush.msra.mxu0 0.0
    %2924 = vmatpush.msra.mxu0 0.0
    %2925 = vmatpush.msra.mxu0 %v2903
    %2926 = vmatpush.msra.mxu0 %v2889
    %2927 = vmatmul.f32.gmra.mxu0 %v2901
    %v2928 = vpop.f32.mrf.mxu0
    %v2929 = vadd.f32 0.0, %v2928
    %2930 = vdwg.mxu0
    %2931 = vmatpush.msra.mxu0 0.0
    %2932 = vmatpush.msra.mxu0 0.0
    %2933 = vmatpush.msra.mxu0 0.0
    %2934 = vmatpush.msra.mxu0 0.0
    %2935 = vmatpush.msra.mxu0 0.0
    %2936 = vmatpush.msra.mxu0 0.0
    %2937 = vmatpush.msra.mxu0 0.0
    %2938 = vmatpush.msra.mxu0 0.0
    %2939 = vmatpush.msra.mxu0 0.0
    %2940 = vmatpush.msra.mxu0 0.0
    %2941 = vmatpush.msra.mxu0 0.0
    %2942 = vmatpush.msra.mxu0 0.0
    %2943 = vmatpush.msra.mxu0 0.0
    %2944 = vmatpush.msra.mxu0 0.0
    %2945 = vmatpush.msra.mxu0 %v2905
    %2946 = vmatpush.msra.mxu0 %v2890
    %2947 = vmatmul.f32.gmra.mxu0 %v2901
    %v2948 = vpop.f32.mrf.mxu0
    %v2949 = vadd.f32 0.0, %v2948
    %2950 = vdwg.mxu0
    %2951 = vmatpush.msra.mxu0 0.0
    %2952 = vmatpush.msra.mxu0 0.0
    %2953 = vmatpush.msra.mxu0 0.0
    %2954 = vmatpush.msra.mxu0 0.0
    %2955 = vmatpush.msra.mxu0 0.0
    %2956 = vmatpush.msra.mxu0 0.0
    %2957 = vmatpush.msra.mxu0 0.0
    %2958 = vmatpush.msra.mxu0 0.0
    %2959 = vmatpush.msra.mxu0 0.0
    %2960 = vmatpush.msra.mxu0 0.0
    %2961 = vmatpush.msra.mxu0 0.0
    %2962 = vmatpush.msra.mxu0 0.0
    %2963 = vmatpush.msra.mxu0 0.0
    %2964 = vmatpush.msra.mxu0 0.0
    %2965 = vmatpush.msra.mxu0 %v2907
    %2966 = vmatpush.msra.mxu0 %v2891
    %2967 = vmatmul.f32.gmra.mxu0 %v2901
    %v2968 = vpop.f32.mrf.mxu0
    %v2969 = vadd.f32 0.0, %v2968
    %2970 = vdwg.mxu0
    %2971 = vmatpush.msra.mxu0 0.0
    %2972 = vmatpush.msra.mxu0 0.0
    %2973 = vmatpush.msra.mxu0 0.0
    %2974 = vmatpush.msra.mxu0 0.0
    %2975 = vmatpush.msra.mxu0 0.0
    %2976 = vmatpush.msra.mxu0 0.0
    %2977 = vmatpush.msra.mxu0 0.0
    %2978 = vmatpush.msra.mxu0 0.0
    %2979 = vmatpush.msra.mxu0 0.0
    %2980 = vmatpush.msra.mxu0 0.0
    %2981 = vmatpush.msra.mxu0 0.0
    %2982 = vmatpush.msra.mxu0 0.0
    %2983 = vmatpush.msra.mxu0 0.0
    %2984 = vmatpush.msra.mxu0 0.0
    %2985 = vmatpush.msra.mxu0 %v2909
    %2986 = vmatpush.msra.mxu0 %v2892
    %2987 = vmatmul.f32.gmra.mxu0 %v2901
    %v2988 = vpop.f32.mrf.mxu0
    %v2989 = vadd.f32 0.0, %v2988
    %2990 = vdwg.mxu0
    %v2991 = vrot.slane %v45, 2
    %v2992 = vrot.slane %v46, 2
    %v2993 = vrot.slane %v47, 2
    %v2994 = vrot.slane %v48, 2
    %v2999 = vmul.f32 %v2929, %v2991
    %v3000 = vmul.f32 %v2949, %v2992
    %v3001 = vmul.f32 %v2969, %v2993
    %v3002 = vmul.f32 %v2989, %v2994
    %v3003 = vadd.f32 %v2864, %v2999
    %v3004 = vadd.f32 %v2865, %v3000
    %v3005 = vadd.f32 %v2866, %v3001
    %v3006 = vadd.f32 %v2867, %v3002
    %v3007 = vrot.slane %v2586, 3
    %3008 = vrot.lane.b32.xlu0 %v2582, 64
    %v3009 = vpop.permute.xlu0 %3008
    %3010 = vrot.lane.b32.xlu0 %v2570, 64
    %v3011 = vpop.permute.xlu0 %3010
    %3012 = vrot.lane.b32.xlu0 %v2571, 64
    %v3013 = vpop.permute.xlu0 %3012
    %3014 = vrot.lane.b32.xlu0 %v2572, 64
    %v3015 = vpop.permute.xlu0 %3014
    %3016 = vrot.lane.b32.xlu0 %v2584, 64
    %v3017 = vpop.permute.xlu0 %3016
    %3018 = vrot.lane.b32.xlu0 %v2583, 64
    %v3019 = vpop.permute.xlu0 %3018
    %3020 = vrot.lane.b32.xlu0 %v2574, 64
    %v3021 = vpop.permute.xlu0 %3020
    %3022 = vrot.lane.b32.xlu0 %v2575, 64
    %v3023 = vpop.permute.xlu0 %3022
    %3024 = vrot.lane.b32.xlu0 %v2576, 64
    %v3025 = vpop.permute.xlu0 %3024
    %3026 = vrot.lane.b32.xlu0 %v2585, 64
    %v3027 = vpop.permute.xlu0 %3026
    %v3028 = vsel %vm685, %v3009, %v3011
    %v3029 = vsel %vm685, %v3011, %v3013
    %v3030 = vsel %vm685, %v3013, %v3015
    %v3031 = vsel %vm685, %v3015, %v3017
    %v3032 = vsel %vm685, %v3019, %v3021
    %v3033 = vsel %vm685, %v3021, %v3023
    %v3034 = vsel %vm685, %v3023, %v3025
    %v3035 = vsel %vm685, %v3025, %v3027
    %v3040 = vsel %vm2624, %v3007, 0
    %v3042 = vsel %vm2523, %v3032, 0
    %v3044 = vsel %vm2523, %v3033, 0
    %v3046 = vsel %vm2523, %v3034, 0
    %v3048 = vsel %vm2523, %v3035, 0
    %3050 = vmatpush.msra.mxu0 0.0
    %3051 = vmatpush.msra.mxu0 0.0
    %3052 = vmatpush.msra.mxu0 0.0
    %3053 = vmatpush.msra.mxu0 0.0
    %3054 = vmatpush.msra.mxu0 0.0
    %3055 = vmatpush.msra.mxu0 0.0
    %3056 = vmatpush.msra.mxu0 0.0
    %3057 = vmatpush.msra.mxu0 0.0
    %3058 = vmatpush.msra.mxu0 0.0
    %3059 = vmatpush.msra.mxu0 0.0
    %3060 = vmatpush.msra.mxu0 0.0
    %3061 = vmatpush.msra.mxu0 0.0
    %3062 = vmatpush.msra.mxu0 0.0
    %3063 = vmatpush.msra.mxu0 0.0
    %3064 = vmatpush.msra.mxu0 %v3042
    %3065 = vmatpush.msra.mxu0 %v3028
    %3066 = vmatmul.f32.gmra.mxu0 %v3040
    %v3067 = vpop.f32.mrf.mxu0
    %v3068 = vadd.f32 0.0, %v3067
    %3069 = vdwg.mxu0
    %3070 = vmatpush.msra.mxu0 0.0
    %3071 = vmatpush.msra.mxu0 0.0
    %3072 = vmatpush.msra.mxu0 0.0
    %3073 = vmatpush.msra.mxu0 0.0
    %3074 = vmatpush.msra.mxu0 0.0
    %3075 = vmatpush.msra.mxu0 0.0
    %3076 = vmatpush.msra.mxu0 0.0
    %3077 = vmatpush.msra.mxu0 0.0
    %3078 = vmatpush.msra.mxu0 0.0
    %3079 = vmatpush.msra.mxu0 0.0
    %3080 = vmatpush.msra.mxu0 0.0
    %3081 = vmatpush.msra.mxu0 0.0
    %3082 = vmatpush.msra.mxu0 0.0
    %3083 = vmatpush.msra.mxu0 0.0
    %3084 = vmatpush.msra.mxu0 %v3044
    %3085 = vmatpush.msra.mxu0 %v3029
    %3086 = vmatmul.f32.gmra.mxu0 %v3040
    %v3087 = vpop.f32.mrf.mxu0
    %v3088 = vadd.f32 0.0, %v3087
    %3089 = vdwg.mxu0
    %3090 = vmatpush.msra.mxu0 0.0
    %3091 = vmatpush.msra.mxu0 0.0
    %3092 = vmatpush.msra.mxu0 0.0
    %3093 = vmatpush.msra.mxu0 0.0
    %3094 = vmatpush.msra.mxu0 0.0
    %3095 = vmatpush.msra.mxu0 0.0
    %3096 = vmatpush.msra.mxu0 0.0
    %3097 = vmatpush.msra.mxu0 0.0
    %3098 = vmatpush.msra.mxu0 0.0
    %3099 = vmatpush.msra.mxu0 0.0
    %3100 = vmatpush.msra.mxu0 0.0
    %3101 = vmatpush.msra.mxu0 0.0
    %3102 = vmatpush.msra.mxu0 0.0
    %3103 = vmatpush.msra.mxu0 0.0
    %3104 = vmatpush.msra.mxu0 %v3046
    %3105 = vmatpush.msra.mxu0 %v3030
    %3106 = vmatmul.f32.gmra.mxu0 %v3040
    %v3107 = vpop.f32.mrf.mxu0
    %v3108 = vadd.f32 0.0, %v3107
    %3109 = vdwg.mxu0
    %3110 = vmatpush.msra.mxu0 0.0
    %3111 = vmatpush.msra.mxu0 0.0
    %3112 = vmatpush.msra.mxu0 0.0
    %3113 = vmatpush.msra.mxu0 0.0
    %3114 = vmatpush.msra.mxu0 0.0
    %3115 = vmatpush.msra.mxu0 0.0
    %3116 = vmatpush.msra.mxu0 0.0
    %3117 = vmatpush.msra.mxu0 0.0
    %3118 = vmatpush.msra.mxu0 0.0
    %3119 = vmatpush.msra.mxu0 0.0
    %3120 = vmatpush.msra.mxu0 0.0
    %3121 = vmatpush.msra.mxu0 0.0
    %3122 = vmatpush.msra.mxu0 0.0
    %3123 = vmatpush.msra.mxu0 0.0
    %3124 = vmatpush.msra.mxu0 %v3048
    %3125 = vmatpush.msra.mxu0 %v3031
    %3126 = vmatmul.f32.gmra.mxu0 %v3040
    %v3127 = vpop.f32.mrf.mxu0
    %v3128 = vadd.f32 0.0, %v3127
    %3129 = vdwg.mxu0
    %v3130 = vrot.slane %v45, 3
    %v3131 = vrot.slane %v46, 3
    %v3132 = vrot.slane %v47, 3
    %v3133 = vrot.slane %v48, 3
    %v3138 = vmul.f32 %v3068, %v3130
    %v3139 = vmul.f32 %v3088, %v3131
    %v3140 = vmul.f32 %v3108, %v3132
    %v3141 = vmul.f32 %v3128, %v3133
    %v3142 = vadd.f32 %v3003, %v3138
    %v3143 = vadd.f32 %v3004, %v3139
    %v3144 = vadd.f32 %v3005, %v3140
    %v3145 = vadd.f32 %v3006, %v3141
    %v3146 = vrot.slane %v2586, 4
    %3147 = vrot.lane.b32.xlu0 %v2582, 48
    %v3148 = vpop.permute.xlu0 %3147
    %3149 = vrot.lane.b32.xlu0 %v2570, 48
    %v3150 = vpop.permute.xlu0 %3149
    %3151 = vrot.lane.b32.xlu0 %v2571, 48
    %v3152 = vpop.permute.xlu0 %3151
    %3153 = vrot.lane.b32.xlu0 %v2572, 48
    %v3154 = vpop.permute.xlu0 %3153
    %3155 = vrot.lane.b32.xlu0 %v2584, 48
    %v3156 = vpop.permute.xlu0 %3155
    %3157 = vrot.lane.b32.xlu0 %v2583, 48
    %v3158 = vpop.permute.xlu0 %3157
    %3159 = vrot.lane.b32.xlu0 %v2574, 48
    %v3160 = vpop.permute.xlu0 %3159
    %3161 = vrot.lane.b32.xlu0 %v2575, 48
    %v3162 = vpop.permute.xlu0 %3161
    %3163 = vrot.lane.b32.xlu0 %v2576, 48
    %v3164 = vpop.permute.xlu0 %3163
    %3165 = vrot.lane.b32.xlu0 %v2585, 48
    %v3166 = vpop.permute.xlu0 %3165
    %v3167 = vsel %vm121, %v3148, %v3150
    %v3168 = vsel %vm121, %v3150, %v3152
    %v3169 = vsel %vm121, %v3152, %v3154
    %v3170 = vsel %vm121, %v3154, %v3156
    %v3171 = vsel %vm121, %v3158, %v3160
    %v3172 = vsel %vm121, %v3160, %v3162
    %v3173 = vsel %vm121, %v3162, %v3164
    %v3174 = vsel %vm121, %v3164, %v3166
    %v3179 = vsel %vm2624, %v3146, 0
    %v3181 = vsel %vm2523, %v3171, 0
    %v3183 = vsel %vm2523, %v3172, 0
    %v3185 = vsel %vm2523, %v3173, 0
    %v3187 = vsel %vm2523, %v3174, 0
    %3189 = vmatpush.msra.mxu0 0.0
    %3190 = vmatpush.msra.mxu0 0.0
    %3191 = vmatpush.msra.mxu0 0.0
    %3192 = vmatpush.msra.mxu0 0.0
    %3193 = vmatpush.msra.mxu0 0.0
    %3194 = vmatpush.msra.mxu0 0.0
    %3195 = vmatpush.msra.mxu0 0.0
    %3196 = vmatpush.msra.mxu0 0.0
    %3197 = vmatpush.msra.mxu0 0.0
    %3198 = vmatpush.msra.mxu0 0.0
    %3199 = vmatpush.msra.mxu0 0.0
    %3200 = vmatpush.msra.mxu0 0.0
    %3201 = vmatpush.msra.mxu0 0.0
    %3202 = vmatpush.msra.mxu0 0.0
    %3203 = vmatpush.msra.mxu0 %v3181
    %3204 = vmatpush.msra.mxu0 %v3167
    %3205 = vmatmul.f32.gmra.mxu0 %v3179
    %v3206 = vpop.f32.mrf.mxu0
    %v3207 = vadd.f32 0.0, %v3206
    %3208 = vdwg.mxu0
    %3209 = vmatpush.msra.mxu0 0.0
    %3210 = vmatpush.msra.mxu0 0.0
    %3211 = vmatpush.msra.mxu0 0.0
    %3212 = vmatpush.msra.mxu0 0.0
    %3213 = vmatpush.msra.mxu0 0.0
    %3214 = vmatpush.msra.mxu0 0.0
    %3215 = vmatpush.msra.mxu0 0.0
    %3216 = vmatpush.msra.mxu0 0.0
    %3217 = vmatpush.msra.mxu0 0.0
    %3218 = vmatpush.msra.mxu0 0.0
    %3219 = vmatpush.msra.mxu0 0.0
    %3220 = vmatpush.msra.mxu0 0.0
    %3221 = vmatpush.msra.mxu0 0.0
    %3222 = vmatpush.msra.mxu0 0.0
    %3223 = vmatpush.msra.mxu0 %v3183
    %3224 = vmatpush.msra.mxu0 %v3168
    %3225 = vmatmul.f32.gmra.mxu0 %v3179
    %v3226 = vpop.f32.mrf.mxu0
    %v3227 = vadd.f32 0.0, %v3226
    %3228 = vdwg.mxu0
    %3229 = vmatpush.msra.mxu0 0.0
    %3230 = vmatpush.msra.mxu0 0.0
    %3231 = vmatpush.msra.mxu0 0.0
    %3232 = vmatpush.msra.mxu0 0.0
    %3233 = vmatpush.msra.mxu0 0.0
    %3234 = vmatpush.msra.mxu0 0.0
    %3235 = vmatpush.msra.mxu0 0.0
    %3236 = vmatpush.msra.mxu0 0.0
    %3237 = vmatpush.msra.mxu0 0.0
    %3238 = vmatpush.msra.mxu0 0.0
    %3239 = vmatpush.msra.mxu0 0.0
    %3240 = vmatpush.msra.mxu0 0.0
    %3241 = vmatpush.msra.mxu0 0.0
    %3242 = vmatpush.msra.mxu0 0.0
    %3243 = vmatpush.msra.mxu0 %v3185
    %3244 = vmatpush.msra.mxu0 %v3169
    %3245 = vmatmul.f32.gmra.mxu0 %v3179
    %v3246 = vpop.f32.mrf.mxu0
    %v3247 = vadd.f32 0.0, %v3246
    %3248 = vdwg.mxu0
    %3249 = vmatpush.msra.mxu0 0.0
    %3250 = vmatpush.msra.mxu0 0.0
    %3251 = vmatpush.msra.mxu0 0.0
    %3252 = vmatpush.msra.mxu0 0.0
    %3253 = vmatpush.msra.mxu0 0.0
    %3254 = vmatpush.msra.mxu0 0.0
    %3255 = vmatpush.msra.mxu0 0.0
    %3256 = vmatpush.msra.mxu0 0.0
    %3257 = vmatpush.msra.mxu0 0.0
    %3258 = vmatpush.msra.mxu0 0.0
    %3259 = vmatpush.msra.mxu0 0.0
    %3260 = vmatpush.msra.mxu0 0.0
    %3261 = vmatpush.msra.mxu0 0.0
    %3262 = vmatpush.msra.mxu0 0.0
    %3263 = vmatpush.msra.mxu0 %v3187
    %3264 = vmatpush.msra.mxu0 %v3170
    %3265 = vmatmul.f32.gmra.mxu0 %v3179
    %v3266 = vpop.f32.mrf.mxu0
    %v3267 = vadd.f32 0.0, %v3266
    %3268 = vdwg.mxu0
    %v3269 = vrot.slane %v45, 4
    %v3270 = vrot.slane %v46, 4
    %v3271 = vrot.slane %v47, 4
    %v3272 = vrot.slane %v48, 4
    %v3277 = vmul.f32 %v3207, %v3269
    %v3278 = vmul.f32 %v3227, %v3270
    %v3279 = vmul.f32 %v3247, %v3271
    %v3280 = vmul.f32 %v3267, %v3272
    %v3281 = vadd.f32 %v3142, %v3277
    %v3282 = vadd.f32 %v3143, %v3278
    %v3283 = vadd.f32 %v3144, %v3279
    %v3284 = vadd.f32 %v3145, %v3280
    %v3285 = vrot.slane %v2586, 5
    %3286 = vrot.lane.b32.xlu0 %v2582, 32
    %v3287 = vpop.permute.xlu0 %3286
    %3288 = vrot.lane.b32.xlu0 %v2570, 32
    %v3289 = vpop.permute.xlu0 %3288
    %3290 = vrot.lane.b32.xlu0 %v2571, 32
    %v3291 = vpop.permute.xlu0 %3290
    %3292 = vrot.lane.b32.xlu0 %v2572, 32
    %v3293 = vpop.permute.xlu0 %3292
    %3294 = vrot.lane.b32.xlu0 %v2584, 32
    %v3295 = vpop.permute.xlu0 %3294
    %3296 = vrot.lane.b32.xlu0 %v2583, 32
    %v3297 = vpop.permute.xlu0 %3296
    %3298 = vrot.lane.b32.xlu0 %v2574, 32
    %v3299 = vpop.permute.xlu0 %3298
    %3300 = vrot.lane.b32.xlu0 %v2575, 32
    %v3301 = vpop.permute.xlu0 %3300
    %3302 = vrot.lane.b32.xlu0 %v2576, 32
    %v3303 = vpop.permute.xlu0 %3302
    %3304 = vrot.lane.b32.xlu0 %v2585, 32
    %v3305 = vpop.permute.xlu0 %3304
    %vm3306 = vcmask 261120
    %v3307 = vsel %vm3306, %v3287, %v3289
    %v3308 = vsel %vm3306, %v3289, %v3291
    %v3309 = vsel %vm3306, %v3291, %v3293
    %v3310 = vsel %vm3306, %v3293, %v3295
    %v3311 = vsel %vm3306, %v3297, %v3299
    %v3312 = vsel %vm3306, %v3299, %v3301
    %v3313 = vsel %vm3306, %v3301, %v3303
    %v3314 = vsel %vm3306, %v3303, %v3305
    %v3319 = vsel %vm2624, %v3285, 0
    %v3321 = vsel %vm2523, %v3311, 0
    %v3323 = vsel %vm2523, %v3312, 0
    %v3325 = vsel %vm2523, %v3313, 0
    %v3327 = vsel %vm2523, %v3314, 0
    %3329 = vmatpush.msra.mxu0 0.0
    %3330 = vmatpush.msra.mxu0 0.0
    %3331 = vmatpush.msra.mxu0 0.0
    %3332 = vmatpush.msra.mxu0 0.0
    %3333 = vmatpush.msra.mxu0 0.0
    %3334 = vmatpush.msra.mxu0 0.0
    %3335 = vmatpush.msra.mxu0 0.0
    %3336 = vmatpush.msra.mxu0 0.0
    %3337 = vmatpush.msra.mxu0 0.0
    %3338 = vmatpush.msra.mxu0 0.0
    %3339 = vmatpush.msra.mxu0 0.0
    %3340 = vmatpush.msra.mxu0 0.0
    %3341 = vmatpush.msra.mxu0 0.0
    %3342 = vmatpush.msra.mxu0 0.0
    %3343 = vmatpush.msra.mxu0 %v3321
    %3344 = vmatpush.msra.mxu0 %v3307
    %3345 = vmatmul.f32.gmra.mxu0 %v3319
    %v3346 = vpop.f32.mrf.mxu0
    %v3347 = vadd.f32 0.0, %v3346
    %3348 = vdwg.mxu0
    %3349 = vmatpush.msra.mxu0 0.0
    %3350 = vmatpush.msra.mxu0 0.0
    %3351 = vmatpush.msra.mxu0 0.0
    %3352 = vmatpush.msra.mxu0 0.0
    %3353 = vmatpush.msra.mxu0 0.0
    %3354 = vmatpush.msra.mxu0 0.0
    %3355 = vmatpush.msra.mxu0 0.0
    %3356 = vmatpush.msra.mxu0 0.0
    %3357 = vmatpush.msra.mxu0 0.0
    %3358 = vmatpush.msra.mxu0 0.0
    %3359 = vmatpush.msra.mxu0 0.0
    %3360 = vmatpush.msra.mxu0 0.0
    %3361 = vmatpush.msra.mxu0 0.0
    %3362 = vmatpush.msra.mxu0 0.0
    %3363 = vmatpush.msra.mxu0 %v3323
    %3364 = vmatpush.msra.mxu0 %v3308
    %3365 = vmatmul.f32.gmra.mxu0 %v3319
    %v3366 = vpop.f32.mrf.mxu0
    %v3367 = vadd.f32 0.0, %v3366
    %3368 = vdwg.mxu0
    %3369 = vmatpush.msra.mxu0 0.0
    %3370 = vmatpush.msra.mxu0 0.0
    %3371 = vmatpush.msra.mxu0 0.0
    %3372 = vmatpush.msra.mxu0 0.0
    %3373 = vmatpush.msra.mxu0 0.0
    %3374 = vmatpush.msra.mxu0 0.0
    %3375 = vmatpush.msra.mxu0 0.0
    %3376 = vmatpush.msra.mxu0 0.0
    %3377 = vmatpush.msra.mxu0 0.0
    %3378 = vmatpush.msra.mxu0 0.0
    %3379 = vmatpush.msra.mxu0 0.0
    %3380 = vmatpush.msra.mxu0 0.0
    %3381 = vmatpush.msra.mxu0 0.0
    %3382 = vmatpush.msra.mxu0 0.0
    %3383 = vmatpush.msra.mxu0 %v3325
    %3384 = vmatpush.msra.mxu0 %v3309
    %3385 = vmatmul.f32.gmra.mxu0 %v3319
    %v3386 = vpop.f32.mrf.mxu0
    %v3387 = vadd.f32 0.0, %v3386
    %3388 = vdwg.mxu0
    %3389 = vmatpush.msra.mxu0 0.0
    %3390 = vmatpush.msra.mxu0 0.0
    %3391 = vmatpush.msra.mxu0 0.0
    %3392 = vmatpush.msra.mxu0 0.0
    %3393 = vmatpush.msra.mxu0 0.0
    %3394 = vmatpush.msra.mxu0 0.0
    %3395 = vmatpush.msra.mxu0 0.0
    %3396 = vmatpush.msra.mxu0 0.0
    %3397 = vmatpush.msra.mxu0 0.0
    %3398 = vmatpush.msra.mxu0 0.0
    %3399 = vmatpush.msra.mxu0 0.0
    %3400 = vmatpush.msra.mxu0 0.0
    %3401 = vmatpush.msra.mxu0 0.0
    %3402 = vmatpush.msra.mxu0 0.0
    %3403 = vmatpush.msra.mxu0 %v3327
    %3404 = vmatpush.msra.mxu0 %v3310
    %3405 = vmatmul.f32.gmra.mxu0 %v3319
    %v3406 = vpop.f32.mrf.mxu0
    %v3407 = vadd.f32 0.0, %v3406
    %3408 = vdwg.mxu0
    %v3409 = vrot.slane %v45, 5
    %v3410 = vrot.slane %v46, 5
    %v3411 = vrot.slane %v47, 5
    %v3412 = vrot.slane %v48, 5
    %v3417 = vmul.f32 %v3347, %v3409
    %v3418 = vmul.f32 %v3367, %v3410
    %v3419 = vmul.f32 %v3387, %v3411
    %v3420 = vmul.f32 %v3407, %v3412
    %v3421 = vadd.f32 %v3281, %v3417
    %v3422 = vadd.f32 %v3282, %v3418
    %v3423 = vadd.f32 %v3283, %v3419
    %v3424 = vadd.f32 %v3284, %v3420
    %v3425 = vrot.slane %v2586, 6
    %3426 = vrot.lane.b32.xlu0 %v2582, 16
    %v3427 = vpop.permute.xlu0 %3426
    %3428 = vrot.lane.b32.xlu0 %v2570, 16
    %v3429 = vpop.permute.xlu0 %3428
    %3430 = vrot.lane.b32.xlu0 %v2571, 16
    %v3431 = vpop.permute.xlu0 %3430
    %3432 = vrot.lane.b32.xlu0 %v2572, 16
    %v3433 = vpop.permute.xlu0 %3432
    %3434 = vrot.lane.b32.xlu0 %v2584, 16
    %v3435 = vpop.permute.xlu0 %3434
    %3436 = vrot.lane.b32.xlu0 %v2583, 16
    %v3437 = vpop.permute.xlu0 %3436
    %3438 = vrot.lane.b32.xlu0 %v2574, 16
    %v3439 = vpop.permute.xlu0 %3438
    %3440 = vrot.lane.b32.xlu0 %v2575, 16
    %v3441 = vpop.permute.xlu0 %3440
    %3442 = vrot.lane.b32.xlu0 %v2576, 16
    %v3443 = vpop.permute.xlu0 %3442
    %3444 = vrot.lane.b32.xlu0 %v2585, 16
    %v3445 = vpop.permute.xlu0 %3444
    %v3446 = vsel %vm1836, %v3427, %v3429
    %v3447 = vsel %vm1836, %v3429, %v3431
    %v3448 = vsel %vm1836, %v3431, %v3433
    %v3449 = vsel %vm1836, %v3433, %v3435
    %v3450 = vsel %vm1836, %v3437, %v3439
    %v3451 = vsel %vm1836, %v3439, %v3441
    %v3452 = vsel %vm1836, %v3441, %v3443
    %v3453 = vsel %vm1836, %v3443, %v3445
    %v3458 = vsel %vm2624, %v3425, 0
    %v3460 = vsel %vm2523, %v3450, 0
    %v3462 = vsel %vm2523, %v3451, 0
    %v3464 = vsel %vm2523, %v3452, 0
    %v3466 = vsel %vm2523, %v3453, 0
    %3468 = vmatpush.msra.mxu0 0.0
    %3469 = vmatpush.msra.mxu0 0.0
    %3470 = vmatpush.msra.mxu0 0.0
    %3471 = vmatpush.msra.mxu0 0.0
    %3472 = vmatpush.msra.mxu0 0.0
    %3473 = vmatpush.msra.mxu0 0.0
    %3474 = vmatpush.msra.mxu0 0.0
    %3475 = vmatpush.msra.mxu0 0.0
    %3476 = vmatpush.msra.mxu0 0.0
    %3477 = vmatpush.msra.mxu0 0.0
    %3478 = vmatpush.msra.mxu0 0.0
    %3479 = vmatpush.msra.mxu0 0.0
    %3480 = vmatpush.msra.mxu0 0.0
    %3481 = vmatpush.msra.mxu0 0.0
    %3482 = vmatpush.msra.mxu0 %v3460
    %3483 = vmatpush.msra.mxu0 %v3446
    %3484 = vmatmul.f32.gmra.mxu0 %v3458
    %v3485 = vpop.f32.mrf.mxu0
    %v3486 = vadd.f32 0.0, %v3485
    %3487 = vdwg.mxu0
    %3488 = vmatpush.msra.mxu0 0.0
    %3489 = vmatpush.msra.mxu0 0.0
    %3490 = vmatpush.msra.mxu0 0.0
    %3491 = vmatpush.msra.mxu0 0.0
    %3492 = vmatpush.msra.mxu0 0.0
    %3493 = vmatpush.msra.mxu0 0.0
    %3494 = vmatpush.msra.mxu0 0.0
    %3495 = vmatpush.msra.mxu0 0.0
    %3496 = vmatpush.msra.mxu0 0.0
    %3497 = vmatpush.msra.mxu0 0.0
    %3498 = vmatpush.msra.mxu0 0.0
    %3499 = vmatpush.msra.mxu0 0.0
    %3500 = vmatpush.msra.mxu0 0.0
    %3501 = vmatpush.msra.mxu0 0.0
    %3502 = vmatpush.msra.mxu0 %v3462
    %3503 = vmatpush.msra.mxu0 %v3447
    %3504 = vmatmul.f32.gmra.mxu0 %v3458
    %v3505 = vpop.f32.mrf.mxu0
    %v3506 = vadd.f32 0.0, %v3505
    %3507 = vdwg.mxu0
    %3508 = vmatpush.msra.mxu0 0.0
    %3509 = vmatpush.msra.mxu0 0.0
    %3510 = vmatpush.msra.mxu0 0.0
    %3511 = vmatpush.msra.mxu0 0.0
    %3512 = vmatpush.msra.mxu0 0.0
    %3513 = vmatpush.msra.mxu0 0.0
    %3514 = vmatpush.msra.mxu0 0.0
    %3515 = vmatpush.msra.mxu0 0.0
    %3516 = vmatpush.msra.mxu0 0.0
    %3517 = vmatpush.msra.mxu0 0.0
    %3518 = vmatpush.msra.mxu0 0.0
    %3519 = vmatpush.msra.mxu0 0.0
    %3520 = vmatpush.msra.mxu0 0.0
    %3521 = vmatpush.msra.mxu0 0.0
    %3522 = vmatpush.msra.mxu0 %v3464
    %3523 = vmatpush.msra.mxu0 %v3448
    %3524 = vmatmul.f32.gmra.mxu0 %v3458
    %v3525 = vpop.f32.mrf.mxu0
    %v3526 = vadd.f32 0.0, %v3525
    %3527 = vdwg.mxu0
    %3528 = vmatpush.msra.mxu0 0.0
    %3529 = vmatpush.msra.mxu0 0.0
    %3530 = vmatpush.msra.mxu0 0.0
    %3531 = vmatpush.msra.mxu0 0.0
    %3532 = vmatpush.msra.mxu0 0.0
    %3533 = vmatpush.msra.mxu0 0.0
    %3534 = vmatpush.msra.mxu0 0.0
    %3535 = vmatpush.msra.mxu0 0.0
    %3536 = vmatpush.msra.mxu0 0.0
    %3537 = vmatpush.msra.mxu0 0.0
    %3538 = vmatpush.msra.mxu0 0.0
    %3539 = vmatpush.msra.mxu0 0.0
    %3540 = vmatpush.msra.mxu0 0.0
    %3541 = vmatpush.msra.mxu0 0.0
    %3542 = vmatpush.msra.mxu0 %v3466
    %3543 = vmatpush.msra.mxu0 %v3449
    %3544 = vmatmul.f32.gmra.mxu0 %v3458
    %v3545 = vpop.f32.mrf.mxu0
    %v3546 = vadd.f32 0.0, %v3545
    %3547 = vdwg.mxu0
    %v3548 = vrot.slane %v45, 6
    %v3549 = vrot.slane %v46, 6
    %v3550 = vrot.slane %v47, 6
    %v3551 = vrot.slane %v48, 6
    %v3556 = vmul.f32 %v3486, %v3548
    %v3557 = vmul.f32 %v3506, %v3549
    %v3558 = vmul.f32 %v3526, %v3550
    %v3559 = vmul.f32 %v3546, %v3551
    %v3560 = vadd.f32 %v3421, %v3556
    %v3561 = vadd.f32 %v3422, %v3557
    %v3562 = vadd.f32 %v3423, %v3558
    %v3563 = vadd.f32 %v3424, %v3559
    %v3564 = vld [vmem:[%s3] sm:$0x1]
    %3566 = vset.pattern.permute.xlu0 5
    %3567 = vperm.xlu0 %3566, %v3564
    %v3568 = vpop.permute.xlu0 %3567
    %v3570 = vadd.f32 %v3560, %v3568
    %v3571 = vadd.f32 %v3561, %v3568
    %v3572 = vadd.f32 %v3562, %v3568
    %v3573 = vadd.f32 %v3563, %v3568
    %v3574 = vsub.f32 0.0, %v3570
    %v3575 = vsub.f32 0.0, %v3571
    %v3576 = vsub.f32 0.0, %v3572
    %v3577 = vsub.f32 0.0, %v3573
    %v3578 = vmul.f32 %v3574, 1.442695
    %v3579 = vpow.pop %v3578
    %v3580 = vmul.f32 %v3575, 1.442695
    %v3581 = vpow.pop %v3580
    %v3582 = vmul.f32 %v3576, 1.442695
    %v3583 = vpow.pop %v3582
    %v3584 = vmul.f32 %v3577, 1.442695
    %v3585 = vpow.pop %v3584
    %v3586 = vadd.f32 %v3579, 1.0
    %v3587 = vadd.f32 %v3581, 1.0
    %v3588 = vadd.f32 %v3583, 1.0
    %v3589 = vadd.f32 %v3585, 1.0
    %v3590 = vrcp.pop %v3586
    %v3591 = vrcp.pop %v3587
    %v3592 = vrcp.pop %v3588
    %v3593 = vrcp.pop %v3589
    %v3594 = vperm.slane %v3590, 0
    %v3595 = vperm.slane %v3591, 0
    %v3596 = vperm.slane %v3592, 0
    %v3597 = vperm.slane %v3593, 0
    %v3598 = vmul.f32 %v2036, %v3594
    %v3599 = vmul.f32 %v2037, %v3595
    %v3600 = vmul.f32 %v2038, %v3596
    %v3601 = vmul.f32 %v2039, %v3597
    %v3602 = vmul.f32 %v2040, %v3594
    %v3603 = vmul.f32 %v2041, %v3595
    %v3604 = vmul.f32 %v2042, %v3596
    %v3605 = vmul.f32 %v2043, %v3597
    %3606 = vst [vmem:[#allocation2] sm:$0xff] %v3598
    %3607 = vst [vmem:[#allocation2 + $0x8] sm:$0xff] %v3599
    %3608 = vst [vmem:[#allocation2 + $0x10] sm:$0xff] %v3600
    %3609 = vst [vmem:[#allocation2 + $0x18] sm:$0xff] %v3601
    %3610 = vst [vmem:[#allocation2 + $0x20] sm:$0xff] %v3602
    %3611 = vst [vmem:[#allocation2 + $0x28] sm:$0xff] %v3603
    %3612 = vst [vmem:[#allocation2 + $0x30] sm:$0xff] %v3604
    %3613 = vst [vmem:[#allocation2 + $0x38] sm:$0xff] %v3605
    // Predicated region
    $region38: #{tpu_custom_call.1} parent=1 // pred_check
      _
    $region39: #{tpu_custom_call.1} parent=1 // pred_check_branch
      %3615 = sbr.rel (0) target = $region41
    $region40: #{tpu_custom_call.1} parent=1 // pred_region
      %3617 = vsyncadd [#allocation3], 0
      %s3618 = sshll.u32 [#allocation2], 4
      %s3619 = int_to_ptr.vmem [resolvable:$true] %s3618
      %s3620 = sshll.u32 %s9, 4
      %s3621 = int_to_ptr.hbm [resolvable:$true] %s3620
      %3626 = dma.vmem_to_hbm [thread:$0]  %s3619, 1024, %s3621, [#allocation3], 512, 512, 32
    $region41: #{tpu_custom_call.1} parent=1 // pred_fallthru
      _
    // Predicated region
    $region42: #{tpu_custom_call.1} parent=1 // pred_check
      _
    $region43: #{tpu_custom_call.1} parent=1 // pred_check_branch
      %3628 = sbr.rel (0) target = $region45
    $region44: #{tpu_custom_call.1} parent=1 // pred_region
      %3630 = dma.done [#allocation3], 1024
    $region45: #{tpu_custom_call.1} parent=1 // pred_fallthru
      _
    %3631 = vsyncpa [#allocation3], 1

</llo_original>
